<compile_context>
chip_gen: v7x
topology: tpu7x:2x2x1
jax: 0.10.0
libtpu: 0.0.40
codegen_flags: <defaults>
</compile_context>

<pallas_src>
import math
from functools import partial

import jax
import jax.numpy as jnp
from jax import lax
from jax.experimental import pallas as pl
from jax.experimental.pallas import tpu as pltpu

_MXU_DTYPE = jnp.bfloat16   # MXU operand dtype (accumulation is always f32)
_W_DTYPE = jnp.bfloat16     # storage dtype of GEMM weights (halves weight DMA)


def _tpu_config():
    """Generation-aware tile / VMEM settings."""
    kind = ""
    try:
        kind = jax.devices()[0].device_kind.lower()
    except Exception:
        pass
    if "v7" in kind:     # 64 MiB VMEM, 256-wide MXU
        return dict(vmem_limit=48 * 1024 * 1024, tm=256, tn=256, tk=512, tf=256,
                    lane_align=256)
    if "v6" in kind:     # 128 MiB VMEM, 256-wide MXU
        return dict(vmem_limit=100 * 1024 * 1024, tm=512, tn=512, tk=512, tf=512,
                    lane_align=256)
    if "v5" in kind or "v4" in kind:   # 128 MiB VMEM, 128-wide MXU
        return dict(vmem_limit=100 * 1024 * 1024, tm=512, tn=512, tk=512, tf=512,
                    lane_align=128)
    # unknown: conservative
    return dict(vmem_limit=48 * 1024 * 1024, tm=256, tn=256, tk=512, tf=256,
                lane_align=128)


CFG = _tpu_config()


def _cparams(dim_sem):
    return pltpu.CompilerParams(dimension_semantics=dim_sem,
                                vmem_limit_bytes=CFG["vmem_limit"])


def _pick_tile(dim, target, align, allow_ragged=False):
    """Tile <= target, multiple of `align`.
    allow_ragged=True: tile need not divide dim (grid uses pl.cdiv, boundary
    blocks are clipped on store) -- safe for row / output-column axes.
    allow_ragged=False (contraction axes): exact divisor or the full dim."""
    if dim <= target:
        return dim
    t = max((target // align) * align, align)
    if allow_ragged:
        return t
    while t >= align:
        if dim % t == 0:
            return t
        t -= align
    return dim


# ----------------------------- Pallas kernels -----------------------------


def _make_multi_linear_kernel(n):
    """n GEMMs sharing one input tile: out_i = x @ w_i + b_i, K tiled on grid axis 2."""
    def kernel(*refs):
        x_ref = refs[0]
        w_refs = refs[1:1 + n]
        b_refs = refs[1 + n:1 + 2 * n]
        o_refs = refs[1 + 2 * n:1 + 3 * n]
        acc_refs = refs[1 + 3 * n:1 + 4 * n]
        kk = pl.program_id(2)

        @pl.when(kk == 0)
        def _init():
            for a in acc_refs:
                a[...] = jnp.zeros_like(a)

        xb = x_ref[...].astype(_MXU_DTYPE)
        for w, a in zip(w_refs, acc_refs):
            a[...] += jnp.dot(xb, w[...].astype(_MXU_DTYPE),
                              preferred_element_type=jnp.float32)

        @pl.when(kk == pl.num_programs(2) - 1)
        def _fin():
            for a, b, o in zip(acc_refs, b_refs, o_refs):
                o[...] = (a[...] + b[...]).astype(o.dtype)

    return kernel


def _ffn_kernel(x_ref, w1_ref, b1_ref, w2_ref, b2_ref, o_ref, acc_ref):
    # o = relu(x @ w1 + b1) @ w2 + b2, tiled over the d_ff axis (grid axis 1).
    f = pl.program_id(1)

    @pl.when(f == 0)
    def _init():
        acc_ref[...] = jnp.zeros_like(acc_ref)

    h = jnp.dot(x_ref[...].astype(_MXU_DTYPE), w1_ref[...].astype(_MXU_DTYPE),
                preferred_element_type=jnp.float32) + b1_ref[...]
    h = jnp.maximum(h, 0.0)
    acc_ref[...] += jnp.dot(h.astype(_MXU_DTYPE), w2_ref[...].astype(_MXU_DTYPE),
                            preferred_element_type=jnp.float32)

    @pl.when(f == pl.num_programs(1) - 1)
    def _fin():
        o_ref[...] = (acc_ref[...] + b2_ref[...]).astype(o_ref.dtype)


def _add_layernorm_kernel(x_ref, d_ref, g_ref, b_ref, o_ref, *, eps):
    # fused residual add + LayerNorm: LN(x + delta) * g + b
    x = x_ref[...].astype(jnp.float32) + d_ref[...].astype(jnp.float32)
    mean = jnp.mean(x, axis=-1, keepdims=True)
    var = jnp.mean((x - mean) ** 2, axis=-1, keepdims=True)
    y = (x - mean) * lax.rsqrt(var + eps)
    o_ref[...] = (y * g_ref[...] + b_ref[...]).astype(o_ref.dtype)


def _make_attention_kernel(hc, dh, with_mask):
    """One grid step = one batch element x one chunk of `hc` heads (lanes).
    q/k/v refs: [1, S, hc*dh]; o ref: [1, Sq, hc*dh] (lane-dense store into
    the [B, Sq, D] output); p ref: [1, hc, Sq, Sk].
    The 1/sqrt(dh) scale is folded into Wq, so no in-kernel scaling."""
    def kernel(q_ref, k_ref, v_ref, *rest):
        if with_mask:
            m_ref, o_ref, p_ref = rest
            m = m_ref[0, 0]                       # [Sq, Sk] additive f32 mask
        else:
            o_ref, p_ref = rest
            m = None
        q = q_ref[0].astype(_MXU_DTYPE)           # [Sq, hc*dh]
        k = k_ref[0].astype(_MXU_DTYPE)           # [Sk, hc*dh]
        v = v_ref[0].astype(_MXU_DTYPE)           # [Sk, hc*dh]
        o_parts = []
        for h in range(hc):                       # static unroll over chunk heads
            lo, hi = h * dh, (h + 1) * dh
            s = jnp.einsum('qd,kd->qk', q[:, lo:hi], k[:, lo:hi],
                           preferred_element_type=jnp.float32)
            if m is not None:
                s = s + m
            s = s - jnp.max(s, axis=-1, keepdims=True)
            e = jnp.exp(s)
            p = e * pl.reciprocal(jnp.sum(e, axis=-1, keepdims=True), approx=True)
            p_ref[0, h] = p.astype(p_ref.dtype)
            o_parts.append(jnp.einsum('qk,kd->qd', p.astype(_MXU_DTYPE), v[:, lo:hi],
                                      preferred_element_type=jnp.float32))
        o = o_parts[0] if hc == 1 else jnp.concatenate(o_parts, axis=-1)
        o_ref[0] = o.astype(o_ref.dtype)          # lane-dense [Sq, hc*dh] store
    return kernel


# ----------------------------- kernel wrappers -----------------------------


def multi_linear(x2d, ws, bs):
    """n = len(ws) fused GEMMs reading x once: returns tuple of (M, N) f32 outputs."""
    M, K = x2d.shape
    N = ws[0].shape[1]
    n = len(ws)
    tm = _pick_tile(M, CFG["tm"], 8, allow_ragged=True)
    tn = _pick_tile(N, CFG["tn"], CFG["lane_align"], allow_ragged=True)
    tk = _pick_tile(K, CFG["tk"], CFG["lane_align"], allow_ragged=False)
    grid = (pl.cdiv(M, tm), pl.cdiv(N, tn), K // tk)

    x_spec = pl.BlockSpec((tm, tk), lambda i, j, k: (i, k))
    w_spec = pl.BlockSpec((tk, tn), lambda i, j, k: (k, j))
    b_spec = pl.BlockSpec((1, tn), lambda i, j, k: (0, j))
    o_spec = pl.BlockSpec((tm, tn), lambda i, j, k: (i, j))

    outs = pl.pallas_call(
        _make_multi_linear_kernel(n),
        out_shape=tuple(jax.ShapeDtypeStruct((M, N), jnp.float32) for _ in range(n)),
        grid=grid,
        in_specs=[x_spec] + [w_spec] * n + [b_spec] * n,
        out_specs=tuple(o_spec for _ in range(n)),
        scratch_shapes=[pltpu.VMEM((tm, tn), jnp.float32) for _ in range(n)],
        compiler_params=_cparams(("parallel", "parallel", "arbitrary")),
    )(x2d, *ws, *[b.reshape(1, N) for b in bs])
    return outs


def linear(x2d, w, b):
    return multi_linear(x2d, (w,), (b,))[0]


def feed_forward(x2d, w1, b1, w2, b2):
    M, D = x2d.shape
    F = w1.shape[1]
    tm = _pick_tile(M, CFG["tm"], 8, allow_ragged=True)
    tf = _pick_tile(F, CFG["tf"], CFG["lane_align"], allow_ragged=False)
    return pl.pallas_call(
        _ffn_kernel,
        out_shape=jax.ShapeDtypeStruct((M, D), jnp.float32),
        grid=(pl.cdiv(M, tm), F // tf),
        in_specs=[
            pl.BlockSpec((tm, D), lambda i, f: (i, 0)),
            pl.BlockSpec((D, tf), lambda i, f: (0, f)),
            pl.BlockSpec((1, tf), lambda i, f: (0, f)),
            pl.BlockSpec((tf, D), lambda i, f: (f, 0)),
            pl.BlockSpec((1, D), lambda i, f: (0, 0)),
        ],
        out_specs=pl.BlockSpec((tm, D), lambda i, f: (i, 0)),
        scratch_shapes=[pltpu.VMEM((tm, D), jnp.float32)],
        compiler_params=_cparams(("parallel", "arbitrary")),
    )(x2d, w1, b1.reshape(1, F), w2, b2.reshape(1, D))


def add_layer_norm(x3d, delta3d, gamma, beta, eps=1e-5):
    B, S, D = x3d.shape
    M = B * S
    tm = _pick_tile(M, CFG["tm"], 8, allow_ragged=True)
    out = pl.pallas_call(
        partial(_add_layernorm_kernel, eps=eps),
        out_shape=jax.ShapeDtypeStruct((M, D), jnp.float32),
        grid=(pl.cdiv(M, tm),),
        in_specs=[
            pl.BlockSpec((tm, D), lambda i: (i, 0)),
            pl.BlockSpec((tm, D), lambda i: (i, 0)),
            pl.BlockSpec((1, D), lambda i: (0, 0)),
            pl.BlockSpec((1, D), lambda i: (0, 0)),
        ],
        out_specs=pl.BlockSpec((tm, D), lambda i: (i, 0)),
        compiler_params=_cparams(("parallel",)),
    )(x3d.reshape(M, D), delta3d.reshape(M, D),
      gamma.reshape(1, D), beta.reshape(1, D))
    return out.reshape(B, S, D)


def _head_chunk(num_heads, d_head):
    # smallest divisor of num_heads whose lane width (hc * d_head) is a multiple
    # of 128 (lane-dense, tiling-legal blocks); fall back to all heads (chunk
    # width == d_model, always a legal full-dim block).
    for hc in range(1, num_heads + 1):
        if num_heads % hc == 0 and (hc * d_head) % 128 == 0:
            return hc
    return num_heads


def multi_head_attention(q3, k3, v3, mask_add, *, num_heads):
    """q3 [B, Sq, D], k3/v3 [B, Sk, D] with heads packed in lanes.
    Returns (O [B, Sq, D], P [B, H, Sq, Sk])."""
    B, Sq, D = q3.shape
    Sk = k3.shape[1]
    dh = D // num_heads
    hc = _head_chunk(num_heads, dh)
    C = hc * dh
    n_chunks = num_heads // hc

    in_specs = [
        pl.BlockSpec((1, Sq, C), lambda b, c: (b, 0, c)),
        pl.BlockSpec((1, Sk, C), lambda b, c: (b, 0, c)),
        pl.BlockSpec((1, Sk, C), lambda b, c: (b, 0, c)),
    ]
    args = [q3, k3, v3]
    with_mask = mask_add is not None
    if with_mask:
        if mask_add.shape[0] == 1:   # mask shared across the batch
            in_specs.append(pl.BlockSpec((1, 1, Sq, Sk), lambda b, c: (0, 0, 0, 0)))
        else:
            in_specs.append(pl.BlockSpec((1, 1, Sq, Sk), lambda b, c: (b, 0, 0, 0)))
        args.append(mask_add)

    out, probs = pl.pallas_call(
        _make_attention_kernel(hc, dh, with_mask),
        out_shape=(jax.ShapeDtypeStruct((B, Sq, D), jnp.float32),
                   jax.ShapeDtypeStruct((B, num_heads, Sq, Sk), jnp.float32)),
        grid=(B, n_chunks),
        in_specs=in_specs,
        out_specs=(pl.BlockSpec((1, Sq, C), lambda b, c: (b, 0, c)),
                   pl.BlockSpec((1, hc, Sq, Sk), lambda b, c: (b, c, 0, 0))),
        compiler_params=_cparams(("parallel", "parallel")),
    )(*args)
    return out, probs


# ----------------------------- model pieces (JAX glue) -----------------------------


def self_attention(x, p, mask_add, num_heads):
    B, S, D = x.shape
    x2 = x.reshape(B * S, D)
    q, k, v = multi_linear(x2, (p["wq"], p["wk"], p["wv"]),
                           (p["bq"], p["bk"], p["bv"]))
    attn_out, probs = multi_head_attention(
        q.reshape(B, S, D), k.reshape(B, S, D), v.reshape(B, S, D),
        mask_add, num_heads=num_heads)
    out = linear(attn_out.reshape(B * S, D), p["wo"], p["bo"]).reshape(B, S, D)
    return out, probs


def cross_attention(x_q, x_kv, p, mask_add, num_heads):
    B, Sq, D = x_q.shape
    Sk = x_kv.shape[1]
    q = linear(x_q.reshape(B * Sq, D), p["wq"], p["bq"])
    k, v = multi_linear(x_kv.reshape(B * Sk, D), (p["wk"], p["wv"]),
                        (p["bk"], p["bv"]))
    attn_out, probs = multi_head_attention(
        q.reshape(B, Sq, D), k.reshape(B, Sk, D), v.reshape(B, Sk, D),
        mask_add, num_heads=num_heads)
    out = linear(attn_out.reshape(B * Sq, D), p["wo"], p["bo"]).reshape(B, Sq, D)
    return out, probs


def encoder_layer(x, p, mask_add, num_heads):
    attn_out, attn_w = self_attention(x, p["self_attn"], mask_add, num_heads)
    x = add_layer_norm(x, attn_out, p["ln1_g"], p["ln1_b"])
    B, S, D = x.shape
    ff = feed_forward(x.reshape(B * S, D), p["w1"], p["b1"],
                      p["w2"], p["b2"]).reshape(B, S, D)
    x = add_layer_norm(x, ff, p["ln2_g"], p["ln2_b"])
    return x, attn_w


def decoder_layer(x, memory, p, tgt_mask_add, mem_mask_add, num_heads):
    sa_out, sa_w = self_attention(x, p["self_attn"], tgt_mask_add, num_heads)
    x = add_layer_norm(x, sa_out, p["ln1_g"], p["ln1_b"])
    ca_out, ca_w = cross_attention(x, memory, p["cross_attn"], mem_mask_add, num_heads)
    x = add_layer_norm(x, ca_out, p["ln2_g"], p["ln2_b"])
    B, S, D = x.shape
    ff = feed_forward(x.reshape(B * S, D), p["w1"], p["b1"],
                      p["w2"], p["b2"]).reshape(B, S, D)
    x = add_layer_norm(x, ff, p["ln3_g"], p["ln3_b"])
    return x, sa_w, ca_w


def sinusoidal_positional_encoding(seq_len, d_model):
    pos = jnp.arange(seq_len, dtype=jnp.float32)[:, None]
    div = jnp.exp(jnp.arange(0, d_model, 2, dtype=jnp.float32)
                  * (-math.log(10000.0) / d_model))
    pe = jnp.zeros((seq_len, d_model), jnp.float32)
    pe = pe.at[:, 0::2].set(jnp.sin(pos * div))
    pe = pe.at[:, 1::2].set(jnp.cos(pos * div))
    return pe


def embeddings(ids, table, d_model):
    # token embedding * sqrt(d_model) + positional encoding (dropout = identity).
    # Gather stays in XLA (data-dependent indexing not worth a manual DMA gather here).
    emb = jnp.take(table, ids, axis=0) * math.sqrt(d_model)
    pe = sinusoidal_positional_encoding(ids.shape[1], d_model)
    return emb + pe[None, :, :]


def _additive_mask(mask, Sq, Sk):
    # mask convention: 1 = attend, 0 = blocked (as in masked_fill(mask == 0, -1e9)).
    # Returns None when mask is None so the attention kernel skips the mask input.
    if mask is None:
        return None
    m = mask.astype(jnp.float32).reshape(-1, 1, Sq, Sk)
    return (1.0 - m) * -1e9


def transformer_forward(params, src, tgt, src_mask=None, tgt_mask=None,
                        memory_mask=None, *, d_model, num_heads):
    B, Ss = src.shape
    _, St = tgt.shape

    src_mask_add = _additive_mask(src_mask, Ss, Ss)
    tgt_mask_add = _additive_mask(tgt_mask, St, St)
    mem_mask_add = _additive_mask(memory_mask, St, Ss)

    src_x = embeddings(src, params["src_emb"], d_model)
    tgt_x = embeddings(tgt, params["tgt_emb"], d_model)

    enc_attention_weights = []
    x = src_x
    for lp in params["encoder"]:
        x, w = encoder_layer(x, lp, src_mask_add, num_heads)
        enc_attention_weights.append(w)
    enc_output = x

    dec_self_attention_weights = []
    dec_cross_attention_weights = []
    y = tgt_x
    for lp in params["decoder"]:
        y, sw, cw = decoder_layer(y, enc_output, lp, tgt_mask_add,
                                  mem_mask_add, num_heads)
        dec_self_attention_weights.append(sw)
        dec_cross_attention_weights.append(cw)

    B, St, D = y.shape
    output = linear(y.reshape(B * St, D), params["final_w"], params["final_b"])
    output = output.reshape(B, St, params["final_w"].shape[1])
    return (output, enc_attention_weights,
            dec_self_attention_weights, dec_cross_attention_weights)


# ----------------------------- deterministic parameter init -----------------------------


def init_params(key, src_vocab, tgt_vocab, d_model, num_heads, n_enc, n_dec, d_ff):
    keys = iter(jax.random.split(key, 256))
    d_head = d_model // num_heads
    q_scale = 1.0 / math.sqrt(d_head)   # folded into Wq/bq (saves in-kernel scaling)

    def dense(din, dout):
        w = jax.random.normal(next(keys), (din, dout), jnp.float32) * 0.05
        b = jnp.zeros((dout,), jnp.float32)
        return w, b

    def attn_params():
        wq, bq = dense(d_model, d_model)
        wk, bk = dense(d_model, d_model)
        wv, bv = dense(d_model, d_model)
        wo, bo = dense(d_model, d_model)
        return dict(wq=(wq * q_scale).astype(_W_DTYPE), bq=bq * q_scale,
                    wk=wk.astype(_W_DTYPE), bk=bk,
                    wv=wv.astype(_W_DTYPE), bv=bv,
                    wo=wo.astype(_W_DTYPE), bo=bo)

    def enc_layer():
        w1, b1 = dense(d_model, d_ff)
        w2, b2 = dense(d_ff, d_model)
        return dict(self_attn=attn_params(),
                    ln1_g=jnp.ones((d_model,)), ln1_b=jnp.zeros((d_model,)),
                    w1=w1.astype(_W_DTYPE), b1=b1, w2=w2.astype(_W_DTYPE), b2=b2,
                    ln2_g=jnp.ones((d_model,)), ln2_b=jnp.zeros((d_model,)))

    def dec_layer():
        w1, b1 = dense(d_model, d_ff)
        w2, b2 = dense(d_ff, d_model)
        return dict(self_attn=attn_params(), cross_attn=attn_params(),
                    ln1_g=jnp.ones((d_model,)), ln1_b=jnp.zeros((d_model,)),
                    ln2_g=jnp.ones((d_model,)), ln2_b=jnp.zeros((d_model,)),
                    w1=w1.astype(_W_DTYPE), b1=b1, w2=w2.astype(_W_DTYPE), b2=b2,
                    ln3_g=jnp.ones((d_model,)), ln3_b=jnp.zeros((d_model,)))

    final_w, final_b = dense(d_model, tgt_vocab)
    return dict(
        src_emb=jax.random.normal(next(keys), (src_vocab, d_model), jnp.float32) * 0.05,
        tgt_emb=jax.random.normal(next(keys), (tgt_vocab, d_model), jnp.float32) * 0.05,
        encoder=[enc_layer() for _ in range(n_enc)],
        decoder=[dec_layer() for _ in range(n_dec)],
        final_w=final_w.astype(_W_DTYPE), final_b=final_b,
    )


# ----------------------------- main -----------------------------

if __name__ == "__main__":
    # Small but structurally faithful configuration.
    SRC_VOCAB, TGT_VOCAB = 64, 64
    D_MODEL, NUM_HEADS = 32, 4
    N_ENC, N_DEC, D_FF = 2, 2, 64
    B, S_SRC, S_TGT = 2, 8, 8

    root = jax.random.PRNGKey(0)
    k_params, k_src, k_tgt = jax.random.split(root, 3)
    params = init_params(k_params, SRC_VOCAB, TGT_VOCAB, D_MODEL, NUM_HEADS,
                         N_ENC, N_DEC, D_FF)

    src = jax.random.randint(k_src, (B, S_SRC), 0, SRC_VOCAB, dtype=jnp.int32)
    tgt = jax.random.randint(k_tgt, (B, S_TGT), 0, TGT_VOCAB, dtype=jnp.int32)

    # Standard masks: full visibility over source, causal over target / memory unrestricted.
    tgt_mask = jnp.tril(jnp.ones((S_TGT, S_TGT), jnp.float32))[None, None].repeat(B, axis=0)

    fwd = jax.jit(partial(transformer_forward, d_model=D_MODEL, num_heads=NUM_HEADS))
    out, enc_w, dec_self_w, dec_cross_w = fwd(
        params, src, tgt, src_mask=None, tgt_mask=tgt_mask, memory_mask=None)

    jax.block_until_ready(out)
    jax.block_until_ready(enc_w)
    jax.block_until_ready(dec_self_w)
    jax.block_until_ready(dec_cross_w)

    assert out.shape == (B, S_TGT, TGT_VOCAB)
    assert len(enc_w) == N_ENC and enc_w[0].shape == (B, NUM_HEADS, S_SRC, S_SRC)
    assert len(dec_self_w) == N_DEC and dec_self_w[0].shape == (B, NUM_HEADS, S_TGT, S_TGT)
    assert len(dec_cross_w) == N_DEC and dec_cross_w[0].shape == (B, NUM_HEADS, S_TGT, S_SRC)
    assert bool(jnp.all(jnp.isfinite(out)))
    print("KERNEL_OK")
</pallas_src>

<mosaic_0001>
module attributes {stable_mosaic.version = 11 : i64} {
  func.func @kernel(%arg0: i32, %arg1: i32, %arg2: i32, %arg3: memref<16x32xf32, #tpu.memory_space<vmem>>, %arg4: memref<32x32xbf16, #tpu.memory_space<vmem>>, %arg5: memref<1x32xf32, #tpu.memory_space<vmem>>, %arg6: memref<16x32xf32, #tpu.memory_space<vmem>>, %arg7: memref<16x32xf32, #tpu.memory_space<vmem>>) attributes {dimension_semantics = [#tpu.dimension_semantics<parallel>, #tpu.dimension_semantics<parallel>, #tpu.dimension_semantics<arbitrary>], iteration_bounds = array<i64: 1, 1, 1>, scalar_prefetch = 0 : i64, scratch_operands = 1 : i64, tpu.core_type = #tpu.core_type<tc>, window_params = [{transform_indices = @transform_0, window_bounds = array<i64: 16, 32>}, {transform_indices = @transform_1, window_bounds = array<i64: 32, 32>}, {transform_indices = @transform_2, window_bounds = array<i64: 1, 32>}, {transform_indices = @transform_3, window_bounds = array<i64: 16, 32>}]} {
    %c0_i32 = arith.constant 0 : i32
    %0 = arith.cmpi eq, %arg2, %c0_i32 : i32
    %1 = arith.extui %0 : i1 to i32
    %c0_i32_0 = arith.constant 0 : i32
    %2 = arith.cmpi ne, %1, %c0_i32_0 : i32
    scf.if %2 {
      %cst_10 = arith.constant 0.000000e+00 : f32
      %13 = vector.broadcast %cst_10 : f32 to vector<16x32xf32>
      %c0_11 = arith.constant 0 : index
      %c0_12 = arith.constant 0 : index
      %14 = vector.load %arg7[%c0_11, %c0_12] : memref<16x32xf32, #tpu.memory_space<vmem>>, vector<16x32xf32>
      tpu.vector_store %arg7[%c0_11, %c0_12], %13 {strides = array<i32>} : memref<16x32xf32, #tpu.memory_space<vmem>>, vector<16x32xf32>,
    } else {
    }
    %c0 = arith.constant 0 : index
    %c0_1 = arith.constant 0 : index
    %3 = vector.load %arg3[%c0, %c0_1] : memref<16x32xf32, #tpu.memory_space<vmem>>, vector<16x32xf32>
    %4 = arith.truncf %3 : vector<16x32xf32> to vector<16x32xbf16>
    %c0_2 = arith.constant 0 : index
    %c0_3 = arith.constant 0 : index
    %5 = vector.load %arg7[%c0_2, %c0_3] : memref<16x32xf32, #tpu.memory_space<vmem>>, vector<16x32xf32>
    %c0_4 = arith.constant 0 : index
    %c0_5 = arith.constant 0 : index
    %6 = vector.load %arg4[%c0_4, %c0_5] : memref<32x32xbf16, #tpu.memory_space<vmem>>, vector<32x32xbf16>
    %cst = arith.constant dense<0.000000e+00> : vector<16x32xf32>
    %7 = tpu.matmul %4, %6, %cst {dimension_numbers = #tpu.dot_dimension_numbers<[1], [0], [0], [1], [0, 0, 1, 1], [], []>} : vector<16x32xbf16>, vector<32x32xbf16>, vector<16x32xf32> -> vector<16x32xf32>
    %8 = arith.addf %5, %7 : vector<16x32xf32>
    %c0_6 = arith.constant 0 : index
    %c0_7 = arith.constant 0 : index
    %9 = vector.load %arg7[%c0_6, %c0_7] : memref<16x32xf32, #tpu.memory_space<vmem>>, vector<16x32xf32>
    tpu.vector_store %arg7[%c0_6, %c0_7], %8 {strides = array<i32>} : memref<16x32xf32, #tpu.memory_space<vmem>>, vector<16x32xf32>,
    %c0_i32_8 = arith.constant 0 : i32
    %10 = arith.cmpi eq, %arg2, %c0_i32_8 : i32
    %11 = arith.extui %10 : i1 to i32
    %c0_i32_9 = arith.constant 0 : i32
    %12 = arith.cmpi ne, %11, %c0_i32_9 : i32
    scf.if %12 {
      %c0_10 = arith.constant 0 : index
      %c0_11 = arith.constant 0 : index
      %13 = vector.load %arg7[%c0_10, %c0_11] : memref<16x32xf32, #tpu.memory_space<vmem>>, vector<16x32xf32>
      %c0_12 = arith.constant 0 : index
      %c0_13 = arith.constant 0 : index
      %14 = vector.load %arg5[%c0_12, %c0_13] : memref<1x32xf32, #tpu.memory_space<vmem>>, vector<1x32xf32>
      %15 = vector.broadcast %14 : vector<1x32xf32> to vector<16x32xf32>
      %16 = arith.addf %13, %15 : vector<16x32xf32>
      %c0_14 = arith.constant 0 : index
      %c0_15 = arith.constant 0 : index
      %17 = vector.load %arg6[%c0_14, %c0_15] : memref<16x32xf32, #tpu.memory_space<vmem>>, vector<16x32xf32>
      tpu.vector_store %arg6[%c0_14, %c0_15], %16 {strides = array<i32>} : memref<16x32xf32, #tpu.memory_space<vmem>>, vector<16x32xf32>,
    } else {
    }
    return
  }
  func.func @transform_0(%arg0: i32, %arg1: i32, %arg2: i32) -> (i32, i32) {
    %c0_i32 = arith.constant 0 : i32
    return %arg0, %arg2 : i32, i32
  }
  func.func @transform_1(%arg0: i32, %arg1: i32, %arg2: i32) -> (i32, i32) {
    %c0_i32 = arith.constant 0 : i32
    return %arg2, %arg1 : i32, i32
  }
  func.func @transform_2(%arg0: i32, %arg1: i32, %arg2: i32) -> (i32, i32) {
    %c0_i32 = arith.constant 0 : i32
    %c0_i32_0 = arith.constant 0 : i32
    return %c0_i32, %arg1 : i32, i32
  }
  func.func @transform_3(%arg0: i32, %arg1: i32, %arg2: i32) -> (i32, i32) {
    %c0_i32 = arith.constant 0 : i32
    return %arg0, %arg1 : i32, i32
  }
}

module attributes {stable_mosaic.version = 11 : i64} {
  func.func @kernel(%arg0: i32, %arg1: i32, %arg2: memref<1x8x32xf32, #tpu.memory_space<vmem>>, %arg3: memref<1x8x32xf32, #tpu.memory_space<vmem>>, %arg4: memref<1x8x32xf32, #tpu.memory_space<vmem>>, %arg5: memref<1x8x32xf32, #tpu.memory_space<vmem>>, %arg6: memref<1x4x8x8xf32, #tpu.memory_space<vmem>>) attributes {dimension_semantics = [#tpu.dimension_semantics<parallel>, #tpu.dimension_semantics<parallel>], iteration_bounds = array<i64: 2, 1>, scalar_prefetch = 0 : i64, scratch_operands = 0 : i64, tpu.core_type = #tpu.core_type<tc>, window_params = [{transform_indices = @transform_0, window_bounds = array<i64: 1, 8, 32>}, {transform_indices = @transform_1, window_bounds = array<i64: 1, 8, 32>}, {transform_indices = @transform_2, window_bounds = array<i64: 1, 8, 32>}, {transform_indices = @transform_3, window_bounds = array<i64: 1, 8, 32>}, {transform_indices = @transform_4, window_bounds = array<i64: 1, 4, 8, 8>}]} {
    %c0 = arith.constant 0 : index
    %c0_0 = arith.constant 0 : index
    %c0_1 = arith.constant 0 : index
    %0 = vector.load %arg2[%c0, %c0_0, %c0_1] : memref<1x8x32xf32, #tpu.memory_space<vmem>>, vector<1x8x32xf32>
    %1 = vector.shape_cast %0 : vector<1x8x32xf32> to vector<8x32xf32>
    %2 = arith.truncf %1 : vector<8x32xf32> to vector<8x32xbf16>
    %c0_2 = arith.constant 0 : index
    %c0_3 = arith.constant 0 : index
    %c0_4 = arith.constant 0 : index
    %3 = vector.load %arg3[%c0_2, %c0_3, %c0_4] : memref<1x8x32xf32, #tpu.memory_space<vmem>>, vector<1x8x32xf32>
    %4 = vector.shape_cast %3 : vector<1x8x32xf32> to vector<8x32xf32>
    %5 = arith.truncf %4 : vector<8x32xf32> to vector<8x32xbf16>
    %c0_5 = arith.constant 0 : index
    %c0_6 = arith.constant 0 : index
    %c0_7 = arith.constant 0 : index
    %6 = vector.load %arg4[%c0_5, %c0_6, %c0_7] : memref<1x8x32xf32, #tpu.memory_space<vmem>>, vector<1x8x32xf32>
    %7 = vector.shape_cast %6 : vector<1x8x32xf32> to vector<8x32xf32>
    %8 = arith.truncf %7 : vector<8x32xf32> to vector<8x32xbf16>
    %9 = vector.extract_strided_slice %2 {offsets = [0, 0], sizes = [8, 8], strides = [1, 1]} : vector<8x32xbf16> to vector<8x8xbf16>
    %10 = vector.extract_strided_slice %5 {offsets = [0, 0], sizes = [8, 8], strides = [1, 1]} : vector<8x32xbf16> to vector<8x8xbf16>
    "tpu.trace_start"() <{level = 10 : i32, message = "qd,kd->qk"}> : () -> ()
    %cst = arith.constant dense<0.000000e+00> : vector<8x8xf32>
    %11 = tpu.matmul %9, %10, %cst {dimension_numbers = #tpu.dot_dimension_numbers<[1], [1], [0], [0], [0, 0, 1, 0], [], []>} : vector<8x8xbf16>, vector<8x8xbf16>, vector<8x8xf32> -> vector<8x8xf32>
    "tpu.trace_stop"() : () -> ()
    %cst_8 = arith.constant dense<0xFF800000> : vector<8xf32>
    %12 = vector.multi_reduction <maximumf>, %11, %cst_8 [1] : vector<8x8xf32> to vector<8xf32>
    %13 = vector.shape_cast %12 : vector<8xf32> to vector<8x1xf32>
    %14 = vector.broadcast %13 : vector<8x1xf32> to vector<8x8xf32>
    %15 = arith.subf %11, %14 : vector<8x8xf32>
    %16 = math.exp %15 : vector<8x8xf32>
    %cst_9 = arith.constant dense<0.000000e+00> : vector<8xf32>
    %17 = vector.multi_reduction <add>, %16, %cst_9 [1] : vector<8x8xf32> to vector<8xf32>
    %18 = vector.shape_cast %17 : vector<8xf32> to vector<8x1xf32>
    %19 = tpu.reciprocal %18 {approx = true} : vector<8x1xf32> -> vector<8x1xf32>
    %20 = vector.broadcast %19 : vector<8x1xf32> to vector<8x8xf32>
    %21 = arith.mulf %16, %20 : vector<8x8xf32>
    %c0_10 = arith.constant 0 : index
    %c0_11 = arith.constant 0 : index
    %c0_12 = arith.constant 0 : index
    %c0_13 = arith.constant 0 : index
    %22 = vector.load %arg6[%c0_10, %c0_11, %c0_12, %c0_13] : memref<1x4x8x8xf32, #tpu.memory_space<vmem>>, vector<1x1x8x8xf32>
    %23 = vector.shape_cast %22 : vector<1x1x8x8xf32> to vector<8x8xf32>
    %24 = vector.shape_cast %21 : vector<8x8xf32> to vector<1x1x8x8xf32>
    tpu.vector_store %arg6[%c0_10, %c0_11, %c0_12, %c0_13], %24 {strides = array<i32>} : memref<1x4x8x8xf32, #tpu.memory_space<vmem>>, vector<1x1x8x8xf32>,
    %25 = arith.truncf %21 : vector<8x8xf32> to vector<8x8xbf16>
    %26 = vector.extract_strided_slice %8 {offsets = [0, 0], sizes = [8, 8], strides = [1, 1]} : vector<8x32xbf16> to vector<8x8xbf16>
    "tpu.trace_start"() <{level = 10 : i32, message = "qk,kd->qd"}> : () -> ()
    %cst_14 = arith.constant dense<0.000000e+00> : vector<8x8xf32>
    %27 = tpu.matmul %25, %26, %cst_14 {dimension_numbers = #tpu.dot_dimension_numbers<[1], [0], [0], [1], [0, 0, 1, 1], [], []>} : vector<8x8xbf16>, vector<8x8xbf16>, vector<8x8xf32> -> vector<8x8xf32>
    "tpu.trace_stop"() : () -> ()
    %28 = vector.extract_strided_slice %2 {offsets = [0, 8], sizes = [8, 8], strides = [1, 1]} : vector<8x32xbf16> to vector<8x8xbf16>
    %29 = vector.extract_strided_slice %5 {offsets = [0, 8], sizes = [8, 8], strides = [1, 1]} : vector<8x32xbf16> to vector<8x8xbf16>
    "tpu.trace_start"() <{level = 10 : i32, message = "qd,kd->qk"}> : () -> ()
    %cst_15 = arith.constant dense<0.000000e+00> : vector<8x8xf32>
    %30 = tpu.matmul %28, %29, %cst_15 {dimension_numbers = #tpu.dot_dimension_numbers<[1], [1], [0], [0], [0, 0, 1, 0], [], []>} : vector<8x8xbf16>, vector<8x8xbf16>, vector<8x8xf32> -> vector<8x8xf32>
    "tpu.trace_stop"() : () -> ()
    %cst_16 = arith.constant dense<0xFF800000> : vector<8xf32>
    %31 = vector.multi_reduction <maximumf>, %30, %cst_16 [1] : vector<8x8xf32> to vector<8xf32>
    %32 = vector.shape_cast %31 : vector<8xf32> to vector<8x1xf32>
    %33 = vector.broadcast %32 : vector<8x1xf32> to vector<8x8xf32>
    %34 = arith.subf %30, %33 : vector<8x8xf32>
    %35 = math.exp %34 : vector<8x8xf32>
    %cst_17 = arith.constant dense<0.000000e+00> : vector<8xf32>
    %36 = vector.multi_reduction <add>, %35, %cst_17 [1] : vector<8x8xf32> to vector<8xf32>
    %37 = vector.shape_cast %36 : vector<8xf32> to vector<8x1xf32>
    %38 = tpu.reciprocal %37 {approx = true} : vector<8x1xf32> -> vector<8x1xf32>
    %39 = vector.broadcast %38 : vector<8x1xf32> to vector<8x8xf32>
    %40 = arith.mulf %35, %39 : vector<8x8xf32>
    %c0_18 = arith.constant 0 : index
    %c1 = arith.constant 1 : index
    %c0_19 = arith.constant 0 : index
    %c0_20 = arith.constant 0 : index
    %41 = vector.load %arg6[%c0_18, %c1, %c0_19, %c0_20] : memref<1x4x8x8xf32, #tpu.memory_space<vmem>>, vector<1x1x8x8xf32>
    %42 = vector.shape_cast %41 : vector<1x1x8x8xf32> to vector<8x8xf32>
    %43 = vector.shape_cast %40 : vector<8x8xf32> to vector<1x1x8x8xf32>
    tpu.vector_store %arg6[%c0_18, %c1, %c0_19, %c0_20], %43 {strides = array<i32>} : memref<1x4x8x8xf32, #tpu.memory_space<vmem>>, vector<1x1x8x8xf32>,
    %44 = arith.truncf %40 : vector<8x8xf32> to vector<8x8xbf16>
    %45 = vector.extract_strided_slice %8 {offsets = [0, 8], sizes = [8, 8], strides = [1, 1]} : vector<8x32xbf16> to vector<8x8xbf16>
    "tpu.trace_start"() <{level = 10 : i32, message = "qk,kd->qd"}> : () -> ()
    %cst_21 = arith.constant dense<0.000000e+00> : vector<8x8xf32>
    %46 = tpu.matmul %44, %45, %cst_21 {dimension_numbers = #tpu.dot_dimension_numbers<[1], [0], [0], [1], [0, 0, 1, 1], [], []>} : vector<8x8xbf16>, vector<8x8xbf16>, vector<8x8xf32> -> vector<8x8xf32>
    "tpu.trace_stop"() : () -> ()
    %47 = vector.extract_strided_slice %2 {offsets = [0, 16], sizes = [8, 8], strides = [1, 1]} : vector<8x32xbf16> to vector<8x8xbf16>
    %48 = vector.extract_strided_slice %5 {offsets = [0, 16], sizes = [8, 8], strides = [1, 1]} : vector<8x32xbf16> to vector<8x8xbf16>
    "tpu.trace_start"() <{level = 10 : i32, message = "qd,kd->qk"}> : () -> ()
    %cst_22 = arith.constant dense<0.000000e+00> : vector<8x8xf32>
    %49 = tpu.matmul %47, %48, %cst_22 {dimension_numbers = #tpu.dot_dimension_numbers<[1], [1], [0], [0], [0, 0, 1, 0], [], []>} : vector<8x8xbf16>, vector<8x8xbf16>, vector<8x8xf32> -> vector<8x8xf32>
    "tpu.trace_stop"() : () -> ()
    %cst_23 = arith.constant dense<0xFF800000> : vector<8xf32>
    %50 = vector.multi_reduction <maximumf>, %49, %cst_23 [1] : vector<8x8xf32> to vector<8xf32>
    %51 = vector.shape_cast %50 : vector<8xf32> to vector<8x1xf32>
    %52 = vector.broadcast %51 : vector<8x1xf32> to vector<8x8xf32>
    %53 = arith.subf %49, %52 : vector<8x8xf32>
    %54 = math.exp %53 : vector<8x8xf32>
    %cst_24 = arith.constant dense<0.000000e+00> : vector<8xf32>
    %55 = vector.multi_reduction <add>, %54, %cst_24 [1] : vector<8x8xf32> to vector<8xf32>
    %56 = vector.shape_cast %55 : vector<8xf32> to vector<8x1xf32>
    %57 = tpu.reciprocal %56 {approx = true} : vector<8x1xf32> -> vector<8x1xf32>
    %58 = vector.broadcast %57 : vector<8x1xf32> to vector<8x8xf32>
    %59 = arith.mulf %54, %58 : vector<8x8xf32>
    %c0_25 = arith.constant 0 : index
    %c2 = arith.constant 2 : index
    %c0_26 = arith.constant 0 : index
    %c0_27 = arith.constant 0 : index
    %60 = vector.load %arg6[%c0_25, %c2, %c0_26, %c0_27] : memref<1x4x8x8xf32, #tpu.memory_space<vmem>>, vector<1x1x8x8xf32>
    %61 = vector.shape_cast %60 : vector<1x1x8x8xf32> to vector<8x8xf32>
    %62 = vector.shape_cast %59 : vector<8x8xf32> to vector<1x1x8x8xf32>
    tpu.vector_store %arg6[%c0_25, %c2, %c0_26, %c0_27], %62 {strides = array<i32>} : memref<1x4x8x8xf32, #tpu.memory_space<vmem>>, vector<1x1x8x8xf32>,
    %63 = arith.truncf %59 : vector<8x8xf32> to vector<8x8xbf16>
    %64 = vector.extract_strided_slice %8 {offsets = [0, 16], sizes = [8, 8], strides = [1, 1]} : vector<8x32xbf16> to vector<8x8xbf16>
    "tpu.trace_start"() <{level = 10 : i32, message = "qk,kd->qd"}> : () -> ()
    %cst_28 = arith.constant dense<0.000000e+00> : vector<8x8xf32>
    %65 = tpu.matmul %63, %64, %cst_28 {dimension_numbers = #tpu.dot_dimension_numbers<[1], [0], [0], [1], [0, 0, 1, 1], [], []>} : vector<8x8xbf16>, vector<8x8xbf16>, vector<8x8xf32> -> vector<8x8xf32>
    "tpu.trace_stop"() : () -> ()
    %66 = vector.extract_strided_slice %2 {offsets = [0, 24], sizes = [8, 8], strides = [1, 1]} : vector<8x32xbf16> to vector<8x8xbf16>
    %67 = vector.extract_strided_slice %5 {offsets = [0, 24], sizes = [8, 8], strides = [1, 1]} : vector<8x32xbf16> to vector<8x8xbf16>
    "tpu.trace_start"() <{level = 10 : i32, message = "qd,kd->qk"}> : () -> ()
    %cst_29 = arith.constant dense<0.000000e+00> : vector<8x8xf32>
    %68 = tpu.matmul %66, %67, %cst_29 {dimension_numbers = #tpu.dot_dimension_numbers<[1], [1], [0], [0], [0, 0, 1, 0], [], []>} : vector<8x8xbf16>, vector<8x8xbf16>, vector<8x8xf32> -> vector<8x8xf32>
    "tpu.trace_stop"() : () -> ()
    %cst_30 = arith.constant dense<0xFF800000> : vector<8xf32>
    %69 = vector.multi_reduction <maximumf>, %68, %cst_30 [1] : vector<8x8xf32> to vector<8xf32>
    %70 = vector.shape_cast %69 : vector<8xf32> to vector<8x1xf32>
    %71 = vector.broadcast %70 : vector<8x1xf32> to vector<8x8xf32>
    %72 = arith.subf %68, %71 : vector<8x8xf32>
    %73 = math.exp %72 : vector<8x8xf32>
    %cst_31 = arith.constant dense<0.000000e+00> : vector<8xf32>
    %74 = vector.multi_reduction <add>, %73, %cst_31 [1] : vector<8x8xf32> to vector<8xf32>
    %75 = vector.shape_cast %74 : vector<8xf32> to vector<8x1xf32>
    %76 = tpu.reciprocal %75 {approx = true} : vector<8x1xf32> -> vector<8x1xf32>
    %77 = vector.broadcast %76 : vector<8x1xf32> to vector<8x8xf32>
    %78 = arith.mulf %73, %77 : vector<8x8xf32>
    %c0_32 = arith.constant 0 : index
    %c3 = arith.constant 3 : index
    %c0_33 = arith.constant 0 : index
    %c0_34 = arith.constant 0 : index
    %79 = vector.load %arg6[%c0_32, %c3, %c0_33, %c0_34] : memref<1x4x8x8xf32, #tpu.memory_space<vmem>>, vector<1x1x8x8xf32>
    %80 = vector.shape_cast %79 : vector<1x1x8x8xf32> to vector<8x8xf32>
    %81 = vector.shape_cast %78 : vector<8x8xf32> to vector<1x1x8x8xf32>
    tpu.vector_store %arg6[%c0_32, %c3, %c0_33, %c0_34], %81 {strides = array<i32>} : memref<1x4x8x8xf32, #tpu.memory_space<vmem>>, vector<1x1x8x8xf32>,
    %82 = arith.truncf %78 : vector<8x8xf32> to vector<8x8xbf16>
    %83 = vector.extract_strided_slice %8 {offsets = [0, 24], sizes = [8, 8], strides = [1, 1]} : vector<8x32xbf16> to vector<8x8xbf16>
    "tpu.trace_start"() <{level = 10 : i32, message = "qk,kd->qd"}> : () -> ()
    %cst_35 = arith.constant dense<0.000000e+00> : vector<8x8xf32>
    %84 = tpu.matmul %82, %83, %cst_35 {dimension_numbers = #tpu.dot_dimension_numbers<[1], [0], [0], [1], [0, 0, 1, 1], [], []>} : vector<8x8xbf16>, vector<8x8xbf16>, vector<8x8xf32> -> vector<8x8xf32>
    "tpu.trace_stop"() : () -> ()
    %85 = tpu.concatenate %27, %46, %65, %84 in 1 : vector<8x8xf32>, vector<8x8xf32>, vector<8x8xf32>, vector<8x8xf32> -> vector<8x32xf32>
    %c0_36 = arith.constant 0 : index
    %c0_37 = arith.constant 0 : index
    %c0_38 = arith.constant 0 : index
    %86 = vector.load %arg5[%c0_36, %c0_37, %c0_38] : memref<1x8x32xf32, #tpu.memory_space<vmem>>, vector<1x8x32xf32>
    %87 = vector.shape_cast %86 : vector<1x8x32xf32> to vector<8x32xf32>
    %88 = vector.shape_cast %85 : vector<8x32xf32> to vector<1x8x32xf32>
    tpu.vector_store %arg5[%c0_36, %c0_37, %c0_38], %88 {strides = array<i32>} : memref<1x8x32xf32, #tpu.memory_space<vmem>>, vector<1x8x32xf32>,
    return
  }
  func.func @transform_0(%arg0: i32, %arg1: i32) -> (i32, i32, i32) {
    %c0_i32 = arith.constant 0 : i32
    %c0_i32_0 = arith.constant 0 : i32
    return %arg0, %c0_i32, %arg1 : i32, i32, i32
  }
  func.func @transform_1(%arg0: i32, %arg1: i32) -> (i32, i32, i32) {
    %c0_i32 = arith.constant 0 : i32
    %c0_i32_0 = arith.constant 0 : i32
    return %arg0, %c0_i32, %arg1 : i32, i32, i32
  }
  func.func @transform_2(%arg0: i32, %arg1: i32) -> (i32, i32, i32) {
    %c0_i32 = arith.constant 0 : i32
    %c0_i32_0 = arith.constant 0 : i32
    return %arg0, %c0_i32, %arg1 : i32, i32, i32
  }
  func.func @transform_3(%arg0: i32, %arg1: i32) -> (i32, i32, i32) {
    %c0_i32 = arith.constant 0 : i32
    %c0_i32_0 = arith.constant 0 : i32
    return %arg0, %c0_i32, %arg1 : i32, i32, i32
  }
  func.func @transform_4(%arg0: i32, %arg1: i32) -> (i32, i32, i32, i32) {
    %c0_i32 = arith.constant 0 : i32
    %c0_i32_0 = arith.constant 0 : i32
    %c0_i32_1 = arith.constant 0 : i32
    return %arg0, %arg1, %c0_i32, %c0_i32_0 : i32, i32, i32, i32
  }
}

module attributes {stable_mosaic.version = 11 : i64} {
  func.func @kernel(%arg0: i32, %arg1: i32, %arg2: i32, %arg3: memref<16x32xf32, #tpu.memory_space<vmem>>, %arg4: memref<32x32xbf16, #tpu.memory_space<vmem>>, %arg5: memref<32x32xbf16, #tpu.memory_space<vmem>>, %arg6: memref<32x32xbf16, #tpu.memory_space<vmem>>, %arg7: memref<1x32xf32, #tpu.memory_space<vmem>>, %arg8: memref<1x32xf32, #tpu.memory_space<vmem>>, %arg9: memref<1x32xf32, #tpu.memory_space<vmem>>, %arg10: memref<16x32xf32, #tpu.memory_space<vmem>>, %arg11: memref<16x32xf32, #tpu.memory_space<vmem>>, %arg12: memref<16x32xf32, #tpu.memory_space<vmem>>, %arg13: memref<16x32xf32, #tpu.memory_space<vmem>>, %arg14: memref<16x32xf32, #tpu.memory_space<vmem>>, %arg15: memref<16x32xf32, #tpu.memory_space<vmem>>) attributes {dimension_semantics = [#tpu.dimension_semantics<parallel>, #tpu.dimension_semantics<parallel>, #tpu.dimension_semantics<arbitrary>], iteration_bounds = array<i64: 1, 1, 1>, scalar_prefetch = 0 : i64, scratch_operands = 3 : i64, tpu.core_type = #tpu.core_type<tc>, window_params = [{transform_indices = @transform_0, window_bounds = array<i64: 16, 32>}, {transform_indices = @transform_1, window_bounds = array<i64: 32, 32>}, {transform_indices = @transform_2, window_bounds = array<i64: 32, 32>}, {transform_indices = @transform_3, window_bounds = array<i64: 32, 32>}, {transform_indices = @transform_4, window_bounds = array<i64: 1, 32>}, {transform_indices = @transform_5, window_bounds = array<i64: 1, 32>}, {transform_indices = @transform_6, window_bounds = array<i64: 1, 32>}, {transform_indices = @transform_7, window_bounds = array<i64: 16, 32>}, {transform_indices = @transform_8, window_bounds = array<i64: 16, 32>}, {transform_indices = @transform_9, window_bounds = array<i64: 16, 32>}]} {
    %c0_i32 = arith.constant 0 : i32
    %0 = arith.cmpi eq, %arg2, %c0_i32 : i32
    %1 = arith.extui %0 : i1 to i32
    %c0_i32_0 = arith.constant 0 : i32
    %2 = arith.cmpi ne, %1, %c0_i32_0 : i32
    scf.if %2 {
      %cst_24 = arith.constant 0.000000e+00 : f32
      %23 = vector.broadcast %cst_24 : f32 to vector<16x32xf32>
      %c0_25 = arith.constant 0 : index
      %c0_26 = arith.constant 0 : index
      %24 = vector.load %arg13[%c0_25, %c0_26] : memref<16x32xf32, #tpu.memory_space<vmem>>, vector<16x32xf32>
      tpu.vector_store %arg13[%c0_25, %c0_26], %23 {strides = array<i32>} : memref<16x32xf32, #tpu.memory_space<vmem>>, vector<16x32xf32>,
      %cst_27 = arith.constant 0.000000e+00 : f32
      %25 = vector.broadcast %cst_27 : f32 to vector<16x32xf32>
      %c0_28 = arith.constant 0 : index
      %c0_29 = arith.constant 0 : index
      %26 = vector.load %arg14[%c0_28, %c0_29] : memref<16x32xf32, #tpu.memory_space<vmem>>, vector<16x32xf32>
      tpu.vector_store %arg14[%c0_28, %c0_29], %25 {strides = array<i32>} : memref<16x32xf32, #tpu.memory_space<vmem>>, vector<16x32xf32>,
      %cst_30 = arith.constant 0.000000e+00 : f32
      %27 = vector.broadcast %cst_30 : f32 to vector<16x32xf32>
      %c0_31 = arith.constant 0 : index
      %c0_32 = arith.constant 0 : index
      %28 = vector.load %arg15[%c0_31, %c0_32] : memref<16x32xf32, #tpu.memory_space<vmem>>, vector<16x32xf32>
      tpu.vector_store %arg15[%c0_31, %c0_32], %27 {strides = array<i32>} : memref<16x32xf32, #tpu.memory_space<vmem>>, vector<16x32xf32>,
    } else {
    }
    %c0 = arith.constant 0 : index
    %c0_1 = arith.constant 0 : index
    %3 = vector.load %arg3[%c0, %c0_1] : memref<16x32xf32, #tpu.memory_space<vmem>>, vector<16x32xf32>
    %4 = arith.truncf %3 : vector<16x32xf32> to vector<16x32xbf16>
    %c0_2 = arith.constant 0 : index
    %c0_3 = arith.constant 0 : index
    %5 = vector.load %arg13[%c0_2, %c0_3] : memref<16x32xf32, #tpu.memory_space<vmem>>, vector<16x32xf32>
    %c0_4 = arith.constant 0 : index
    %c0_5 = arith.constant 0 : index
    %6 = vector.load %arg4[%c0_4, %c0_5] : memref<32x32xbf16, #tpu.memory_space<vmem>>, vector<32x32xbf16>
    %cst = arith.constant dense<0.000000e+00> : vector<16x32xf32>
    %7 = tpu.matmul %4, %6, %cst {dimension_numbers = #tpu.dot_dimension_numbers<[1], [0], [0], [1], [0, 0, 1, 1], [], []>} : vector<16x32xbf16>, vector<32x32xbf16>, vector<16x32xf32> -> vector<16x32xf32>
    %8 = arith.addf %5, %7 : vector<16x32xf32>
    %c0_6 = arith.constant 0 : index
    %c0_7 = arith.constant 0 : index
    %9 = vector.load %arg13[%c0_6, %c0_7] : memref<16x32xf32, #tpu.memory_space<vmem>>, vector<16x32xf32>
    tpu.vector_store %arg13[%c0_6, %c0_7], %8 {strides = array<i32>} : memref<16x32xf32, #tpu.memory_space<vmem>>, vector<16x32xf32>,
    %c0_8 = arith.constant 0 : index
    %c0_9 = arith.constant 0 : index
    %10 = vector.load %arg14[%c0_8, %c0_9] : memref<16x32xf32, #tpu.memory_space<vmem>>, vector<16x32xf32>
    %c0_10 = arith.constant 0 : index
    %c0_11 = arith.constant 0 : index
    %11 = vector.load %arg5[%c0_10, %c0_11] : memref<32x32xbf16, #tpu.memory_space<vmem>>, vector<32x32xbf16>
    %cst_12 = arith.constant dense<0.000000e+00> : vector<16x32xf32>
    %12 = tpu.matmul %4, %11, %cst_12 {dimension_numbers = #tpu.dot_dimension_numbers<[1], [0], [0], [1], [0, 0, 1, 1], [], []>} : vector<16x32xbf16>, vector<32x32xbf16>, vector<16x32xf32> -> vector<16x32xf32>
    %13 = arith.addf %10, %12 : vector<16x32xf32>
    %c0_13 = arith.constant 0 : index
    %c0_14 = arith.constant 0 : index
    %14 = vector.load %arg14[%c0_13, %c0_14] : memref<16x32xf32, #tpu.memory_space<vmem>>, vector<16x32xf32>
    tpu.vector_store %arg14[%c0_13, %c0_14], %13 {strides = array<i32>} : memref<16x32xf32, #tpu.memory_space<vmem>>, vector<16x32xf32>,
    %c0_15 = arith.constant 0 : index
    %c0_16 = arith.constant 0 : index
    %15 = vector.load %arg15[%c0_15, %c0_16] : memref<16x32xf32, #tpu.memory_space<vmem>>, vector<16x32xf32>
    %c0_17 = arith.constant 0 : index
    %c0_18 = arith.constant 0 : index
    %16 = vector.load %arg6[%c0_17, %c0_18] : memref<32x32xbf16, #tpu.memory_space<vmem>>, vector<32x32xbf16>
    %cst_19 = arith.constant dense<0.000000e+00> : vector<16x32xf32>
    %17 = tpu.matmul %4, %16, %cst_19 {dimension_numbers = #tpu.dot_dimension_numbers<[1], [0], [0], [1], [0, 0, 1, 1], [], []>} : vector<16x32xbf16>, vector<32x32xbf16>, vector<16x32xf32> -> vector<16x32xf32>
    %18 = arith.addf %15, %17 : vector<16x32xf32>
    %c0_20 = arith.constant 0 : index
    %c0_21 = arith.constant 0 : index
    %19 = vector.load %arg15[%c0_20, %c0_21] : memref<16x32xf32, #tpu.memory_space<vmem>>, vector<16x32xf32>
    tpu.vector_store %arg15[%c0_20, %c0_21], %18 {strides = array<i32>} : memref<16x32xf32, #tpu.memory_space<vmem>>, vector<16x32xf32>,
    %c0_i32_22 = arith.constant 0 : i32
    %20 = arith.cmpi eq, %arg2, %c0_i32_22 : i32
    %21 = arith.extui %20 : i1 to i32
    %c0_i32_23 = arith.constant 0 : i32
    %22 = arith.cmpi ne, %21, %c0_i32_23 : i32
    scf.if %22 {
      %c0_24 = arith.constant 0 : index
      %c0_25 = arith.constant 0 : index
      %23 = vector.load %arg13[%c0_24, %c0_25] : memref<16x32xf32, #tpu.memory_space<vmem>>, vector<16x32xf32>
      %c0_26 = arith.constant 0 : index
      %c0_27 = arith.constant 0 : index
      %24 = vector.load %arg7[%c0_26, %c0_27] : memref<1x32xf32, #tpu.memory_space<vmem>>, vector<1x32xf32>
      %25 = vector.broadcast %24 : vector<1x32xf32> to vector<16x32xf32>
      %26 = arith.addf %23, %25 : vector<16x32xf32>
      %c0_28 = arith.constant 0 : index
      %c0_29 = arith.constant 0 : index
      %27 = vector.load %arg10[%c0_28, %c0_29] : memref<16x32xf32, #tpu.memory_space<vmem>>, vector<16x32xf32>
      tpu.vector_store %arg10[%c0_28, %c0_29], %26 {strides = array<i32>} : memref<16x32xf32, #tpu.memory_space<vmem>>, vector<16x32xf32>,
      %c0_30 = arith.constant 0 : index
      %c0_31 = arith.constant 0 : index
      %28 = vector.load %arg14[%c0_30, %c0_31] : memref<16x32xf32, #tpu.memory_space<vmem>>, vector<16x32xf32>
      %c0_32 = arith.constant 0 : index
      %c0_33 = arith.constant 0 : index
      %29 = vector.load %arg8[%c0_32, %c0_33] : memref<1x32xf32, #tpu.memory_space<vmem>>, vector<1x32xf32>
      %30 = vector.broadcast %29 : vector<1x32xf32> to vector<16x32xf32>
      %31 = arith.addf %28, %30 : vector<16x32xf32>
      %c0_34 = arith.constant 0 : index
      %c0_35 = arith.constant 0 : index
      %32 = vector.load %arg11[%c0_34, %c0_35] : memref<16x32xf32, #tpu.memory_space<vmem>>, vector<16x32xf32>
      tpu.vector_store %arg11[%c0_34, %c0_35], %31 {strides = array<i32>} : memref<16x32xf32, #tpu.memory_space<vmem>>, vector<16x32xf32>,
      %c0_36 = arith.constant 0 : index
      %c0_37 = arith.constant 0 : index
      %33 = vector.load %arg15[%c0_36, %c0_37] : memref<16x32xf32, #tpu.memory_space<vmem>>, vector<16x32xf32>
      %c0_38 = arith.constant 0 : index
      %c0_39 = arith.constant 0 : index
      %34 = vector.load %arg9[%c0_38, %c0_39] : memref<1x32xf32, #tpu.memory_space<vmem>>, vector<1x32xf32>
      %35 = vector.broadcast %34 : vector<1x32xf32> to vector<16x32xf32>
      %36 = arith.addf %33, %35 : vector<16x32xf32>
      %c0_40 = arith.constant 0 : index
      %c0_41 = arith.constant 0 : index
      %37 = vector.load %arg12[%c0_40, %c0_41] : memref<16x32xf32, #tpu.memory_space<vmem>>, vector<16x32xf32>
      tpu.vector_store %arg12[%c0_40, %c0_41], %36 {strides = array<i32>} : memref<16x32xf32, #tpu.memory_space<vmem>>, vector<16x32xf32>,
    } else {
    }
    return
  }
  func.func @transform_0(%arg0: i32, %arg1: i32, %arg2: i32) -> (i32, i32) {
    %c0_i32 = arith.constant 0 : i32
    return %arg0, %arg2 : i32, i32
  }
  func.func @transform_1(%arg0: i32, %arg1: i32, %arg2: i32) -> (i32, i32) {
    %c0_i32 = arith.constant 0 : i32
    return %arg2, %arg1 : i32, i32
  }
  func.func @transform_2(%arg0: i32, %arg1: i32, %arg2: i32) -> (i32, i32) {
    %c0_i32 = arith.constant 0 : i32
    return %arg2, %arg1 : i32, i32
  }
  func.func @transform_3(%arg0: i32, %arg1: i32, %arg2: i32) -> (i32, i32) {
    %c0_i32 = arith.constant 0 : i32
    return %arg2, %arg1 : i32, i32
  }
  func.func @transform_4(%arg0: i32, %arg1: i32, %arg2: i32) -> (i32, i32) {
    %c0_i32 = arith.constant 0 : i32
    %c0_i32_0 = arith.constant 0 : i32
    return %c0_i32, %arg1 : i32, i32
  }
  func.func @transform_5(%arg0: i32, %arg1: i32, %arg2: i32) -> (i32, i32) {
    %c0_i32 = arith.constant 0 : i32
    %c0_i32_0 = arith.constant 0 : i32
    return %c0_i32, %arg1 : i32, i32
  }
  func.func @transform_6(%arg0: i32, %arg1: i32, %arg2: i32) -> (i32, i32) {
    %c0_i32 = arith.constant 0 : i32
    %c0_i32_0 = arith.constant 0 : i32
    return %c0_i32, %arg1 : i32, i32
  }
  func.func @transform_7(%arg0: i32, %arg1: i32, %arg2: i32) -> (i32, i32) {
    %c0_i32 = arith.constant 0 : i32
    return %arg0, %arg1 : i32, i32
  }
  func.func @transform_8(%arg0: i32, %arg1: i32, %arg2: i32) -> (i32, i32) {
    %c0_i32 = arith.constant 0 : i32
    return %arg0, %arg1 : i32, i32
  }
  func.func @transform_9(%arg0: i32, %arg1: i32, %arg2: i32) -> (i32, i32) {
    %c0_i32 = arith.constant 0 : i32
    return %arg0, %arg1 : i32, i32
  }
}

module attributes {stable_mosaic.version = 11 : i64} {
  func.func @_add_layernorm_kernel(%arg0: i32, %arg1: memref<16x32xf32, #tpu.memory_space<vmem>>, %arg2: memref<16x32xf32, #tpu.memory_space<vmem>>, %arg3: memref<1x32xf32, #tpu.memory_space<vmem>>, %arg4: memref<1x32xf32, #tpu.memory_space<vmem>>, %arg5: memref<16x32xf32, #tpu.memory_space<vmem>>) attributes {dimension_semantics = [#tpu.dimension_semantics<parallel>], iteration_bounds = array<i64: 1>, scalar_prefetch = 0 : i64, scratch_operands = 0 : i64, tpu.core_type = #tpu.core_type<tc>, window_params = [{transform_indices = @transform_0, window_bounds = array<i64: 16, 32>}, {transform_indices = @transform_1, window_bounds = array<i64: 16, 32>}, {pipeline_mode = #tpu.pipeline_mode<synchronous>, transform_indices = @transform_2, window_bounds = array<i64: 1, 32>}, {pipeline_mode = #tpu.pipeline_mode<synchronous>, transform_indices = @transform_3, window_bounds = array<i64: 1, 32>}, {transform_indices = @transform_4, window_bounds = array<i64: 16, 32>}]} {
    %c0 = arith.constant 0 : index
    %c0_0 = arith.constant 0 : index
    %0 = vector.load %arg1[%c0, %c0_0] : memref<16x32xf32, #tpu.memory_space<vmem>>, vector<16x32xf32>
    %c0_1 = arith.constant 0 : index
    %c0_2 = arith.constant 0 : index
    %1 = vector.load %arg2[%c0_1, %c0_2] : memref<16x32xf32, #tpu.memory_space<vmem>>, vector<16x32xf32>
    %2 = arith.addf %0, %1 : vector<16x32xf32>
    %cst = arith.constant dense<0.000000e+00> : vector<16xf32>
    %3 = vector.multi_reduction <add>, %2, %cst [1] : vector<16x32xf32> to vector<16xf32>
    %4 = vector.shape_cast %3 : vector<16xf32> to vector<16x1xf32>
    %cst_3 = arith.constant 3.200000e+01 : f32
    %5 = vector.broadcast %cst_3 : f32 to vector<16x1xf32>
    %6 = arith.divf %4, %5 : vector<16x1xf32>
    %7 = vector.broadcast %6 : vector<16x1xf32> to vector<16x32xf32>
    %8 = arith.subf %2, %7 : vector<16x32xf32>
    %9 = arith.mulf %8, %8 : vector<16x32xf32>
    %cst_4 = arith.constant dense<0.000000e+00> : vector<16xf32>
    %10 = vector.multi_reduction <add>, %9, %cst_4 [1] : vector<16x32xf32> to vector<16xf32>
    %11 = vector.shape_cast %10 : vector<16xf32> to vector<16x1xf32>
    %cst_5 = arith.constant 3.200000e+01 : f32
    %12 = vector.broadcast %cst_5 : f32 to vector<16x1xf32>
    %13 = arith.divf %11, %12 : vector<16x1xf32>
    %14 = vector.broadcast %6 : vector<16x1xf32> to vector<16x32xf32>
    %15 = arith.subf %2, %14 : vector<16x32xf32>
    %cst_6 = arith.constant 9.99999974E-6 : f32
    %16 = vector.broadcast %cst_6 : f32 to vector<16x1xf32>
    %17 = arith.addf %13, %16 : vector<16x1xf32>
    %18 = math.rsqrt %17 : vector<16x1xf32>
    %19 = vector.broadcast %18 : vector<16x1xf32> to vector<16x32xf32>
    %20 = arith.mulf %15, %19 : vector<16x32xf32>
    %c0_7 = arith.constant 0 : index
    %c0_8 = arith.constant 0 : index
    %21 = vector.load %arg3[%c0_7, %c0_8] : memref<1x32xf32, #tpu.memory_space<vmem>>, vector<1x32xf32>
    %22 = vector.broadcast %21 : vector<1x32xf32> to vector<16x32xf32>
    %23 = arith.mulf %20, %22 : vector<16x32xf32>
    %c0_9 = arith.constant 0 : index
    %c0_10 = arith.constant 0 : index
    %24 = vector.load %arg4[%c0_9, %c0_10] : memref<1x32xf32, #tpu.memory_space<vmem>>, vector<1x32xf32>
    %25 = vector.broadcast %24 : vector<1x32xf32> to vector<16x32xf32>
    %26 = arith.addf %23, %25 : vector<16x32xf32>
    %c0_11 = arith.constant 0 : index
    %c0_12 = arith.constant 0 : index
    %27 = vector.load %arg5[%c0_11, %c0_12] : memref<16x32xf32, #tpu.memory_space<vmem>>, vector<16x32xf32>
    tpu.vector_store %arg5[%c0_11, %c0_12], %26 {strides = array<i32>} : memref<16x32xf32, #tpu.memory_space<vmem>>, vector<16x32xf32>,
    return
  }
  func.func @transform_0(%arg0: i32) -> (i32, i32) {
    %c0_i32 = arith.constant 0 : i32
    %c0_i32_0 = arith.constant 0 : i32
    return %arg0, %c0_i32 : i32, i32
  }
  func.func @transform_1(%arg0: i32) -> (i32, i32) {
    %c0_i32 = arith.constant 0 : i32
    %c0_i32_0 = arith.constant 0 : i32
    return %arg0, %c0_i32 : i32, i32
  }
  func.func @transform_2(%arg0: i32) -> (i32, i32) {
    %c0_i32 = arith.constant 0 : i32
    %c0_i32_0 = arith.constant 0 : i32
    %c0_i32_1 = arith.constant 0 : i32
    return %c0_i32, %c0_i32_0 : i32, i32
  }
  func.func @transform_3(%arg0: i32) -> (i32, i32) {
    %c0_i32 = arith.constant 0 : i32
    %c0_i32_0 = arith.constant 0 : i32
    %c0_i32_1 = arith.constant 0 : i32
    return %c0_i32, %c0_i32_0 : i32, i32
  }
  func.func @transform_4(%arg0: i32) -> (i32, i32) {
    %c0_i32 = arith.constant 0 : i32
    %c0_i32_0 = arith.constant 0 : i32
    return %arg0, %c0_i32 : i32, i32
  }
}

module attributes {stable_mosaic.version = 11 : i64} {
  func.func @kernel(%arg0: i32, %arg1: i32, %arg2: i32, %arg3: memref<16x32xf32, #tpu.memory_space<vmem>>, %arg4: memref<32x32xbf16, #tpu.memory_space<vmem>>, %arg5: memref<32x32xbf16, #tpu.memory_space<vmem>>, %arg6: memref<1x32xf32, #tpu.memory_space<vmem>>, %arg7: memref<1x32xf32, #tpu.memory_space<vmem>>, %arg8: memref<16x32xf32, #tpu.memory_space<vmem>>, %arg9: memref<16x32xf32, #tpu.memory_space<vmem>>, %arg10: memref<16x32xf32, #tpu.memory_space<vmem>>, %arg11: memref<16x32xf32, #tpu.memory_space<vmem>>) attributes {dimension_semantics = [#tpu.dimension_semantics<parallel>, #tpu.dimension_semantics<parallel>, #tpu.dimension_semantics<arbitrary>], iteration_bounds = array<i64: 1, 1, 1>, scalar_prefetch = 0 : i64, scratch_operands = 2 : i64, tpu.core_type = #tpu.core_type<tc>, window_params = [{transform_indices = @transform_0, window_bounds = array<i64: 16, 32>}, {transform_indices = @transform_1, window_bounds = array<i64: 32, 32>}, {transform_indices = @transform_2, window_bounds = array<i64: 32, 32>}, {transform_indices = @transform_3, window_bounds = array<i64: 1, 32>}, {transform_indices = @transform_4, window_bounds = array<i64: 1, 32>}, {transform_indices = @transform_5, window_bounds = array<i64: 16, 32>}, {transform_indices = @transform_6, window_bounds = array<i64: 16, 32>}]} {
    %c0_i32 = arith.constant 0 : i32
    %0 = arith.cmpi eq, %arg2, %c0_i32 : i32
    %1 = arith.extui %0 : i1 to i32
    %c0_i32_0 = arith.constant 0 : i32
    %2 = arith.cmpi ne, %1, %c0_i32_0 : i32
    scf.if %2 {
      %cst_17 = arith.constant 0.000000e+00 : f32
      %18 = vector.broadcast %cst_17 : f32 to vector<16x32xf32>
      %c0_18 = arith.constant 0 : index
      %c0_19 = arith.constant 0 : index
      %19 = vector.load %arg10[%c0_18, %c0_19] : memref<16x32xf32, #tpu.memory_space<vmem>>, vector<16x32xf32>
      tpu.vector_store %arg10[%c0_18, %c0_19], %18 {strides = array<i32>} : memref<16x32xf32, #tpu.memory_space<vmem>>, vector<16x32xf32>,
      %cst_20 = arith.constant 0.000000e+00 : f32
      %20 = vector.broadcast %cst_20 : f32 to vector<16x32xf32>
      %c0_21 = arith.constant 0 : index
      %c0_22 = arith.constant 0 : index
      %21 = vector.load %arg11[%c0_21, %c0_22] : memref<16x32xf32, #tpu.memory_space<vmem>>, vector<16x32xf32>
      tpu.vector_store %arg11[%c0_21, %c0_22], %20 {strides = array<i32>} : memref<16x32xf32, #tpu.memory_space<vmem>>, vector<16x32xf32>,
    } else {
    }
    %c0 = arith.constant 0 : index
    %c0_1 = arith.constant 0 : index
    %3 = vector.load %arg3[%c0, %c0_1] : memref<16x32xf32, #tpu.memory_space<vmem>>, vector<16x32xf32>
    %4 = arith.truncf %3 : vector<16x32xf32> to vector<16x32xbf16>
    %c0_2 = arith.constant 0 : index
    %c0_3 = arith.constant 0 : index
    %5 = vector.load %arg10[%c0_2, %c0_3] : memref<16x32xf32, #tpu.memory_space<vmem>>, vector<16x32xf32>
    %c0_4 = arith.constant 0 : index
    %c0_5 = arith.constant 0 : index
    %6 = vector.load %arg4[%c0_4, %c0_5] : memref<32x32xbf16, #tpu.memory_space<vmem>>, vector<32x32xbf16>
    %cst = arith.constant dense<0.000000e+00> : vector<16x32xf32>
    %7 = tpu.matmul %4, %6, %cst {dimension_numbers = #tpu.dot_dimension_numbers<[1], [0], [0], [1], [0, 0, 1, 1], [], []>} : vector<16x32xbf16>, vector<32x32xbf16>, vector<16x32xf32> -> vector<16x32xf32>
    %8 = arith.addf %5, %7 : vector<16x32xf32>
    %c0_6 = arith.constant 0 : index
    %c0_7 = arith.constant 0 : index
    %9 = vector.load %arg10[%c0_6, %c0_7] : memref<16x32xf32, #tpu.memory_space<vmem>>, vector<16x32xf32>
    tpu.vector_store %arg10[%c0_6, %c0_7], %8 {strides = array<i32>} : memref<16x32xf32, #tpu.memory_space<vmem>>, vector<16x32xf32>,
    %c0_8 = arith.constant 0 : index
    %c0_9 = arith.constant 0 : index
    %10 = vector.load %arg11[%c0_8, %c0_9] : memref<16x32xf32, #tpu.memory_space<vmem>>, vector<16x32xf32>
    %c0_10 = arith.constant 0 : index
    %c0_11 = arith.constant 0 : index
    %11 = vector.load %arg5[%c0_10, %c0_11] : memref<32x32xbf16, #tpu.memory_space<vmem>>, vector<32x32xbf16>
    %cst_12 = arith.constant dense<0.000000e+00> : vector<16x32xf32>
    %12 = tpu.matmul %4, %11, %cst_12 {dimension_numbers = #tpu.dot_dimension_numbers<[1], [0], [0], [1], [0, 0, 1, 1], [], []>} : vector<16x32xbf16>, vector<32x32xbf16>, vector<16x32xf32> -> vector<16x32xf32>
    %13 = arith.addf %10, %12 : vector<16x32xf32>
    %c0_13 = arith.constant 0 : index
    %c0_14 = arith.constant 0 : index
    %14 = vector.load %arg11[%c0_13, %c0_14] : memref<16x32xf32, #tpu.memory_space<vmem>>, vector<16x32xf32>
    tpu.vector_store %arg11[%c0_13, %c0_14], %13 {strides = array<i32>} : memref<16x32xf32, #tpu.memory_space<vmem>>, vector<16x32xf32>,
    %c0_i32_15 = arith.constant 0 : i32
    %15 = arith.cmpi eq, %arg2, %c0_i32_15 : i32
    %16 = arith.extui %15 : i1 to i32
    %c0_i32_16 = arith.constant 0 : i32
    %17 = arith.cmpi ne, %16, %c0_i32_16 : i32
    scf.if %17 {
      %c0_17 = arith.constant 0 : index
      %c0_18 = arith.constant 0 : index
      %18 = vector.load %arg10[%c0_17, %c0_18] : memref<16x32xf32, #tpu.memory_space<vmem>>, vector<16x32xf32>
      %c0_19 = arith.constant 0 : index
      %c0_20 = arith.constant 0 : index
      %19 = vector.load %arg6[%c0_19, %c0_20] : memref<1x32xf32, #tpu.memory_space<vmem>>, vector<1x32xf32>
      %20 = vector.broadcast %19 : vector<1x32xf32> to vector<16x32xf32>
      %21 = arith.addf %18, %20 : vector<16x32xf32>
      %c0_21 = arith.constant 0 : index
      %c0_22 = arith.constant 0 : index
      %22 = vector.load %arg8[%c0_21, %c0_22] : memref<16x32xf32, #tpu.memory_space<vmem>>, vector<16x32xf32>
      tpu.vector_store %arg8[%c0_21, %c0_22], %21 {strides = array<i32>} : memref<16x32xf32, #tpu.memory_space<vmem>>, vector<16x32xf32>,
      %c0_23 = arith.constant 0 : index
      %c0_24 = arith.constant 0 : index
      %23 = vector.load %arg11[%c0_23, %c0_24] : memref<16x32xf32, #tpu.memory_space<vmem>>, vector<16x32xf32>
      %c0_25 = arith.constant 0 : index
      %c0_26 = arith.constant 0 : index
      %24 = vector.load %arg7[%c0_25, %c0_26] : memref<1x32xf32, #tpu.memory_space<vmem>>, vector<1x32xf32>
      %25 = vector.broadcast %24 : vector<1x32xf32> to vector<16x32xf32>
      %26 = arith.addf %23, %25 : vector<16x32xf32>
      %c0_27 = arith.constant 0 : index
      %c0_28 = arith.constant 0 : index
      %27 = vector.load %arg9[%c0_27, %c0_28] : memref<16x32xf32, #tpu.memory_space<vmem>>, vector<16x32xf32>
      tpu.vector_store %arg9[%c0_27, %c0_28], %26 {strides = array<i32>} : memref<16x32xf32, #tpu.memory_space<vmem>>, vector<16x32xf32>,
    } else {
    }
    return
  }
  func.func @transform_0(%arg0: i32, %arg1: i32, %arg2: i32) -> (i32, i32) {
    %c0_i32 = arith.constant 0 : i32
    return %arg0, %arg2 : i32, i32
  }
  func.func @transform_1(%arg0: i32, %arg1: i32, %arg2: i32) -> (i32, i32) {
    %c0_i32 = arith.constant 0 : i32
    return %arg2, %arg1 : i32, i32
  }
  func.func @transform_2(%arg0: i32, %arg1: i32, %arg2: i32) -> (i32, i32) {
    %c0_i32 = arith.constant 0 : i32
    return %arg2, %arg1 : i32, i32
  }
  func.func @transform_3(%arg0: i32, %arg1: i32, %arg2: i32) -> (i32, i32) {
    %c0_i32 = arith.constant 0 : i32
    %c0_i32_0 = arith.constant 0 : i32
    return %c0_i32, %arg1 : i32, i32
  }
  func.func @transform_4(%arg0: i32, %arg1: i32, %arg2: i32) -> (i32, i32) {
    %c0_i32 = arith.constant 0 : i32
    %c0_i32_0 = arith.constant 0 : i32
    return %c0_i32, %arg1 : i32, i32
  }
  func.func @transform_5(%arg0: i32, %arg1: i32, %arg2: i32) -> (i32, i32) {
    %c0_i32 = arith.constant 0 : i32
    return %arg0, %arg1 : i32, i32
  }
  func.func @transform_6(%arg0: i32, %arg1: i32, %arg2: i32) -> (i32, i32) {
    %c0_i32 = arith.constant 0 : i32
    return %arg0, %arg1 : i32, i32
  }
}

module attributes {stable_mosaic.version = 11 : i64} {
  func.func @kernel(%arg0: i32, %arg1: i32, %arg2: i32, %arg3: memref<16x32xf32, #tpu.memory_space<vmem>>, %arg4: memref<32x64xbf16, #tpu.memory_space<vmem>>, %arg5: memref<1x64xf32, #tpu.memory_space<vmem>>, %arg6: memref<16x64xf32, #tpu.memory_space<vmem>>, %arg7: memref<16x64xf32, #tpu.memory_space<vmem>>) attributes {dimension_semantics = [#tpu.dimension_semantics<parallel>, #tpu.dimension_semantics<parallel>, #tpu.dimension_semantics<arbitrary>], iteration_bounds = array<i64: 1, 1, 1>, scalar_prefetch = 0 : i64, scratch_operands = 1 : i64, tpu.core_type = #tpu.core_type<tc>, window_params = [{transform_indices = @transform_0, window_bounds = array<i64: 16, 32>}, {transform_indices = @transform_1, window_bounds = array<i64: 32, 64>}, {transform_indices = @transform_2, window_bounds = array<i64: 1, 64>}, {transform_indices = @transform_3, window_bounds = array<i64: 16, 64>}]} {
    %c0_i32 = arith.constant 0 : i32
    %0 = arith.cmpi eq, %arg2, %c0_i32 : i32
    %1 = arith.extui %0 : i1 to i32
    %c0_i32_0 = arith.constant 0 : i32
    %2 = arith.cmpi ne, %1, %c0_i32_0 : i32
    scf.if %2 {
      %cst_10 = arith.constant 0.000000e+00 : f32
      %13 = vector.broadcast %cst_10 : f32 to vector<16x64xf32>
      %c0_11 = arith.constant 0 : index
      %c0_12 = arith.constant 0 : index
      %14 = vector.load %arg7[%c0_11, %c0_12] : memref<16x64xf32, #tpu.memory_space<vmem>>, vector<16x64xf32>
      tpu.vector_store %arg7[%c0_11, %c0_12], %13 {strides = array<i32>} : memref<16x64xf32, #tpu.memory_space<vmem>>, vector<16x64xf32>,
    } else {
    }
    %c0 = arith.constant 0 : index
    %c0_1 = arith.constant 0 : index
    %3 = vector.load %arg3[%c0, %c0_1] : memref<16x32xf32, #tpu.memory_space<vmem>>, vector<16x32xf32>
    %4 = arith.truncf %3 : vector<16x32xf32> to vector<16x32xbf16>
    %c0_2 = arith.constant 0 : index
    %c0_3 = arith.constant 0 : index
    %5 = vector.load %arg7[%c0_2, %c0_3] : memref<16x64xf32, #tpu.memory_space<vmem>>, vector<16x64xf32>
    %c0_4 = arith.constant 0 : index
    %c0_5 = arith.constant 0 : index
    %6 = vector.load %arg4[%c0_4, %c0_5] : memref<32x64xbf16, #tpu.memory_space<vmem>>, vector<32x64xbf16>
    %cst = arith.constant dense<0.000000e+00> : vector<16x64xf32>
    %7 = tpu.matmul %4, %6, %cst {dimension_numbers = #tpu.dot_dimension_numbers<[1], [0], [0], [1], [0, 0, 1, 1], [], []>} : vector<16x32xbf16>, vector<32x64xbf16>, vector<16x64xf32> -> vector<16x64xf32>
    %8 = arith.addf %5, %7 : vector<16x64xf32>
    %c0_6 = arith.constant 0 : index
    %c0_7 = arith.constant 0 : index
    %9 = vector.load %arg7[%c0_6, %c0_7] : memref<16x64xf32, #tpu.memory_space<vmem>>, vector<16x64xf32>
    tpu.vector_store %arg7[%c0_6, %c0_7], %8 {strides = array<i32>} : memref<16x64xf32, #tpu.memory_space<vmem>>, vector<16x64xf32>,
    %c0_i32_8 = arith.constant 0 : i32
    %10 = arith.cmpi eq, %arg2, %c0_i32_8 : i32
    %11 = arith.extui %10 : i1 to i32
    %c0_i32_9 = arith.constant 0 : i32
    %12 = arith.cmpi ne, %11, %c0_i32_9 : i32
    scf.if %12 {
      %c0_10 = arith.constant 0 : index
      %c0_11 = arith.constant 0 : index
      %13 = vector.load %arg7[%c0_10, %c0_11] : memref<16x64xf32, #tpu.memory_space<vmem>>, vector<16x64xf32>
      %c0_12 = arith.constant 0 : index
      %c0_13 = arith.constant 0 : index
      %14 = vector.load %arg5[%c0_12, %c0_13] : memref<1x64xf32, #tpu.memory_space<vmem>>, vector<1x64xf32>
      %15 = vector.broadcast %14 : vector<1x64xf32> to vector<16x64xf32>
      %16 = arith.addf %13, %15 : vector<16x64xf32>
      %c0_14 = arith.constant 0 : index
      %c0_15 = arith.constant 0 : index
      %17 = vector.load %arg6[%c0_14, %c0_15] : memref<16x64xf32, #tpu.memory_space<vmem>>, vector<16x64xf32>
      tpu.vector_store %arg6[%c0_14, %c0_15], %16 {strides = array<i32>} : memref<16x64xf32, #tpu.memory_space<vmem>>, vector<16x64xf32>,
    } else {
    }
    return
  }
  func.func @transform_0(%arg0: i32, %arg1: i32, %arg2: i32) -> (i32, i32) {
    %c0_i32 = arith.constant 0 : i32
    return %arg0, %arg2 : i32, i32
  }
  func.func @transform_1(%arg0: i32, %arg1: i32, %arg2: i32) -> (i32, i32) {
    %c0_i32 = arith.constant 0 : i32
    return %arg2, %arg1 : i32, i32
  }
  func.func @transform_2(%arg0: i32, %arg1: i32, %arg2: i32) -> (i32, i32) {
    %c0_i32 = arith.constant 0 : i32
    %c0_i32_0 = arith.constant 0 : i32
    return %c0_i32, %arg1 : i32, i32
  }
  func.func @transform_3(%arg0: i32, %arg1: i32, %arg2: i32) -> (i32, i32) {
    %c0_i32 = arith.constant 0 : i32
    return %arg0, %arg1 : i32, i32
  }
}

module attributes {stable_mosaic.version = 11 : i64} {
  func.func @_ffn_kernel(%arg0: i32, %arg1: i32, %arg2: memref<16x32xf32, #tpu.memory_space<vmem>>, %arg3: memref<32x64xbf16, #tpu.memory_space<vmem>>, %arg4: memref<1x64xf32, #tpu.memory_space<vmem>>, %arg5: memref<64x32xbf16, #tpu.memory_space<vmem>>, %arg6: memref<1x32xf32, #tpu.memory_space<vmem>>, %arg7: memref<16x32xf32, #tpu.memory_space<vmem>>, %arg8: memref<16x32xf32, #tpu.memory_space<vmem>>) attributes {dimension_semantics = [#tpu.dimension_semantics<parallel>, #tpu.dimension_semantics<arbitrary>], iteration_bounds = array<i64: 1, 1>, scalar_prefetch = 0 : i64, scratch_operands = 1 : i64, tpu.core_type = #tpu.core_type<tc>, window_params = [{transform_indices = @transform_0, window_bounds = array<i64: 16, 32>}, {transform_indices = @transform_1, window_bounds = array<i64: 32, 64>}, {transform_indices = @transform_2, window_bounds = array<i64: 1, 64>}, {transform_indices = @transform_3, window_bounds = array<i64: 64, 32>}, {pipeline_mode = #tpu.pipeline_mode<synchronous>, transform_indices = @transform_4, window_bounds = array<i64: 1, 32>}, {transform_indices = @transform_5, window_bounds = array<i64: 16, 32>}]} {
    %c0_i32 = arith.constant 0 : i32
    %0 = arith.cmpi eq, %arg1, %c0_i32 : i32
    %1 = arith.extui %0 : i1 to i32
    %c0_i32_0 = arith.constant 0 : i32
    %2 = arith.cmpi ne, %1, %c0_i32_0 : i32
    scf.if %2 {
      %cst_16 = arith.constant 0.000000e+00 : f32
      %21 = vector.broadcast %cst_16 : f32 to vector<16x32xf32>
      %c0_17 = arith.constant 0 : index
      %c0_18 = arith.constant 0 : index
      %22 = vector.load %arg8[%c0_17, %c0_18] : memref<16x32xf32, #tpu.memory_space<vmem>>, vector<16x32xf32>
      tpu.vector_store %arg8[%c0_17, %c0_18], %21 {strides = array<i32>} : memref<16x32xf32, #tpu.memory_space<vmem>>, vector<16x32xf32>,
    } else {
    }
    %c0 = arith.constant 0 : index
    %c0_1 = arith.constant 0 : index
    %3 = vector.load %arg2[%c0, %c0_1] : memref<16x32xf32, #tpu.memory_space<vmem>>, vector<16x32xf32>
    %4 = arith.truncf %3 : vector<16x32xf32> to vector<16x32xbf16>
    %c0_2 = arith.constant 0 : index
    %c0_3 = arith.constant 0 : index
    %5 = vector.load %arg3[%c0_2, %c0_3] : memref<32x64xbf16, #tpu.memory_space<vmem>>, vector<32x64xbf16>
    %cst = arith.constant dense<0.000000e+00> : vector<16x64xf32>
    %6 = tpu.matmul %4, %5, %cst {dimension_numbers = #tpu.dot_dimension_numbers<[1], [0], [0], [1], [0, 0, 1, 1], [], []>} : vector<16x32xbf16>, vector<32x64xbf16>, vector<16x64xf32> -> vector<16x64xf32>
    %c0_4 = arith.constant 0 : index
    %c0_5 = arith.constant 0 : index
    %7 = vector.load %arg4[%c0_4, %c0_5] : memref<1x64xf32, #tpu.memory_space<vmem>>, vector<1x64xf32>
    %8 = vector.broadcast %7 : vector<1x64xf32> to vector<16x64xf32>
    %9 = arith.addf %6, %8 : vector<16x64xf32>
    %cst_6 = arith.constant 0.000000e+00 : f32
    %10 = vector.broadcast %cst_6 : f32 to vector<16x64xf32>
    %11 = arith.maximumf %9, %10 : vector<16x64xf32>
    %c0_7 = arith.constant 0 : index
    %c0_8 = arith.constant 0 : index
    %12 = vector.load %arg8[%c0_7, %c0_8] : memref<16x32xf32, #tpu.memory_space<vmem>>, vector<16x32xf32>
    %13 = arith.truncf %11 : vector<16x64xf32> to vector<16x64xbf16>
    %c0_9 = arith.constant 0 : index
    %c0_10 = arith.constant 0 : index
    %14 = vector.load %arg5[%c0_9, %c0_10] : memref<64x32xbf16, #tpu.memory_space<vmem>>, vector<64x32xbf16>
    %cst_11 = arith.constant dense<0.000000e+00> : vector<16x32xf32>
    %15 = tpu.matmul %13, %14, %cst_11 {dimension_numbers = #tpu.dot_dimension_numbers<[1], [0], [0], [1], [0, 0, 1, 1], [], []>} : vector<16x64xbf16>, vector<64x32xbf16>, vector<16x32xf32> -> vector<16x32xf32>
    %16 = arith.addf %12, %15 : vector<16x32xf32>
    %c0_12 = arith.constant 0 : index
    %c0_13 = arith.constant 0 : index
    %17 = vector.load %arg8[%c0_12, %c0_13] : memref<16x32xf32, #tpu.memory_space<vmem>>, vector<16x32xf32>
    tpu.vector_store %arg8[%c0_12, %c0_13], %16 {strides = array<i32>} : memref<16x32xf32, #tpu.memory_space<vmem>>, vector<16x32xf32>,
    %c0_i32_14 = arith.constant 0 : i32
    %18 = arith.cmpi eq, %arg1, %c0_i32_14 : i32
    %19 = arith.extui %18 : i1 to i32
    %c0_i32_15 = arith.constant 0 : i32
    %20 = arith.cmpi ne, %19, %c0_i32_15 : i32
    scf.if %20 {
      %c0_16 = arith.constant 0 : index
      %c0_17 = arith.constant 0 : index
      %21 = vector.load %arg8[%c0_16, %c0_17] : memref<16x32xf32, #tpu.memory_space<vmem>>, vector<16x32xf32>
      %c0_18 = arith.constant 0 : index
      %c0_19 = arith.constant 0 : index
      %22 = vector.load %arg6[%c0_18, %c0_19] : memref<1x32xf32, #tpu.memory_space<vmem>>, vector<1x32xf32>
      %23 = vector.broadcast %22 : vector<1x32xf32> to vector<16x32xf32>
      %24 = arith.addf %21, %23 : vector<16x32xf32>
      %c0_20 = arith.constant 0 : index
      %c0_21 = arith.constant 0 : index
      %25 = vector.load %arg7[%c0_20, %c0_21] : memref<16x32xf32, #tpu.memory_space<vmem>>, vector<16x32xf32>
      tpu.vector_store %arg7[%c0_20, %c0_21], %24 {strides = array<i32>} : memref<16x32xf32, #tpu.memory_space<vmem>>, vector<16x32xf32>,
    } else {
    }
    return
  }
  func.func @transform_0(%arg0: i32, %arg1: i32) -> (i32, i32) {
    %c0_i32 = arith.constant 0 : i32
    %c0_i32_0 = arith.constant 0 : i32
    return %arg0, %c0_i32 : i32, i32
  }
  func.func @transform_1(%arg0: i32, %arg1: i32) -> (i32, i32) {
    %c0_i32 = arith.constant 0 : i32
    %c0_i32_0 = arith.constant 0 : i32
    return %c0_i32, %arg1 : i32, i32
  }
  func.func @transform_2(%arg0: i32, %arg1: i32) -> (i32, i32) {
    %c0_i32 = arith.constant 0 : i32
    %c0_i32_0 = arith.constant 0 : i32
    return %c0_i32, %arg1 : i32, i32
  }
  func.func @transform_3(%arg0: i32, %arg1: i32) -> (i32, i32) {
    %c0_i32 = arith.constant 0 : i32
    %c0_i32_0 = arith.constant 0 : i32
    return %arg1, %c0_i32 : i32, i32
  }
  func.func @transform_4(%arg0: i32, %arg1: i32) -> (i32, i32) {
    %c0_i32 = arith.constant 0 : i32
    %c0_i32_0 = arith.constant 0 : i32
    %c0_i32_1 = arith.constant 0 : i32
    return %c0_i32, %c0_i32_0 : i32, i32
  }
  func.func @transform_5(%arg0: i32, %arg1: i32) -> (i32, i32) {
    %c0_i32 = arith.constant 0 : i32
    %c0_i32_0 = arith.constant 0 : i32
    return %arg0, %c0_i32 : i32, i32
  }
}

module attributes {stable_mosaic.version = 11 : i64} {
  func.func @kernel(%arg0: i32, %arg1: i32, %arg2: memref<1x8x32xf32, #tpu.memory_space<vmem>>, %arg3: memref<1x8x32xf32, #tpu.memory_space<vmem>>, %arg4: memref<1x8x32xf32, #tpu.memory_space<vmem>>, %arg5: memref<1x1x8x8xf32, #tpu.memory_space<vmem>>, %arg6: memref<1x8x32xf32, #tpu.memory_space<vmem>>, %arg7: memref<1x4x8x8xf32, #tpu.memory_space<vmem>>) attributes {dimension_semantics = [#tpu.dimension_semantics<parallel>, #tpu.dimension_semantics<parallel>], iteration_bounds = array<i64: 2, 1>, scalar_prefetch = 0 : i64, scratch_operands = 0 : i64, tpu.core_type = #tpu.core_type<tc>, window_params = [{transform_indices = @transform_0, window_bounds = array<i64: 1, 8, 32>}, {transform_indices = @transform_1, window_bounds = array<i64: 1, 8, 32>}, {transform_indices = @transform_2, window_bounds = array<i64: 1, 8, 32>}, {transform_indices = @transform_3, window_bounds = array<i64: 1, 1, 8, 8>}, {transform_indices = @transform_4, window_bounds = array<i64: 1, 8, 32>}, {transform_indices = @transform_5, window_bounds = array<i64: 1, 4, 8, 8>}]} {
    %c0 = arith.constant 0 : index
    %c0_0 = arith.constant 0 : index
    %c0_1 = arith.constant 0 : index
    %c0_2 = arith.constant 0 : index
    %0 = vector.load %arg5[%c0, %c0_0, %c0_1, %c0_2] : memref<1x1x8x8xf32, #tpu.memory_space<vmem>>, vector<1x1x8x8xf32>
    %1 = vector.shape_cast %0 : vector<1x1x8x8xf32> to vector<8x8xf32>
    %c0_3 = arith.constant 0 : index
    %c0_4 = arith.constant 0 : index
    %c0_5 = arith.constant 0 : index
    %2 = vector.load %arg2[%c0_3, %c0_4, %c0_5] : memref<1x8x32xf32, #tpu.memory_space<vmem>>, vector<1x8x32xf32>
    %3 = vector.shape_cast %2 : vector<1x8x32xf32> to vector<8x32xf32>
    %4 = arith.truncf %3 : vector<8x32xf32> to vector<8x32xbf16>
    %c0_6 = arith.constant 0 : index
    %c0_7 = arith.constant 0 : index
    %c0_8 = arith.constant 0 : index
    %5 = vector.load %arg3[%c0_6, %c0_7, %c0_8] : memref<1x8x32xf32, #tpu.memory_space<vmem>>, vector<1x8x32xf32>
    %6 = vector.shape_cast %5 : vector<1x8x32xf32> to vector<8x32xf32>
    %7 = arith.truncf %6 : vector<8x32xf32> to vector<8x32xbf16>
    %c0_9 = arith.constant 0 : index
    %c0_10 = arith.constant 0 : index
    %c0_11 = arith.constant 0 : index
    %8 = vector.load %arg4[%c0_9, %c0_10, %c0_11] : memref<1x8x32xf32, #tpu.memory_space<vmem>>, vector<1x8x32xf32>
    %9 = vector.shape_cast %8 : vector<1x8x32xf32> to vector<8x32xf32>
    %10 = arith.truncf %9 : vector<8x32xf32> to vector<8x32xbf16>
    %11 = vector.extract_strided_slice %4 {offsets = [0, 0], sizes = [8, 8], strides = [1, 1]} : vector<8x32xbf16> to vector<8x8xbf16>
    %12 = vector.extract_strided_slice %7 {offsets = [0, 0], sizes = [8, 8], strides = [1, 1]} : vector<8x32xbf16> to vector<8x8xbf16>
    "tpu.trace_start"() <{level = 10 : i32, message = "qd,kd->qk"}> : () -> ()
    %cst = arith.constant dense<0.000000e+00> : vector<8x8xf32>
    %13 = tpu.matmul %11, %12, %cst {dimension_numbers = #tpu.dot_dimension_numbers<[1], [1], [0], [0], [0, 0, 1, 0], [], []>} : vector<8x8xbf16>, vector<8x8xbf16>, vector<8x8xf32> -> vector<8x8xf32>
    "tpu.trace_stop"() : () -> ()
    %14 = arith.addf %13, %1 : vector<8x8xf32>
    %cst_12 = arith.constant dense<0xFF800000> : vector<8xf32>
    %15 = vector.multi_reduction <maximumf>, %14, %cst_12 [1] : vector<8x8xf32> to vector<8xf32>
    %16 = vector.shape_cast %15 : vector<8xf32> to vector<8x1xf32>
    %17 = vector.broadcast %16 : vector<8x1xf32> to vector<8x8xf32>
    %18 = arith.subf %14, %17 : vector<8x8xf32>
    %19 = math.exp %18 : vector<8x8xf32>
    %cst_13 = arith.constant dense<0.000000e+00> : vector<8xf32>
    %20 = vector.multi_reduction <add>, %19, %cst_13 [1] : vector<8x8xf32> to vector<8xf32>
    %21 = vector.shape_cast %20 : vector<8xf32> to vector<8x1xf32>
    %22 = tpu.reciprocal %21 {approx = true} : vector<8x1xf32> -> vector<8x1xf32>
    %23 = vector.broadcast %22 : vector<8x1xf32> to vector<8x8xf32>
    %24 = arith.mulf %19, %23 : vector<8x8xf32>
    %c0_14 = arith.constant 0 : index
    %c0_15 = arith.constant 0 : index
    %c0_16 = arith.constant 0 : index
    %c0_17 = arith.constant 0 : index
    %25 = vector.load %arg7[%c0_14, %c0_15, %c0_16, %c0_17] : memref<1x4x8x8xf32, #tpu.memory_space<vmem>>, vector<1x1x8x8xf32>
    %26 = vector.shape_cast %25 : vector<1x1x8x8xf32> to vector<8x8xf32>
    %27 = vector.shape_cast %24 : vector<8x8xf32> to vector<1x1x8x8xf32>
    tpu.vector_store %arg7[%c0_14, %c0_15, %c0_16, %c0_17], %27 {strides = array<i32>} : memref<1x4x8x8xf32, #tpu.memory_space<vmem>>, vector<1x1x8x8xf32>,
    %28 = arith.truncf %24 : vector<8x8xf32> to vector<8x8xbf16>
    %29 = vector.extract_strided_slice %10 {offsets = [0, 0], sizes = [8, 8], strides = [1, 1]} : vector<8x32xbf16> to vector<8x8xbf16>
    "tpu.trace_start"() <{level = 10 : i32, message = "qk,kd->qd"}> : () -> ()
    %cst_18 = arith.constant dense<0.000000e+00> : vector<8x8xf32>
    %30 = tpu.matmul %28, %29, %cst_18 {dimension_numbers = #tpu.dot_dimension_numbers<[1], [0], [0], [1], [0, 0, 1, 1], [], []>} : vector<8x8xbf16>, vector<8x8xbf16>, vector<8x8xf32> -> vector<8x8xf32>
    "tpu.trace_stop"() : () -> ()
    %31 = vector.extract_strided_slice %4 {offsets = [0, 8], sizes = [8, 8], strides = [1, 1]} : vector<8x32xbf16> to vector<8x8xbf16>
    %32 = vector.extract_strided_slice %7 {offsets = [0, 8], sizes = [8, 8], strides = [1, 1]} : vector<8x32xbf16> to vector<8x8xbf16>
    "tpu.trace_start"() <{level = 10 : i32, message = "qd,kd->qk"}> : () -> ()
    %cst_19 = arith.constant dense<0.000000e+00> : vector<8x8xf32>
    %33 = tpu.matmul %31, %32, %cst_19 {dimension_numbers = #tpu.dot_dimension_numbers<[1], [1], [0], [0], [0, 0, 1, 0], [], []>} : vector<8x8xbf16>, vector<8x8xbf16>, vector<8x8xf32> -> vector<8x8xf32>
    "tpu.trace_stop"() : () -> ()
    %34 = arith.addf %33, %1 : vector<8x8xf32>
    %cst_20 = arith.constant dense<0xFF800000> : vector<8xf32>
    %35 = vector.multi_reduction <maximumf>, %34, %cst_20 [1] : vector<8x8xf32> to vector<8xf32>
    %36 = vector.shape_cast %35 : vector<8xf32> to vector<8x1xf32>
    %37 = vector.broadcast %36 : vector<8x1xf32> to vector<8x8xf32>
    %38 = arith.subf %34, %37 : vector<8x8xf32>
    %39 = math.exp %38 : vector<8x8xf32>
    %cst_21 = arith.constant dense<0.000000e+00> : vector<8xf32>
    %40 = vector.multi_reduction <add>, %39, %cst_21 [1] : vector<8x8xf32> to vector<8xf32>
    %41 = vector.shape_cast %40 : vector<8xf32> to vector<8x1xf32>
    %42 = tpu.reciprocal %41 {approx = true} : vector<8x1xf32> -> vector<8x1xf32>
    %43 = vector.broadcast %42 : vector<8x1xf32> to vector<8x8xf32>
    %44 = arith.mulf %39, %43 : vector<8x8xf32>
    %c0_22 = arith.constant 0 : index
    %c1 = arith.constant 1 : index
    %c0_23 = arith.constant 0 : index
    %c0_24 = arith.constant 0 : index
    %45 = vector.load %arg7[%c0_22, %c1, %c0_23, %c0_24] : memref<1x4x8x8xf32, #tpu.memory_space<vmem>>, vector<1x1x8x8xf32>
    %46 = vector.shape_cast %45 : vector<1x1x8x8xf32> to vector<8x8xf32>
    %47 = vector.shape_cast %44 : vector<8x8xf32> to vector<1x1x8x8xf32>
    tpu.vector_store %arg7[%c0_22, %c1, %c0_23, %c0_24], %47 {strides = array<i32>} : memref<1x4x8x8xf32, #tpu.memory_space<vmem>>, vector<1x1x8x8xf32>,
    %48 = arith.truncf %44 : vector<8x8xf32> to vector<8x8xbf16>
    %49 = vector.extract_strided_slice %10 {offsets = [0, 8], sizes = [8, 8], strides = [1, 1]} : vector<8x32xbf16> to vector<8x8xbf16>
    "tpu.trace_start"() <{level = 10 : i32, message = "qk,kd->qd"}> : () -> ()
    %cst_25 = arith.constant dense<0.000000e+00> : vector<8x8xf32>
    %50 = tpu.matmul %48, %49, %cst_25 {dimension_numbers = #tpu.dot_dimension_numbers<[1], [0], [0], [1], [0, 0, 1, 1], [], []>} : vector<8x8xbf16>, vector<8x8xbf16>, vector<8x8xf32> -> vector<8x8xf32>
    "tpu.trace_stop"() : () -> ()
    %51 = vector.extract_strided_slice %4 {offsets = [0, 16], sizes = [8, 8], strides = [1, 1]} : vector<8x32xbf16> to vector<8x8xbf16>
    %52 = vector.extract_strided_slice %7 {offsets = [0, 16], sizes = [8, 8], strides = [1, 1]} : vector<8x32xbf16> to vector<8x8xbf16>
    "tpu.trace_start"() <{level = 10 : i32, message = "qd,kd->qk"}> : () -> ()
    %cst_26 = arith.constant dense<0.000000e+00> : vector<8x8xf32>
    %53 = tpu.matmul %51, %52, %cst_26 {dimension_numbers = #tpu.dot_dimension_numbers<[1], [1], [0], [0], [0, 0, 1, 0], [], []>} : vector<8x8xbf16>, vector<8x8xbf16>, vector<8x8xf32> -> vector<8x8xf32>
    "tpu.trace_stop"() : () -> ()
    %54 = arith.addf %53, %1 : vector<8x8xf32>
    %cst_27 = arith.constant dense<0xFF800000> : vector<8xf32>
    %55 = vector.multi_reduction <maximumf>, %54, %cst_27 [1] : vector<8x8xf32> to vector<8xf32>
    %56 = vector.shape_cast %55 : vector<8xf32> to vector<8x1xf32>
    %57 = vector.broadcast %56 : vector<8x1xf32> to vector<8x8xf32>
    %58 = arith.subf %54, %57 : vector<8x8xf32>
    %59 = math.exp %58 : vector<8x8xf32>
    %cst_28 = arith.constant dense<0.000000e+00> : vector<8xf32>
    %60 = vector.multi_reduction <add>, %59, %cst_28 [1] : vector<8x8xf32> to vector<8xf32>
    %61 = vector.shape_cast %60 : vector<8xf32> to vector<8x1xf32>
    %62 = tpu.reciprocal %61 {approx = true} : vector<8x1xf32> -> vector<8x1xf32>
    %63 = vector.broadcast %62 : vector<8x1xf32> to vector<8x8xf32>
    %64 = arith.mulf %59, %63 : vector<8x8xf32>
    %c0_29 = arith.constant 0 : index
    %c2 = arith.constant 2 : index
    %c0_30 = arith.constant 0 : index
    %c0_31 = arith.constant 0 : index
    %65 = vector.load %arg7[%c0_29, %c2, %c0_30, %c0_31] : memref<1x4x8x8xf32, #tpu.memory_space<vmem>>, vector<1x1x8x8xf32>
    %66 = vector.shape_cast %65 : vector<1x1x8x8xf32> to vector<8x8xf32>
    %67 = vector.shape_cast %64 : vector<8x8xf32> to vector<1x1x8x8xf32>
    tpu.vector_store %arg7[%c0_29, %c2, %c0_30, %c0_31], %67 {strides = array<i32>} : memref<1x4x8x8xf32, #tpu.memory_space<vmem>>, vector<1x1x8x8xf32>,
    %68 = arith.truncf %64 : vector<8x8xf32> to vector<8x8xbf16>
    %69 = vector.extract_strided_slice %10 {offsets = [0, 16], sizes = [8, 8], strides = [1, 1]} : vector<8x32xbf16> to vector<8x8xbf16>
    "tpu.trace_start"() <{level = 10 : i32, message = "qk,kd->qd"}> : () -> ()
    %cst_32 = arith.constant dense<0.000000e+00> : vector<8x8xf32>
    %70 = tpu.matmul %68, %69, %cst_32 {dimension_numbers = #tpu.dot_dimension_numbers<[1], [0], [0], [1], [0, 0, 1, 1], [], []>} : vector<8x8xbf16>, vector<8x8xbf16>, vector<8x8xf32> -> vector<8x8xf32>
    "tpu.trace_stop"() : () -> ()
    %71 = vector.extract_strided_slice %4 {offsets = [0, 24], sizes = [8, 8], strides = [1, 1]} : vector<8x32xbf16> to vector<8x8xbf16>
    %72 = vector.extract_strided_slice %7 {offsets = [0, 24], sizes = [8, 8], strides = [1, 1]} : vector<8x32xbf16> to vector<8x8xbf16>
    "tpu.trace_start"() <{level = 10 : i32, message = "qd,kd->qk"}> : () -> ()
    %cst_33 = arith.constant dense<0.000000e+00> : vector<8x8xf32>
    %73 = tpu.matmul %71, %72, %cst_33 {dimension_numbers = #tpu.dot_dimension_numbers<[1], [1], [0], [0], [0, 0, 1, 0], [], []>} : vector<8x8xbf16>, vector<8x8xbf16>, vector<8x8xf32> -> vector<8x8xf32>
    "tpu.trace_stop"() : () -> ()
    %74 = arith.addf %73, %1 : vector<8x8xf32>
    %cst_34 = arith.constant dense<0xFF800000> : vector<8xf32>
    %75 = vector.multi_reduction <maximumf>, %74, %cst_34 [1] : vector<8x8xf32> to vector<8xf32>
    %76 = vector.shape_cast %75 : vector<8xf32> to vector<8x1xf32>
    %77 = vector.broadcast %76 : vector<8x1xf32> to vector<8x8xf32>
    %78 = arith.subf %74, %77 : vector<8x8xf32>
    %79 = math.exp %78 : vector<8x8xf32>
    %cst_35 = arith.constant dense<0.000000e+00> : vector<8xf32>
    %80 = vector.multi_reduction <add>, %79, %cst_35 [1] : vector<8x8xf32> to vector<8xf32>
    %81 = vector.shape_cast %80 : vector<8xf32> to vector<8x1xf32>
    %82 = tpu.reciprocal %81 {approx = true} : vector<8x1xf32> -> vector<8x1xf32>
    %83 = vector.broadcast %82 : vector<8x1xf32> to vector<8x8xf32>
    %84 = arith.mulf %79, %83 : vector<8x8xf32>
    %c0_36 = arith.constant 0 : index
    %c3 = arith.constant 3 : index
    %c0_37 = arith.constant 0 : index
    %c0_38 = arith.constant 0 : index
    %85 = vector.load %arg7[%c0_36, %c3, %c0_37, %c0_38] : memref<1x4x8x8xf32, #tpu.memory_space<vmem>>, vector<1x1x8x8xf32>
    %86 = vector.shape_cast %85 : vector<1x1x8x8xf32> to vector<8x8xf32>
    %87 = vector.shape_cast %84 : vector<8x8xf32> to vector<1x1x8x8xf32>
    tpu.vector_store %arg7[%c0_36, %c3, %c0_37, %c0_38], %87 {strides = array<i32>} : memref<1x4x8x8xf32, #tpu.memory_space<vmem>>, vector<1x1x8x8xf32>,
    %88 = arith.truncf %84 : vector<8x8xf32> to vector<8x8xbf16>
    %89 = vector.extract_strided_slice %10 {offsets = [0, 24], sizes = [8, 8], strides = [1, 1]} : vector<8x32xbf16> to vector<8x8xbf16>
    "tpu.trace_start"() <{level = 10 : i32, message = "qk,kd->qd"}> : () -> ()
    %cst_39 = arith.constant dense<0.000000e+00> : vector<8x8xf32>
    %90 = tpu.matmul %88, %89, %cst_39 {dimension_numbers = #tpu.dot_dimension_numbers<[1], [0], [0], [1], [0, 0, 1, 1], [], []>} : vector<8x8xbf16>, vector<8x8xbf16>, vector<8x8xf32> -> vector<8x8xf32>
    "tpu.trace_stop"() : () -> ()
    %91 = tpu.concatenate %30, %50, %70, %90 in 1 : vector<8x8xf32>, vector<8x8xf32>, vector<8x8xf32>, vector<8x8xf32> -> vector<8x32xf32>
    %c0_40 = arith.constant 0 : index
    %c0_41 = arith.constant 0 : index
    %c0_42 = arith.constant 0 : index
    %92 = vector.load %arg6[%c0_40, %c0_41, %c0_42] : memref<1x8x32xf32, #tpu.memory_space<vmem>>, vector<1x8x32xf32>
    %93 = vector.shape_cast %92 : vector<1x8x32xf32> to vector<8x32xf32>
    %94 = vector.shape_cast %91 : vector<8x32xf32> to vector<1x8x32xf32>
    tpu.vector_store %arg6[%c0_40, %c0_41, %c0_42], %94 {strides = array<i32>} : memref<1x8x32xf32, #tpu.memory_space<vmem>>, vector<1x8x32xf32>,
    return
  }
  func.func @transform_0(%arg0: i32, %arg1: i32) -> (i32, i32, i32) {
    %c0_i32 = arith.constant 0 : i32
    %c0_i32_0 = arith.constant 0 : i32
    return %arg0, %c0_i32, %arg1 : i32, i32, i32
  }
  func.func @transform_1(%arg0: i32, %arg1: i32) -> (i32, i32, i32) {
    %c0_i32 = arith.constant 0 : i32
    %c0_i32_0 = arith.constant 0 : i32
    return %arg0, %c0_i32, %arg1 : i32, i32, i32
  }
  func.func @transform_2(%arg0: i32, %arg1: i32) -> (i32, i32, i32) {
    %c0_i32 = arith.constant 0 : i32
    %c0_i32_0 = arith.constant 0 : i32
    return %arg0, %c0_i32, %arg1 : i32, i32, i32
  }
  func.func @transform_3(%arg0: i32, %arg1: i32) -> (i32, i32, i32, i32) {
    %c0_i32 = arith.constant 0 : i32
    %c0_i32_0 = arith.constant 0 : i32
    %c0_i32_1 = arith.constant 0 : i32
    %c0_i32_2 = arith.constant 0 : i32
    return %arg0, %c0_i32, %c0_i32_0, %c0_i32_1 : i32, i32, i32, i32
  }
  func.func @transform_4(%arg0: i32, %arg1: i32) -> (i32, i32, i32) {
    %c0_i32 = arith.constant 0 : i32
    %c0_i32_0 = arith.constant 0 : i32
    return %arg0, %c0_i32, %arg1 : i32, i32, i32
  }
  func.func @transform_5(%arg0: i32, %arg1: i32) -> (i32, i32, i32, i32) {
    %c0_i32 = arith.constant 0 : i32
    %c0_i32_0 = arith.constant 0 : i32
    %c0_i32_1 = arith.constant 0 : i32
    return %arg0, %arg1, %c0_i32, %c0_i32_0 : i32, i32, i32, i32
  }
}

</mosaic_0001>

<llo_original>
// kernel: transformer_forward.37
$region0: #{transformer_forward.37}
  #allocation0 [shape = 'u32[]', space=smem, size = 0x4, offset = 0x4, fixed_abs, tag = 'smem constant byte address 0x4 - core index']
  #allocation1 [shape = 'u32[144,128]{1,0:T(1,128)}', space=vmem, size = 0x12000, scoped, tag = 'internal scratch']
  #allocation2 [shape = 'f32[16,32]{1,0:T(8,128)}', space=vmem, size = 0x2000, scoped, tag = 'scratch operand']
  %s0 = inlined_call_operand.vmem [shape: f32[16,32], index: 0, kind: input, shape index: {}]
  %s1 = inlined_call_operand.vmem [shape: bf16[32,32], index: 1, kind: input, shape index: {}]
  %s2 = inlined_call_operand.vmem [shape: f32[1,32], index: 2, kind: input, shape index: {}]
  %s3 = inlined_call_operand.vmem [shape: f32[16,32], index: 3, kind: output, shape index: {}]
  %s4 = sld [smem:[#allocation0]]
  $region30: #{transformer_forward.37} parent=0
    _
  %s6 = ssub.s32 1, %s4
  %s7 = scalar_select 0, %s6, %s4
  // Predicated region
  $region2: #{transformer_forward.37} parent=0 // pred_check
    _
  $region3: #{transformer_forward.37} parent=0 // pred_check_branch
    %9 = sbr.rel (0) target = $region5
  $region4: #{transformer_forward.37} parent=0 // pred_region
    _
  $region5: #{transformer_forward.37} parent=0 // pred_fallthru
    _
  // Predicated region
  $region6: #{transformer_forward.37} parent=0 // pred_check
    _
  $region7: #{transformer_forward.37} parent=0 // pred_check_branch
    %11 = sbr.rel (0) target = $region9
  $region8: #{transformer_forward.37} parent=0 // pred_region
    _
  $region9: #{transformer_forward.37} parent=0 // pred_fallthru
    _
  // Predicated region
  $region10: #{transformer_forward.37} parent=0 // pred_check
    _
  $region11: #{transformer_forward.37} parent=0 // pred_check_branch
    %13 = sbr.rel (0) target = $region13
  $region12: #{transformer_forward.37} parent=0 // pred_region
    _
  $region13: #{transformer_forward.37} parent=0 // pred_fallthru
    _
  %p15 = scmp.eq.s32.totalorder 0, 0
  // Predicated region
  $region14: #{transformer_forward.37} parent=0 // pred_check
    %p16 = pneg %p15
  $region15: #{transformer_forward.37} parent=0 // pred_check_branch
    %18 = sbr.rel (%p16) target = $region17
  $region16: #{transformer_forward.37} parent=0 // pred_region
    %vm19 = vcmask 261120
    %20 = vst.msk [vmem:[#allocation2] sm:$0xff] %vm19, 0.0
    %21 = vst.msk [vmem:[#allocation2 + $0x8] sm:$0xff] %vm19, 0.0
  $region17: #{transformer_forward.37} parent=0 // pred_fallthru
    _
  %v22 = vld [vmem:[%s0] sm:$0xff]
  %v23 = vld [vmem:[%s0 + $0x8] sm:$0xff]
  %v24 = vpack.c.bf16 %v23, %v22
  %v25 = vld [vmem:[#allocation2] sm:$0xff]
  %v26 = vld [vmem:[#allocation2 + $0x8] sm:$0xff]
  %v27 = vld [vmem:[%s1] sm:$0xf]
  %v28 = vld [vmem:[%s1 + $0x4] sm:$0xf]
  %v29 = vld [vmem:[%s1 + $0x8] sm:$0xf]
  %v30 = vld [vmem:[%s1 + $0xc] sm:$0xf]
  %v35 = vunpack.c.l.b16 %v27
  %v36 = vunpack.c.l.b16 %v28
  %v37 = vunpack.c.l.b16 %v29
  %v38 = vunpack.c.l.b16 %v30
  %v39 = vpack.c.b16 %v36, %v35
  %v40 = vpack.c.b16 %v38, %v37
  %vm43 = vcmask 261120
  %v45 = vsel %vm43, %v24, 0
  %47 = vmatprep.subr.bf16.mxu0 0
  %48 = vmatpush1.bf16.msra.mxu0 %v39
  %49 = vmatprep.subr.bf16.mxu0 0
  %50 = vmatpush1.bf16.msra.mxu0 %v40
  %51 = vmatprep.subr.bf16.mxu0 0
  %52 = vmatpush1.bf16.msra.mxu0 0
  %53 = vmatprep.subr.bf16.mxu0 0
  %54 = vmatpush1.bf16.msra.mxu0 0
  %55 = vmatprep.subr.bf16.mxu0 0
  %56 = vmatpush1.bf16.msra.mxu0 0
  %57 = vmatprep.subr.bf16.mxu0 0
  %58 = vmatpush1.bf16.msra.mxu0 0
  %59 = vmatprep.subr.bf16.mxu0 0
  %60 = vmatpush1.bf16.msra.mxu0 0
  %61 = vmatprep.subr.bf16.mxu0 0
  %62 = vmatpush1.bf16.msra.mxu0 0
  %63 = vmatprep.subr.bf16.mxu0 0
  %64 = vmatpush1.bf16.msra.mxu0 0
  %65 = vmatprep.subr.bf16.mxu0 0
  %66 = vmatpush1.bf16.msra.mxu0 0
  %67 = vmatprep.subr.bf16.mxu0 0
  %68 = vmatpush1.bf16.msra.mxu0 0
  %69 = vmatprep.subr.bf16.mxu0 0
  %70 = vmatpush1.bf16.msra.mxu0 0
  %71 = vmatprep.subr.bf16.mxu0 0
  %72 = vmatpush1.bf16.msra.mxu0 0
  %73 = vmatprep.subr.bf16.mxu0 0
  %74 = vmatpush1.bf16.msra.mxu0 0
  %75 = vmatprep.subr.bf16.mxu0 0
  %76 = vmatpush1.bf16.msra.mxu0 0
  %77 = vmatprep.subr.bf16.mxu0 0
  %78 = vmatpush1.bf16.msra.mxu0 0
  %79 = vmatprep.mubr.bf16.mxu0 0
  %80 = vmatmul.mubr.bf16.gmra.mrb[0].mxu0 %v45
  %v81 = vpop.f32.mrb[0].mxu0
  %v82 = vadd.f32 0.0, %v81
  %v83 = vpop.f32.mrb[0].mxu0
  %v84 = vpop.f32.mrb[0].mxu0
  %v85 = vadd.f32 0.0, %v84
  %v86 = vpop.f32.mrb[0].mxu0
  %87 = vdwg.mxu0
  %v88 = vadd.f32 %v25, %v82
  %v89 = vadd.f32 %v26, %v85
  %90 = vst.msk [vmem:[#allocation2] sm:$0xff] %vm43, %v88
  %91 = vst.msk [vmem:[#allocation2 + $0x8] sm:$0xff] %vm43, %v89
  // Predicated region
  $region18: #{transformer_forward.37} parent=0 // pred_check
    %p92 = pneg %p15
  $region19: #{transformer_forward.37} parent=0 // pred_check_branch
    %94 = sbr.rel (%p92) target = $region21
  $region20: #{transformer_forward.37} parent=0 // pred_region
    %v95 = vld [vmem:[#allocation2] sm:$0xff]
    %v96 = vld [vmem:[#allocation2 + $0x8] sm:$0xff]
    %v97 = vld [vmem:[%s2] sm:$0x1]
    %v99 = vlaneseq
    %v100 = vshrl.u32 %v99, 7
    %v101 = vsub.s32 0, %v100
    %v102 = vrot.slane %v97, %v101
    %v104 = vadd.f32 %v95, %v102
    %v105 = vadd.f32 %v96, %v102
    %106 = vst.msk [vmem:[%s3] sm:$0xff] %vm43, %v104
    %107 = vst.msk [vmem:[%s3 + $0x8] sm:$0xff] %vm43, %v105
  $region21: #{transformer_forward.37} parent=0 // pred_fallthru
    _
  // Predicated region
  $region22: #{transformer_forward.37} parent=0 // pred_check
    _
  $region23: #{transformer_forward.37} parent=0 // pred_check_branch
    %109 = sbr.rel (0) target = $region25
  $region24: #{transformer_forward.37} parent=0 // pred_region
    _
  $region25: #{transformer_forward.37} parent=0 // pred_fallthru
    _
  // Predicated region
  $region26: #{transformer_forward.37} parent=0 // pred_check
    _
  $region27: #{transformer_forward.37} parent=0 // pred_check_branch
    %111 = sbr.rel (0) target = $region29
  $region28: #{transformer_forward.37} parent=0 // pred_region
    _
  $region29: #{transformer_forward.37} parent=0 // pred_fallthru
    _

// kernel: transformer_forward.35
$region0: #{transformer_forward.35}
  #allocation0 [shape = 'u32[]', space=smem, size = 0x4, offset = 0x4, fixed_abs, tag = 'smem constant byte address 0x4 - core index']
  #allocation1 [shape = 'u32[144,128]{1,0:T(1,128)}', space=vmem, size = 0x12000, scoped, tag = 'internal scratch']
  #allocation2 [shape = 'f32[16,32]{1,0:T(8,128)}', space=vmem, size = 0x2000, scoped, tag = 'scratch operand']
  #allocation3 [shape = 'f32[16,32]{1,0:T(8,128)}', space=vmem, size = 0x2000, scoped, tag = 'scratch operand']
  #allocation4 [shape = 'f32[16,32]{1,0:T(8,128)}', space=vmem, size = 0x2000, scoped, tag = 'scratch operand']
  %s0 = inlined_call_operand.vmem [shape: f32[16,32], index: 0, kind: input, shape index: {}]
  %s1 = inlined_call_operand.vmem [shape: bf16[32,32], index: 1, kind: input, shape index: {}]
  %s2 = inlined_call_operand.vmem [shape: bf16[32,32], index: 2, kind: input, shape index: {}]
  %s3 = inlined_call_operand.vmem [shape: bf16[32,32], index: 3, kind: input, shape index: {}]
  %s4 = inlined_call_operand.vmem [shape: f32[1,32], index: 4, kind: input, shape index: {}]
  %s5 = inlined_call_operand.vmem [shape: f32[1,32], index: 5, kind: input, shape index: {}]
  %s6 = inlined_call_operand.vmem [shape: f32[1,32], index: 6, kind: input, shape index: {}]
  %s7 = inlined_call_operand.vmem [shape: f32[16,32], index: 7, kind: output, shape index: {0}]
  %s8 = inlined_call_operand.vmem [shape: f32[16,32], index: 8, kind: output, shape index: {1}]
  %s9 = inlined_call_operand.vmem [shape: f32[16,32], index: 9, kind: output, shape index: {2}]
  %10 = xla_tuple %s7, %s8, %s9
  %s11 = sld [smem:[#allocation0]]
  $region62: #{transformer_forward.35} parent=0
    _
  %s13 = ssub.s32 1, %s11
  %s14 = scalar_select 0, %s13, %s11
  // Predicated region
  $region2: #{transformer_forward.35} parent=0 // pred_check
    _
  $region3: #{transformer_forward.35} parent=0 // pred_check_branch
    %16 = sbr.rel (0) target = $region5
  $region4: #{transformer_forward.35} parent=0 // pred_region
    _
  $region5: #{transformer_forward.35} parent=0 // pred_fallthru
    _
  // Predicated region
  $region6: #{transformer_forward.35} parent=0 // pred_check
    _
  $region7: #{transformer_forward.35} parent=0 // pred_check_branch
    %18 = sbr.rel (0) target = $region9
  $region8: #{transformer_forward.35} parent=0 // pred_region
    _
  $region9: #{transformer_forward.35} parent=0 // pred_fallthru
    _
  // Predicated region
  $region10: #{transformer_forward.35} parent=0 // pred_check
    _
  $region11: #{transformer_forward.35} parent=0 // pred_check_branch
    %20 = sbr.rel (0) target = $region13
  $region12: #{transformer_forward.35} parent=0 // pred_region
    _
  $region13: #{transformer_forward.35} parent=0 // pred_fallthru
    _
  // Predicated region
  $region14: #{transformer_forward.35} parent=0 // pred_check
    _
  $region15: #{transformer_forward.35} parent=0 // pred_check_branch
    %22 = sbr.rel (0) target = $region17
  $region16: #{transformer_forward.35} parent=0 // pred_region
    _
  $region17: #{transformer_forward.35} parent=0 // pred_fallthru
    _
  // Predicated region
  $region18: #{transformer_forward.35} parent=0 // pred_check
    _
  $region19: #{transformer_forward.35} parent=0 // pred_check_branch
    %24 = sbr.rel (0) target = $region21
  $region20: #{transformer_forward.35} parent=0 // pred_region
    _
  $region21: #{transformer_forward.35} parent=0 // pred_fallthru
    _
  // Predicated region
  $region22: #{transformer_forward.35} parent=0 // pred_check
    _
  $region23: #{transformer_forward.35} parent=0 // pred_check_branch
    %26 = sbr.rel (0) target = $region25
  $region24: #{transformer_forward.35} parent=0 // pred_region
    _
  $region25: #{transformer_forward.35} parent=0 // pred_fallthru
    _
  // Predicated region
  $region26: #{transformer_forward.35} parent=0 // pred_check
    _
  $region27: #{transformer_forward.35} parent=0 // pred_check_branch
    %28 = sbr.rel (0) target = $region29
  $region28: #{transformer_forward.35} parent=0 // pred_region
    _
  $region29: #{transformer_forward.35} parent=0 // pred_fallthru
    _
  %p30 = scmp.eq.s32.totalorder 0, 0
  // Predicated region
  $region30: #{transformer_forward.35} parent=0 // pred_check
    %p31 = pneg %p30
  $region31: #{transformer_forward.35} parent=0 // pred_check_branch
    %33 = sbr.rel (%p31) target = $region33
  $region32: #{transformer_forward.35} parent=0 // pred_region
    %vm34 = vcmask 261120
    %35 = vst.msk [vmem:[#allocation2] sm:$0xff] %vm34, 0.0
    %36 = vst.msk [vmem:[#allocation2 + $0x8] sm:$0xff] %vm34, 0.0
    %37 = vst.msk [vmem:[#allocation3] sm:$0xff] %vm34, 0.0
    %38 = vst.msk [vmem:[#allocation3 + $0x8] sm:$0xff] %vm34, 0.0
    %39 = vst.msk [vmem:[#allocation4] sm:$0xff] %vm34, 0.0
    %40 = vst.msk [vmem:[#allocation4 + $0x8] sm:$0xff] %vm34, 0.0
  $region33: #{transformer_forward.35} parent=0 // pred_fallthru
    _
  %v41 = vld [vmem:[%s0] sm:$0xff]
  %v42 = vld [vmem:[%s0 + $0x8] sm:$0xff]
  %v43 = vpack.c.bf16 %v42, %v41
  %v44 = vld [vmem:[#allocation2] sm:$0xff]
  %v45 = vld [vmem:[#allocation2 + $0x8] sm:$0xff]
  %v46 = vld [vmem:[%s1] sm:$0xf]
  %v47 = vld [vmem:[%s1 + $0x4] sm:$0xf]
  %v48 = vld [vmem:[%s1 + $0x8] sm:$0xf]
  %v49 = vld [vmem:[%s1 + $0xc] sm:$0xf]
  %v54 = vunpack.c.l.b16 %v46
  %v55 = vunpack.c.l.b16 %v47
  %v56 = vunpack.c.l.b16 %v48
  %v57 = vunpack.c.l.b16 %v49
  %v58 = vpack.c.b16 %v55, %v54
  %v59 = vpack.c.b16 %v57, %v56
  %vm62 = vcmask 261120
  %v64 = vsel %vm62, %v43, 0
  %66 = vmatprep.subr.bf16.mxu0 0
  %67 = vmatpush1.bf16.msra.mxu0 %v58
  %68 = vmatprep.subr.bf16.mxu0 0
  %69 = vmatpush1.bf16.msra.mxu0 %v59
  %70 = vmatprep.subr.bf16.mxu0 0
  %71 = vmatpush1.bf16.msra.mxu0 0
  %72 = vmatprep.subr.bf16.mxu0 0
  %73 = vmatpush1.bf16.msra.mxu0 0
  %74 = vmatprep.subr.bf16.mxu0 0
  %75 = vmatpush1.bf16.msra.mxu0 0
  %76 = vmatprep.subr.bf16.mxu0 0
  %77 = vmatpush1.bf16.msra.mxu0 0
  %78 = vmatprep.subr.bf16.mxu0 0
  %79 = vmatpush1.bf16.msra.mxu0 0
  %80 = vmatprep.subr.bf16.mxu0 0
  %81 = vmatpush1.bf16.msra.mxu0 0
  %82 = vmatprep.subr.bf16.mxu0 0
  %83 = vmatpush1.bf16.msra.mxu0 0
  %84 = vmatprep.subr.bf16.mxu0 0
  %85 = vmatpush1.bf16.msra.mxu0 0
  %86 = vmatprep.subr.bf16.mxu0 0
  %87 = vmatpush1.bf16.msra.mxu0 0
  %88 = vmatprep.subr.bf16.mxu0 0
  %89 = vmatpush1.bf16.msra.mxu0 0
  %90 = vmatprep.subr.bf16.mxu0 0
  %91 = vmatpush1.bf16.msra.mxu0 0
  %92 = vmatprep.subr.bf16.mxu0 0
  %93 = vmatpush1.bf16.msra.mxu0 0
  %94 = vmatprep.subr.bf16.mxu0 0
  %95 = vmatpush1.bf16.msra.mxu0 0
  %96 = vmatprep.subr.bf16.mxu0 0
  %97 = vmatpush1.bf16.msra.mxu0 0
  %98 = vmatprep.mubr.bf16.mxu0 0
  %99 = vmatmul.mubr.bf16.gmra.mrb[0].mxu0 %v64
  %v100 = vpop.f32.mrb[0].mxu0
  %v101 = vadd.f32 0.0, %v100
  %v102 = vpop.f32.mrb[0].mxu0
  %v103 = vpop.f32.mrb[0].mxu0
  %v104 = vadd.f32 0.0, %v103
  %v105 = vpop.f32.mrb[0].mxu0
  %106 = vdwg.mxu0
  %v107 = vadd.f32 %v44, %v101
  %v108 = vadd.f32 %v45, %v104
  %109 = vst.msk [vmem:[#allocation2] sm:$0xff] %vm62, %v107
  %110 = vst.msk [vmem:[#allocation2 + $0x8] sm:$0xff] %vm62, %v108
  %v111 = vld [vmem:[#allocation3] sm:$0xff]
  %v112 = vld [vmem:[#allocation3 + $0x8] sm:$0xff]
  %v113 = vld [vmem:[%s2] sm:$0xf]
  %v114 = vld [vmem:[%s2 + $0x4] sm:$0xf]
  %v115 = vld [vmem:[%s2 + $0x8] sm:$0xf]
  %v116 = vld [vmem:[%s2 + $0xc] sm:$0xf]
  %v121 = vunpack.c.l.b16 %v113
  %v122 = vunpack.c.l.b16 %v114
  %v123 = vunpack.c.l.b16 %v115
  %v124 = vunpack.c.l.b16 %v116
  %v125 = vpack.c.b16 %v122, %v121
  %v126 = vpack.c.b16 %v124, %v123
  %129 = vmatprep.subr.bf16.mxu0 0
  %130 = vmatpush1.bf16.msra.mxu0 %v125
  %131 = vmatprep.subr.bf16.mxu0 0
  %132 = vmatpush1.bf16.msra.mxu0 %v126
  %133 = vmatprep.subr.bf16.mxu0 0
  %134 = vmatpush1.bf16.msra.mxu0 0
  %135 = vmatprep.subr.bf16.mxu0 0
  %136 = vmatpush1.bf16.msra.mxu0 0
  %137 = vmatprep.subr.bf16.mxu0 0
  %138 = vmatpush1.bf16.msra.mxu0 0
  %139 = vmatprep.subr.bf16.mxu0 0
  %140 = vmatpush1.bf16.msra.mxu0 0
  %141 = vmatprep.subr.bf16.mxu0 0
  %142 = vmatpush1.bf16.msra.mxu0 0
  %143 = vmatprep.subr.bf16.mxu0 0
  %144 = vmatpush1.bf16.msra.mxu0 0
  %145 = vmatprep.subr.bf16.mxu0 0
  %146 = vmatpush1.bf16.msra.mxu0 0
  %147 = vmatprep.subr.bf16.mxu0 0
  %148 = vmatpush1.bf16.msra.mxu0 0
  %149 = vmatprep.subr.bf16.mxu0 0
  %150 = vmatpush1.bf16.msra.mxu0 0
  %151 = vmatprep.subr.bf16.mxu0 0
  %152 = vmatpush1.bf16.msra.mxu0 0
  %153 = vmatprep.subr.bf16.mxu0 0
  %154 = vmatpush1.bf16.msra.mxu0 0
  %155 = vmatprep.subr.bf16.mxu0 0
  %156 = vmatpush1.bf16.msra.mxu0 0
  %157 = vmatprep.subr.bf16.mxu0 0
  %158 = vmatpush1.bf16.msra.mxu0 0
  %159 = vmatprep.subr.bf16.mxu0 0
  %160 = vmatpush1.bf16.msra.mxu0 0
  %161 = vmatprep.mubr.bf16.mxu0 0
  %162 = vmatmul.mubr.bf16.gmra.mrb[0].mxu0 %v64
  %v163 = vpop.f32.mrb[0].mxu0
  %v164 = vadd.f32 0.0, %v163
  %v165 = vpop.f32.mrb[0].mxu0
  %v166 = vpop.f32.mrb[0].mxu0
  %v167 = vadd.f32 0.0, %v166
  %v168 = vpop.f32.mrb[0].mxu0
  %169 = vdwg.mxu0
  %v170 = vadd.f32 %v111, %v164
  %v171 = vadd.f32 %v112, %v167
  %172 = vst.msk [vmem:[#allocation3] sm:$0xff] %vm62, %v170
  %173 = vst.msk [vmem:[#allocation3 + $0x8] sm:$0xff] %vm62, %v171
  %v174 = vld [vmem:[#allocation4] sm:$0xff]
  %v175 = vld [vmem:[#allocation4 + $0x8] sm:$0xff]
  %v176 = vld [vmem:[%s3] sm:$0xf]
  %v177 = vld [vmem:[%s3 + $0x4] sm:$0xf]
  %v178 = vld [vmem:[%s3 + $0x8] sm:$0xf]
  %v179 = vld [vmem:[%s3 + $0xc] sm:$0xf]
  %v184 = vunpack.c.l.b16 %v176
  %v185 = vunpack.c.l.b16 %v177
  %v186 = vunpack.c.l.b16 %v178
  %v187 = vunpack.c.l.b16 %v179
  %v188 = vpack.c.b16 %v185, %v184
  %v189 = vpack.c.b16 %v187, %v186
  %192 = vmatprep.subr.bf16.mxu0 0
  %193 = vmatpush1.bf16.msra.mxu0 %v188
  %194 = vmatprep.subr.bf16.mxu0 0
  %195 = vmatpush1.bf16.msra.mxu0 %v189
  %196 = vmatprep.subr.bf16.mxu0 0
  %197 = vmatpush1.bf16.msra.mxu0 0
  %198 = vmatprep.subr.bf16.mxu0 0
  %199 = vmatpush1.bf16.msra.mxu0 0
  %200 = vmatprep.subr.bf16.mxu0 0
  %201 = vmatpush1.bf16.msra.mxu0 0
  %202 = vmatprep.subr.bf16.mxu0 0
  %203 = vmatpush1.bf16.msra.mxu0 0
  %204 = vmatprep.subr.bf16.mxu0 0
  %205 = vmatpush1.bf16.msra.mxu0 0
  %206 = vmatprep.subr.bf16.mxu0 0
  %207 = vmatpush1.bf16.msra.mxu0 0
  %208 = vmatprep.subr.bf16.mxu0 0
  %209 = vmatpush1.bf16.msra.mxu0 0
  %210 = vmatprep.subr.bf16.mxu0 0
  %211 = vmatpush1.bf16.msra.mxu0 0
  %212 = vmatprep.subr.bf16.mxu0 0
  %213 = vmatpush1.bf16.msra.mxu0 0
  %214 = vmatprep.subr.bf16.mxu0 0
  %215 = vmatpush1.bf16.msra.mxu0 0
  %216 = vmatprep.subr.bf16.mxu0 0
  %217 = vmatpush1.bf16.msra.mxu0 0
  %218 = vmatprep.subr.bf16.mxu0 0
  %219 = vmatpush1.bf16.msra.mxu0 0
  %220 = vmatprep.subr.bf16.mxu0 0
  %221 = vmatpush1.bf16.msra.mxu0 0
  %222 = vmatprep.subr.bf16.mxu0 0
  %223 = vmatpush1.bf16.msra.mxu0 0
  %224 = vmatprep.mubr.bf16.mxu0 0
  %225 = vmatmul.mubr.bf16.gmra.mrb[0].mxu0 %v64
  %v226 = vpop.f32.mrb[0].mxu0
  %v227 = vadd.f32 0.0, %v226
  %v228 = vpop.f32.mrb[0].mxu0
  %v229 = vpop.f32.mrb[0].mxu0
  %v230 = vadd.f32 0.0, %v229
  %v231 = vpop.f32.mrb[0].mxu0
  %232 = vdwg.mxu0
  %v233 = vadd.f32 %v174, %v227
  %v234 = vadd.f32 %v175, %v230
  %235 = vst.msk [vmem:[#allocation4] sm:$0xff] %vm62, %v233
  %236 = vst.msk [vmem:[#allocation4 + $0x8] sm:$0xff] %vm62, %v234
  // Predicated region
  $region34: #{transformer_forward.35} parent=0 // pred_check
    %p237 = pneg %p30
  $region35: #{transformer_forward.35} parent=0 // pred_check_branch
    %239 = sbr.rel (%p237) target = $region37
  $region36: #{transformer_forward.35} parent=0 // pred_region
    %v240 = vld [vmem:[#allocation2] sm:$0xff]
    %v241 = vld [vmem:[#allocation2 + $0x8] sm:$0xff]
    %v242 = vld [vmem:[%s4] sm:$0x1]
    %v244 = vlaneseq
    %v245 = vshrl.u32 %v244, 7
    %v246 = vsub.s32 0, %v245
    %v247 = vrot.slane %v242, %v246
    %v249 = vadd.f32 %v240, %v247
    %v250 = vadd.f32 %v241, %v247
    %251 = vst.msk [vmem:[%s7] sm:$0xff] %vm62, %v249
    %252 = vst.msk [vmem:[%s7 + $0x8] sm:$0xff] %vm62, %v250
    %v253 = vld [vmem:[#allocation3] sm:$0xff]
    %v254 = vld [vmem:[#allocation3 + $0x8] sm:$0xff]
    %v255 = vld [vmem:[%s5] sm:$0x1]
    %v257 = vlaneseq
    %v258 = vshrl.u32 %v257, 7
    %v259 = vsub.s32 0, %v258
    %v260 = vrot.slane %v255, %v259
    %v262 = vadd.f32 %v253, %v260
    %v263 = vadd.f32 %v254, %v260
    %264 = vst.msk [vmem:[%s8] sm:$0xff] %vm62, %v262
    %265 = vst.msk [vmem:[%s8 + $0x8] sm:$0xff] %vm62, %v263
    %v266 = vld [vmem:[#allocation4] sm:$0xff]
    %v267 = vld [vmem:[#allocation4 + $0x8] sm:$0xff]
    %v268 = vld [vmem:[%s6] sm:$0x1]
    %v270 = vlaneseq
    %v271 = vshrl.u32 %v270, 7
    %v272 = vsub.s32 0, %v271
    %v273 = vrot.slane %v268, %v272
    %v275 = vadd.f32 %v266, %v273
    %v276 = vadd.f32 %v267, %v273
    %277 = vst.msk [vmem:[%s9] sm:$0xff] %vm62, %v275
    %278 = vst.msk [vmem:[%s9 + $0x8] sm:$0xff] %vm62, %v276
  $region37: #{transformer_forward.35} parent=0 // pred_fallthru
    _
  // Predicated region
  $region38: #{transformer_forward.35} parent=0 // pred_check
    _
  $region39: #{transformer_forward.35} parent=0 // pred_check_branch
    %280 = sbr.rel (0) target = $region41
  $region40: #{transformer_forward.35} parent=0 // pred_region
    _
  $region41: #{transformer_forward.35} parent=0 // pred_fallthru
    _
  // Predicated region
  $region42: #{transformer_forward.35} parent=0 // pred_check
    _
  $region43: #{transformer_forward.35} parent=0 // pred_check_branch
    %282 = sbr.rel (0) target = $region45
  $region44: #{transformer_forward.35} parent=0 // pred_region
    _
  $region45: #{transformer_forward.35} parent=0 // pred_fallthru
    _
  // Predicated region
  $region46: #{transformer_forward.35} parent=0 // pred_check
    _
  $region47: #{transformer_forward.35} parent=0 // pred_check_branch
    %284 = sbr.rel (0) target = $region49
  $region48: #{transformer_forward.35} parent=0 // pred_region
    _
  $region49: #{transformer_forward.35} parent=0 // pred_fallthru
    _
  // Predicated region
  $region50: #{transformer_forward.35} parent=0 // pred_check
    _
  $region51: #{transformer_forward.35} parent=0 // pred_check_branch
    %286 = sbr.rel (0) target = $region53
  $region52: #{transformer_forward.35} parent=0 // pred_region
    _
  $region53: #{transformer_forward.35} parent=0 // pred_fallthru
    _
  // Predicated region
  $region54: #{transformer_forward.35} parent=0 // pred_check
    _
  $region55: #{transformer_forward.35} parent=0 // pred_check_branch
    %288 = sbr.rel (0) target = $region57
  $region56: #{transformer_forward.35} parent=0 // pred_region
    _
  $region57: #{transformer_forward.35} parent=0 // pred_fallthru
    _
  // Predicated region
  $region58: #{transformer_forward.35} parent=0 // pred_check
    _
  $region59: #{transformer_forward.35} parent=0 // pred_check_branch
    %290 = sbr.rel (0) target = $region61
  $region60: #{transformer_forward.35} parent=0 // pred_region
    _
  $region61: #{transformer_forward.35} parent=0 // pred_fallthru
    _

// kernel: transformer_forward.38
$region0: #{transformer_forward.38}
  #allocation0 [shape = 'u32[]', space=smem, size = 0x4, offset = 0x4, fixed_abs, tag = 'smem constant byte address 0x4 - core index']
  #allocation1 [shape = 'u32[144,128]{1,0:T(1,128)}', space=vmem, size = 0x12000, scoped, tag = 'internal scratch']
  %s0 = inlined_call_operand.vmem [shape: f32[16,32], index: 0, kind: input, shape index: {}]
  %s1 = inlined_call_operand.vmem [shape: f32[16,32], index: 1, kind: input, shape index: {}]
  %s2 = inlined_call_operand.vmem [shape: f32[1,32], index: 2, kind: input, shape index: {}]
  %s3 = inlined_call_operand.vmem [shape: f32[1,32], index: 3, kind: input, shape index: {}]
  %s4 = inlined_call_operand.vmem [shape: f32[16,32], index: 4, kind: output, shape index: {}]
  %s5 = sld [smem:[#allocation0]]
  $region26: #{transformer_forward.38} parent=0
    _
  %s7 = ssub.s32 1, %s5
  %s8 = scalar_select 0, %s7, %s5
  // Predicated region
  $region2: #{transformer_forward.38} parent=0 // pred_check
    _
  $region3: #{transformer_forward.38} parent=0 // pred_check_branch
    %10 = sbr.rel (0) target = $region5
  $region4: #{transformer_forward.38} parent=0 // pred_region
    _
  $region5: #{transformer_forward.38} parent=0 // pred_fallthru
    _
  // Predicated region
  $region6: #{transformer_forward.38} parent=0 // pred_check
    _
  $region7: #{transformer_forward.38} parent=0 // pred_check_branch
    %12 = sbr.rel (0) target = $region9
  $region8: #{transformer_forward.38} parent=0 // pred_region
    _
  $region9: #{transformer_forward.38} parent=0 // pred_fallthru
    _
  // Predicated region
  $region10: #{transformer_forward.38} parent=0 // pred_check
    _
  $region11: #{transformer_forward.38} parent=0 // pred_check_branch
    %14 = sbr.rel (0) target = $region13
  $region12: #{transformer_forward.38} parent=0 // pred_region
    _
  $region13: #{transformer_forward.38} parent=0 // pred_fallthru
    _
  // Predicated region
  $region14: #{transformer_forward.38} parent=0 // pred_check
    _
  $region15: #{transformer_forward.38} parent=0 // pred_check_branch
    %16 = sbr.rel (0) target = $region17
  $region16: #{transformer_forward.38} parent=0 // pred_region
    _
  $region17: #{transformer_forward.38} parent=0 // pred_fallthru
    _
  %v17 = vld [vmem:[%s0] sm:$0xff]
  %v18 = vld [vmem:[%s0 + $0x8] sm:$0xff]
  %v19 = vld [vmem:[%s1] sm:$0xff]
  %v20 = vld [vmem:[%s1 + $0x8] sm:$0xff]
  %v21 = vadd.f32 %v17, %v19
  %v22 = vadd.f32 %v18, %v20
  %vm23 = vcmask 261120
  %v24 = vsel %vm23, %v21, 0.0
  %25 = vadd.xlane.f32.xlu0 %v24
  %v26 = vpop.xlane.xlu0 %25
  %v27 = vsel %vm23, %v22, 0.0
  %28 = vadd.xlane.f32.xlu0 %v27
  %v29 = vpop.xlane.xlu0 %28
  %v30 = vrcp.pop 32.0
  %v31 = vmul.f32 %v26, %v30
  %v32 = vmul.f32 %v29, %v30
  %v33 = vsub.f32 %v21, %v31
  %v34 = vsub.f32 %v22, %v32
  %v35 = vmul.f32 %v33, %v33
  %v36 = vmul.f32 %v34, %v34
  %v37 = vsel %vm23, %v35, 0.0
  %38 = vadd.xlane.f32.xlu0 %v37
  %v39 = vpop.xlane.xlu0 %38
  %v40 = vsel %vm23, %v36, 0.0
  %41 = vadd.xlane.f32.xlu0 %v40
  %v42 = vpop.xlane.xlu0 %41
  %v43 = vmul.f32 %v39, %v30
  %v44 = vmul.f32 %v42, %v30
  %v45 = vadd.f32 %v43, 1e-05
  %v46 = vadd.f32 %v44, 1e-05
  %v47 = vrsqrt.pop %v45
  %v48 = vrsqrt.pop %v46
  %v49 = vmul.f32 %v33, %v47
  %v50 = vmul.f32 %v34, %v48
  %v51 = vld [vmem:[%s2] sm:$0x1]
  %v53 = vlaneseq
  %v54 = vshrl.u32 %v53, 7
  %v55 = vsub.s32 0, %v54
  %v56 = vrot.slane %v51, %v55
  %v58 = vmul.f32 %v49, %v56
  %v59 = vmul.f32 %v50, %v56
  %v60 = vld [vmem:[%s3] sm:$0x1]
  %v62 = vlaneseq
  %v63 = vshrl.u32 %v62, 7
  %v64 = vsub.s32 0, %v63
  %v65 = vrot.slane %v60, %v64
  %v67 = vadd.f32 %v58, %v65
  %v68 = vadd.f32 %v59, %v65
  %69 = vst.msk [vmem:[%s4] sm:$0xff] %vm23, %v67
  %70 = vst.msk [vmem:[%s4 + $0x8] sm:$0xff] %vm23, %v68
  // Predicated region
  $region18: #{transformer_forward.38} parent=0 // pred_check
    _
  $region19: #{transformer_forward.38} parent=0 // pred_check_branch
    %72 = sbr.rel (0) target = $region21
  $region20: #{transformer_forward.38} parent=0 // pred_region
    _
  $region21: #{transformer_forward.38} parent=0 // pred_fallthru
    _
  // Predicated region
  $region22: #{transformer_forward.38} parent=0 // pred_check
    _
  $region23: #{transformer_forward.38} parent=0 // pred_check_branch
    %74 = sbr.rel (0) target = $region25
  $region24: #{transformer_forward.38} parent=0 // pred_region
    _
  $region25: #{transformer_forward.38} parent=0 // pred_fallthru
    _

// kernel: transformer_forward.36
$region0: #{transformer_forward.36}
  #allocation0 [shape = 'u32[]', space=smem, size = 0x4, offset = 0x4, fixed_abs, tag = 'smem constant byte address 0x4 - core index']
  #allocation1 [shape = 'u32[144,128]{1,0:T(1,128)}', space=vmem, size = 0x12000, scoped, tag = 'internal scratch']
  %s0 = inlined_call_operand.vmem [shape: f32[2,8,32], index: 0, kind: input, shape index: {}]
  %s1 = inlined_call_operand.vmem [shape: f32[2,8,32], index: 1, kind: input, shape index: {}]
  %s2 = inlined_call_operand.vmem [shape: f32[2,8,32], index: 2, kind: input, shape index: {}]
  %s3 = inlined_call_operand.vmem [shape: f32[2,8,32], index: 3, kind: output, shape index: {0}]
  %s4 = inlined_call_operand.hbm [shape: f32[2,4,8,8], index: 4, kind: output, shape index: {1}]
  %5 = xla_tuple %s3, %s4
  %s6 = sld [smem:[#allocation0]]
  $region53: #{transformer_forward.36} parent=0
    _
  %s8 = ssub.s32 1, %s6
  %s9 = scalar_select 0, %s8, %s6
  $region1: #{transformer_forward.36} parent=0
    #allocation2 [shape = 'u8[32768]{0}', space=vmem, size = 0x8000, scoped, tag = 'output window, operand 1']
    #allocation3 [shape = 's32[2]{0}', space=sflag, size = 0x8, scoped, tag = 'scoped memory for transformer_forward.36']
    %10 = vsyncpa [#allocation3], 0
    %s11 = scalar_lea.sflag [#allocation3], 1
    %12 = vsyncpa %s11, 0
    loop: start=0, step=1, limit=4
    $region2: #{transformer_forward.36} parent=1 // loop_pre_header
      _
    $region3: #{transformer_forward.36} parent=1 // loop_header
      %s14 = sphi 0, %s18
      %p15 = scmp.ge.s32.totalorder %s14, 4
      %s21 = sphi 0, %s33
      %s22 = sphi 0, %s29
      %s23 = sphi 0, %s21
      %s24 = sphi 0, %s22
      %s25 = sphi 0, %s23
      %s26 = sphi 0, %s24
      %s38 = sphi 0, %s40
      %s41 = sphi 0, %s38
      %s42 = sphi 0, %s41
      %s58 = sphi 0, %s42
      %s66 = sphi 0, %s68
      %s69 = sphi 0, %s66
      %s70 = sphi 0, %s69
      %s86 = sphi 0, %s70
      %s94 = sphi 0, %s96
      %s97 = sphi 0, %s94
      %s98 = sphi 0, %s97
      %s114 = sphi 0, %s98
      %s122 = sphi 0, %s124
      %s125 = sphi 0, %s122
      %s126 = sphi 0, %s125
      %s142 = sphi 0, %s126
      %s150 = sphi 0, %s152
      %s153 = sphi 0, %s150
      %s154 = sphi 0, %s153
      %s170 = sphi 0, %s154
    $region4: #{transformer_forward.36} parent=1 // loop_header_branch
      %17 = sbr.rel (%p15) target = $region8
    $region5: #{transformer_forward.36} parent=1 // loop_body
      %s19 = ssub.s32 %s14, 1
      %s20 = ssub.s32 %s14, 2
      %s27 = sadd.s32 1, %s22
      %p28 = scmp.ge.s32.totalorder %s27, 1
      %s29 = scalar_select %p28, 0, %s27
      %s30 = sadd.s32 1, %s21
      %s31 = scalar_select %p28, %s30, %s21
      %p32 = scmp.ge.s32.totalorder %s31, 2
      %s33 = scalar_select %p32, 0, %s31
      %s34 = ssub.s32 %s21, %s33
      %s35 = ssub.s32 %s22, %s29
      %s36 = sor.u32 %s34, %s35
      %p37 = scmp.eq.s32.totalorder %s36, 0
      %s39 = sadd.s32 %s38, 1
      %s40 = scalar_select %p37, %s38, %s39
      %p43 = pneg %p37
      %p44 = scmp.eq.s32.totalorder %s14, 1
      %p45 = por %p43, %p44
      %p46 = scmp.ne.s32.totalorder %s38, %s41
      %p47 = scmp.eq.s32.totalorder %s14, 0
      %p48 = por %p46, %p47
      %p49 = scmp.ne.s32.totalorder %s38, %s41
      %p50 = scmp.eq.s32.totalorder %s19, 1
      %p51 = por %p49, %p50
      %p52 = scmp.ne.s32.totalorder %s41, %s42
      %p53 = scmp.eq.s32.totalorder %s19, 0
      %p54 = por %p52, %p53
      %p55 = scmp.ne.s32.totalorder %s41, %s42
      %p56 = scmp.eq.s32.totalorder %s20, 1
      %p57 = por %p55, %p56
      %p59 = scmp.ne.s32.totalorder %s42, %s58
      %p60 = scmp.eq.s32.totalorder %s20, 0
      %p61 = por %p59, %p60
      %s62 = ssub.s32 %s21, %s33
      %s63 = ssub.s32 %s22, %s29
      %s64 = sor.u32 %s62, %s63
      %p65 = scmp.eq.s32.totalorder %s64, 0
      %s67 = sadd.s32 %s66, 1
      %s68 = scalar_select %p65, %s66, %s67
      %p71 = pneg %p65
      %p72 = scmp.eq.s32.totalorder %s14, 1
      %p73 = por %p71, %p72
      %p74 = scmp.ne.s32.totalorder %s66, %s69
      %p75 = scmp.eq.s32.totalorder %s14, 0
      %p76 = por %p74, %p75
      %p77 = scmp.ne.s32.totalorder %s66, %s69
      %p78 = scmp.eq.s32.totalorder %s19, 1
      %p79 = por %p77, %p78
      %p80 = scmp.ne.s32.totalorder %s69, %s70
      %p81 = scmp.eq.s32.totalorder %s19, 0
      %p82 = por %p80, %p81
      %p83 = scmp.ne.s32.totalorder %s69, %s70
      %p84 = scmp.eq.s32.totalorder %s20, 1
      %p85 = por %p83, %p84
      %p87 = scmp.ne.s32.totalorder %s70, %s86
      %p88 = scmp.eq.s32.totalorder %s20, 0
      %p89 = por %p87, %p88
      %s90 = ssub.s32 %s21, %s33
      %s91 = ssub.s32 %s22, %s29
      %s92 = sor.u32 %s90, %s91
      %p93 = scmp.eq.s32.totalorder %s92, 0
      %s95 = sadd.s32 %s94, 1
      %s96 = scalar_select %p93, %s94, %s95
      %p99 = pneg %p93
      %p100 = scmp.eq.s32.totalorder %s14, 1
      %p101 = por %p99, %p100
      %p102 = scmp.ne.s32.totalorder %s94, %s97
      %p103 = scmp.eq.s32.totalorder %s14, 0
      %p104 = por %p102, %p103
      %p105 = scmp.ne.s32.totalorder %s94, %s97
      %p106 = scmp.eq.s32.totalorder %s19, 1
      %p107 = por %p105, %p106
      %p108 = scmp.ne.s32.totalorder %s97, %s98
      %p109 = scmp.eq.s32.totalorder %s19, 0
      %p110 = por %p108, %p109
      %p111 = scmp.ne.s32.totalorder %s97, %s98
      %p112 = scmp.eq.s32.totalorder %s20, 1
      %p113 = por %p111, %p112
      %p115 = scmp.ne.s32.totalorder %s98, %s114
      %p116 = scmp.eq.s32.totalorder %s20, 0
      %p117 = por %p115, %p116
      %s118 = ssub.s32 %s21, %s33
      %s119 = ssub.s32 %s22, %s29
      %s120 = sor.u32 %s118, %s119
      %p121 = scmp.eq.s32.totalorder %s120, 0
      %s123 = sadd.s32 %s122, 1
      %s124 = scalar_select %p121, %s122, %s123
      %p127 = pneg %p121
      %p128 = scmp.eq.s32.totalorder %s14, 1
      %p129 = por %p127, %p128
      %p130 = scmp.ne.s32.totalorder %s122, %s125
      %p131 = scmp.eq.s32.totalorder %s14, 0
      %p132 = por %p130, %p131
      %p133 = scmp.ne.s32.totalorder %s122, %s125
      %p134 = scmp.eq.s32.totalorder %s19, 1
      %p135 = por %p133, %p134
      %p136 = scmp.ne.s32.totalorder %s125, %s126
      %p137 = scmp.eq.s32.totalorder %s19, 0
      %p138 = por %p136, %p137
      %p139 = scmp.ne.s32.totalorder %s125, %s126
      %p140 = scmp.eq.s32.totalorder %s20, 1
      %p141 = por %p139, %p140
      %p143 = scmp.ne.s32.totalorder %s126, %s142
      %p144 = scmp.eq.s32.totalorder %s20, 0
      %p145 = por %p143, %p144
      %s146 = ssub.s32 %s21, %s33
      %s147 = ssub.s32 %s22, %s29
      %s148 = sor.u32 %s146, %s147
      %p149 = scmp.eq.s32.totalorder %s148, 0
      %s151 = sadd.s32 %s150, 1
      %s152 = scalar_select %p149, %s150, %s151
      %p155 = pneg %p149
      %p156 = scmp.eq.s32.totalorder %s14, 1
      %p157 = por %p155, %p156
      %p158 = scmp.ne.s32.totalorder %s150, %s153
      %p159 = scmp.eq.s32.totalorder %s14, 0
      %p160 = por %p158, %p159
      %p161 = scmp.ne.s32.totalorder %s150, %s153
      %p162 = scmp.eq.s32.totalorder %s19, 1
      %p163 = por %p161, %p162
      %p164 = scmp.ne.s32.totalorder %s153, %s154
      %p165 = scmp.eq.s32.totalorder %s19, 0
      %p166 = por %p164, %p165
      %p167 = scmp.ne.s32.totalorder %s153, %s154
      %p168 = scmp.eq.s32.totalorder %s20, 1
      %p169 = por %p167, %p168
      %p171 = scmp.ne.s32.totalorder %s154, %s170
      %p172 = scmp.eq.s32.totalorder %s20, 0
      %p173 = por %p171, %p172
      %p174 = scmp.le.s32.totalorder 1, %s14
      %p175 = scmp.lt.s32.totalorder %s14, 3
      %p176 = pnand %p174, %p175
      %p177 = pneg %p176
      // Predicated region
      $region9: #{transformer_forward.36} parent=5 // pred_check
        _
      $region10: #{transformer_forward.36} parent=5 // pred_check_branch
        %179 = sbr.rel (%p176) target = $region12
      $region11: #{transformer_forward.36} parent=5 // pred_region
        %s180 = ssub.s32 %s14, 1
      $region12: #{transformer_forward.36} parent=5 // pred_fallthru
        _
      %p181 = scmp.lt.s32.totalorder %s14, 2
      // Predicated region
      $region13: #{transformer_forward.36} parent=5 // pred_check
        %p182 = pneg %p181
      $region14: #{transformer_forward.36} parent=5 // pred_check_branch
        %184 = sbr.rel (%p182) target = $region16
      $region15: #{transformer_forward.36} parent=5 // pred_region
        // Predicated region
        $region17: #{transformer_forward.36} parent=15 // pred_check
          %p185 = pneg %p48
        $region18: #{transformer_forward.36} parent=15 // pred_check_branch
          %187 = sbr.rel (%p185) target = $region20
        $region19: #{transformer_forward.36} parent=15 // pred_region
          %p188 = scmp.lt.s32.totalorder %s21, 1
          %s189 = scalar_select %p188, %s21, 1
          %p190 = scmp.lt.s32.totalorder %s22, 0
          %s191 = scalar_select %p190, %s22, 0
          %s192 = sadd.s32 %s191, %s189
          %s193 = smul.addr %s192, 8
          %s194 = scalar_lea.vmem %s0, %s193
        $region20: #{transformer_forward.36} parent=15 // pred_fallthru
          _
        // Predicated region
        $region21: #{transformer_forward.36} parent=15 // pred_check
          %p195 = pneg %p76
        $region22: #{transformer_forward.36} parent=15 // pred_check_branch
          %197 = sbr.rel (%p195) target = $region24
        $region23: #{transformer_forward.36} parent=15 // pred_region
          %p198 = scmp.lt.s32.totalorder %s21, 1
          %s199 = scalar_select %p198, %s21, 1
          %p200 = scmp.lt.s32.totalorder %s22, 0
          %s201 = scalar_select %p200, %s22, 0
          %s202 = sadd.s32 %s201, %s199
          %s203 = smul.addr %s202, 8
          %s204 = scalar_lea.vmem %s1, %s203
        $region24: #{transformer_forward.36} parent=15 // pred_fallthru
          _
        // Predicated region
        $region25: #{transformer_forward.36} parent=15 // pred_check
          %p205 = pneg %p104
        $region26: #{transformer_forward.36} parent=15 // pred_check_branch
          %207 = sbr.rel (%p205) target = $region28
        $region27: #{transformer_forward.36} parent=15 // pred_region
          %p208 = scmp.lt.s32.totalorder %s21, 1
          %s209 = scalar_select %p208, %s21, 1
          %p210 = scmp.lt.s32.totalorder %s22, 0
          %s211 = scalar_select %p210, %s22, 0
          %s212 = sadd.s32 %s211, %s209
          %s213 = smul.addr %s212, 8
          %s214 = scalar_lea.vmem %s2, %s213
        $region28: #{transformer_forward.36} parent=15 // pred_fallthru
          _
      $region16: #{transformer_forward.36} parent=5 // pred_fallthru
        _
      %p215 = scmp.le.s32.totalorder 1, %s14
      %p216 = scmp.lt.s32.totalorder %s14, 3
      %p217 = pnand %p215, %p216
      %p218 = pneg %p217
      // Predicated region
      $region29: #{transformer_forward.36} parent=5 // pred_check
        _
      $region30: #{transformer_forward.36} parent=5 // pred_check_branch
        %220 = sbr.rel (%p217) target = $region32
      $region31: #{transformer_forward.36} parent=5 // pred_region
        %s221 = ssub.s32 %s14, 1
        %p222 = scmp.lt.s32.totalorder %s23, 1
        %s223 = scalar_select %p222, %s23, 1
        %p224 = scmp.lt.s32.totalorder %s24, 0
        %s225 = scalar_select %p224, %s24, 0
        %s226 = sadd.s32 %s225, %s223
        %s227 = smul.addr %s226, 8
        %s228 = scalar_lea.vmem %s0, %s227
        %p229 = pneg %p54
        %p230 = pneg %p51
        %p231 = scmp.lt.s32.totalorder %s23, 1
        %s232 = scalar_select %p231, %s23, 1
        %p233 = scmp.lt.s32.totalorder %s24, 0
        %s234 = scalar_select %p233, %s24, 0
        %s235 = sadd.s32 %s234, %s232
        %s236 = smul.addr %s235, 8
        %s237 = scalar_lea.vmem %s1, %s236
        %p238 = pneg %p82
        %p239 = pneg %p79
        %p240 = scmp.lt.s32.totalorder %s23, 1
        %s241 = scalar_select %p240, %s23, 1
        %p242 = scmp.lt.s32.totalorder %s24, 0
        %s243 = scalar_select %p242, %s24, 0
        %s244 = sadd.s32 %s243, %s241
        %s245 = smul.addr %s244, 8
        %s246 = scalar_lea.vmem %s2, %s245
        %p247 = pneg %p110
        %p248 = pneg %p107
        %p249 = pneg %p138
        %p250 = pneg %p135
        %p251 = scmp.lt.s32.totalorder %s23, 1
        %s252 = scalar_select %p251, %s23, 1
        %p253 = scmp.lt.s32.totalorder %s24, 0
        %s254 = scalar_select %p253, %s24, 0
        %s255 = sadd.s32 %s254, %s252
        %s256 = smul.addr %s255, 8
        %s257 = scalar_lea.vmem %s3, %s256
        %p258 = pneg %p166
        %p259 = pneg %p163
        %s260 = sand.u32 %s153, 1
        %s261 = scalar_lea.sflag [#allocation3], %s260
        %s262 = sand.u32 %s153, 1
        %s263 = smul.addr %s262, 32
        %s264 = scalar_lea.vmem [#allocation2], %s263
        %p265 = scmp.lt.s32.totalorder %s23, 1
        %s266 = scalar_select %p265, %s23, 1
        %p267 = scmp.lt.s32.totalorder %s24, 0
        %s268 = scalar_select %p267, %s24, 0
        %s269 = sadd.s32 %s268, %s266
        %s270 = smul.addr %s269, 8
        %s271 = scalar_lea.vmem %s0, %s270
        %p272 = scmp.lt.s32.totalorder %s23, 1
        %s273 = scalar_select %p272, %s23, 1
        %p274 = scmp.lt.s32.totalorder %s24, 0
        %s275 = scalar_select %p274, %s24, 0
        %s276 = sadd.s32 %s275, %s273
        %s277 = smul.addr %s276, 8
        %s278 = scalar_lea.vmem %s1, %s277
        %p279 = scmp.lt.s32.totalorder %s23, 1
        %s280 = scalar_select %p279, %s23, 1
        %p281 = scmp.lt.s32.totalorder %s24, 0
        %s282 = scalar_select %p281, %s24, 0
        %s283 = sadd.s32 %s282, %s280
        %s284 = smul.addr %s283, 8
        %s285 = scalar_lea.vmem %s2, %s284
        %p286 = scmp.lt.s32.totalorder %s23, 1
        %s287 = scalar_select %p286, %s23, 1
        %p288 = scmp.lt.s32.totalorder %s24, 0
        %s289 = scalar_select %p288, %s24, 0
        %s290 = sadd.s32 %s289, %s287
        %s291 = smul.addr %s290, 8
        %s292 = scalar_lea.vmem %s3, %s291
        %s293 = smul.u32 4, %s24
        %v295 = vld [vmem:[%s271] sm:$0xff]
        %v296 = vpack.c.bf16 %v295, %v295
        %v297 = vld [vmem:[%s278] sm:$0xff]
        %v298 = vpack.c.bf16 %v297, %v297
        %v299 = vld [vmem:[%s285] sm:$0xff]
        %v300 = vpack.c.bf16 %v299, %v299
        %vm301 = vcmask 64512
        %v303 = vsel %vm301, %v296, 0
        %v306 = vsel %vm301, %v298, 0
        %308 = vmatprep.subr.bf16.mxu0 0
        %309 = vmatpush1.bf16.xpose.msra.mxu0 %v306
        %310 = vmatprep.subr.bf16.mxu0 0
        %311 = vmatpush1.bf16.xpose.msra.mxu0 0
        %312 = vmatprep.subr.bf16.mxu0 0
        %313 = vmatpush1.bf16.xpose.msra.mxu0 0
        %314 = vmatprep.subr.bf16.mxu0 0
        %315 = vmatpush1.bf16.xpose.msra.mxu0 0
        %316 = vmatprep.subr.bf16.mxu0 0
        %317 = vmatpush1.bf16.xpose.msra.mxu0 0
        %318 = vmatprep.subr.bf16.mxu0 0
        %319 = vmatpush1.bf16.xpose.msra.mxu0 0
        %320 = vmatprep.subr.bf16.mxu0 0
        %321 = vmatpush1.bf16.xpose.msra.mxu0 0
        %322 = vmatprep.subr.bf16.mxu0 0
        %323 = vmatpush1.bf16.xpose.msra.mxu0 0
        %324 = vmatprep.subr.bf16.mxu0 0
        %325 = vmatpush1.bf16.xpose.msra.mxu0 0
        %326 = vmatprep.subr.bf16.mxu0 0
        %327 = vmatpush1.bf16.xpose.msra.mxu0 0
        %328 = vmatprep.subr.bf16.mxu0 0
        %329 = vmatpush1.bf16.xpose.msra.mxu0 0
        %330 = vmatprep.subr.bf16.mxu0 0
        %331 = vmatpush1.bf16.xpose.msra.mxu0 0
        %332 = vmatprep.subr.bf16.mxu0 0
        %333 = vmatpush1.bf16.xpose.msra.mxu0 0
        %334 = vmatprep.subr.bf16.mxu0 0
        %335 = vmatpush1.bf16.xpose.msra.mxu0 0
        %336 = vmatprep.subr.bf16.mxu0 0
        %337 = vmatpush1.bf16.xpose.msra.mxu0 0
        %338 = vmatprep.subr.bf16.mxu0 0
        %339 = vmatpush1.bf16.xpose.msra.mxu0 0
        %340 = vmatprep.mubr.bf16.mxu0 0
        %341 = vmatmul.mubr.bf16.gmra.mrb[0].mxu0 %v303
        %v342 = vpop.f32.mrb[0].mxu0
        %v343 = vadd.f32 0.0, %v342
        %v344 = vpop.f32.mrb[0].mxu0
        %v345 = vpop.f32.mrb[0].mxu0
        %v346 = vpop.f32.mrb[0].mxu0
        %347 = vdwg.mxu0
        %v348 = vsel %vm301, %v343, -inf
        %349 = vmax.xlane.f32.xlu0 %v348
        %v350 = vpop.xlane.xlu0 %349
        %v351 = vsub.f32 %v343, %v350
        %v352 = vmul.f32 %v351, 1.442695
        %v353 = vpow.pop %v352
        %v354 = vsel %vm301, %v353, 0.0
        %355 = vadd.xlane.f32.xlu0 %v354
        %v356 = vpop.xlane.xlu0 %355
        %v357 = vrcp.pop %v356
        %v358 = vmul.f32 %v353, %v357
        %359 = vst.msk [vmem:[%s264] sm:$0xff] %vm301, %v358
        %v360 = vpack.c.bf16 %v358, %v358
        %v362 = vsel %vm301, %v360, 0
        %vm364 = vcmask 1043456
        %v366 = vsel %vm364, %v300, 0
        %368 = vmatprep.subr.bf16.mxu0 0
        %369 = vmatpush1.bf16.msra.mxu0 %v366
        %370 = vmatprep.subr.bf16.mxu0 0
        %371 = vmatpush1.bf16.msra.mxu0 0
        %372 = vmatprep.subr.bf16.mxu0 0
        %373 = vmatpush1.bf16.msra.mxu0 0
        %374 = vmatprep.subr.bf16.mxu0 0
        %375 = vmatpush1.bf16.msra.mxu0 0
        %376 = vmatprep.subr.bf16.mxu0 0
        %377 = vmatpush1.bf16.msra.mxu0 0
        %378 = vmatprep.subr.bf16.mxu0 0
        %379 = vmatpush1.bf16.msra.mxu0 0
        %380 = vmatprep.subr.bf16.mxu0 0
        %381 = vmatpush1.bf16.msra.mxu0 0
        %382 = vmatprep.subr.bf16.mxu0 0
        %383 = vmatpush1.bf16.msra.mxu0 0
        %384 = vmatprep.subr.bf16.mxu0 0
        %385 = vmatpush1.bf16.msra.mxu0 0
        %386 = vmatprep.subr.bf16.mxu0 0
        %387 = vmatpush1.bf16.msra.mxu0 0
        %388 = vmatprep.subr.bf16.mxu0 0
        %389 = vmatpush1.bf16.msra.mxu0 0
        %390 = vmatprep.subr.bf16.mxu0 0
        %391 = vmatpush1.bf16.msra.mxu0 0
        %392 = vmatprep.subr.bf16.mxu0 0
        %393 = vmatpush1.bf16.msra.mxu0 0
        %394 = vmatprep.subr.bf16.mxu0 0
        %395 = vmatpush1.bf16.msra.mxu0 0
        %396 = vmatprep.subr.bf16.mxu0 0
        %397 = vmatpush1.bf16.msra.mxu0 0
        %398 = vmatprep.subr.bf16.mxu0 0
        %399 = vmatpush1.bf16.msra.mxu0 0
        %400 = vmatprep.mubr.bf16.mxu0 0
        %401 = vmatmul.mubr.bf16.gmra.mrb[0].mxu0 %v362
        %v402 = vpop.f32.mrb[0].mxu0
        %v403 = vadd.f32 0.0, %v402
        %v404 = vpop.f32.mrb[0].mxu0
        %v405 = vpop.f32.mrb[0].mxu0
        %v406 = vpop.f32.mrb[0].mxu0
        %407 = vdwg.mxu0
        %409 = vrot.lane.b32.xlu0 %v296, 120
        %v410 = vpop.permute.xlu0 %409
        %412 = vrot.lane.b32.xlu0 %v298, 120
        %v413 = vpop.permute.xlu0 %412
        %v415 = vsel %vm301, %v410, 0
        %v418 = vsel %vm301, %v413, 0
        %420 = vmatprep.subr.bf16.mxu0 0
        %421 = vmatpush1.bf16.xpose.msra.mxu0 %v418
        %422 = vmatprep.subr.bf16.mxu0 0
        %423 = vmatpush1.bf16.xpose.msra.mxu0 0
        %424 = vmatprep.subr.bf16.mxu0 0
        %425 = vmatpush1.bf16.xpose.msra.mxu0 0
        %426 = vmatprep.subr.bf16.mxu0 0
        %427 = vmatpush1.bf16.xpose.msra.mxu0 0
        %428 = vmatprep.subr.bf16.mxu0 0
        %429 = vmatpush1.bf16.xpose.msra.mxu0 0
        %430 = vmatprep.subr.bf16.mxu0 0
        %431 = vmatpush1.bf16.xpose.msra.mxu0 0
        %432 = vmatprep.subr.bf16.mxu0 0
        %433 = vmatpush1.bf16.xpose.msra.mxu0 0
        %434 = vmatprep.subr.bf16.mxu0 0
        %435 = vmatpush1.bf16.xpose.msra.mxu0 0
        %436 = vmatprep.subr.bf16.mxu0 0
        %437 = vmatpush1.bf16.xpose.msra.mxu0 0
        %438 = vmatprep.subr.bf16.mxu0 0
        %439 = vmatpush1.bf16.xpose.msra.mxu0 0
        %440 = vmatprep.subr.bf16.mxu0 0
        %441 = vmatpush1.bf16.xpose.msra.mxu0 0
        %442 = vmatprep.subr.bf16.mxu0 0
        %443 = vmatpush1.bf16.xpose.msra.mxu0 0
        %444 = vmatprep.subr.bf16.mxu0 0
        %445 = vmatpush1.bf16.xpose.msra.mxu0 0
        %446 = vmatprep.subr.bf16.mxu0 0
        %447 = vmatpush1.bf16.xpose.msra.mxu0 0
        %448 = vmatprep.subr.bf16.mxu0 0
        %449 = vmatpush1.bf16.xpose.msra.mxu0 0
        %450 = vmatprep.subr.bf16.mxu0 0
        %451 = vmatpush1.bf16.xpose.msra.mxu0 0
        %452 = vmatprep.mubr.bf16.mxu0 0
        %453 = vmatmul.mubr.bf16.gmra.mrb[0].mxu0 %v415
        %v454 = vpop.f32.mrb[0].mxu0
        %v455 = vadd.f32 0.0, %v454
        %v456 = vpop.f32.mrb[0].mxu0
        %v457 = vpop.f32.mrb[0].mxu0
        %v458 = vpop.f32.mrb[0].mxu0
        %459 = vdwg.mxu0
        %v460 = vsel %vm301, %v455, -inf
        %461 = vmax.xlane.f32.xlu0 %v460
        %v462 = vpop.xlane.xlu0 %461
        %v463 = vsub.f32 %v455, %v462
        %v464 = vmul.f32 %v463, 1.442695
        %v465 = vpow.pop %v464
        %v466 = vsel %vm301, %v465, 0.0
        %467 = vadd.xlane.f32.xlu0 %v466
        %v468 = vpop.xlane.xlu0 %467
        %v469 = vrcp.pop %v468
        %v470 = vmul.f32 %v465, %v469
        %s471 = scalar_lea.vmem %s264, 8 [#allocation2]
        %472 = vst.msk [vmem:[%s471] sm:$0xff] %vm301, %v470
        %v473 = vpack.c.bf16 %v470, %v470
        %475 = vrot.lane.b32.xlu0 %v300, 120
        %v476 = vpop.permute.xlu0 %475
        %v478 = vsel %vm301, %v473, 0
        %v481 = vsel %vm364, %v476, 0
        %483 = vmatprep.subr.bf16.mxu0 0
        %484 = vmatpush1.bf16.msra.mxu0 %v481
        %485 = vmatprep.subr.bf16.mxu0 0
        %486 = vmatpush1.bf16.msra.mxu0 0
        %487 = vmatprep.subr.bf16.mxu0 0
        %488 = vmatpush1.bf16.msra.mxu0 0
        %489 = vmatprep.subr.bf16.mxu0 0
        %490 = vmatpush1.bf16.msra.mxu0 0
        %491 = vmatprep.subr.bf16.mxu0 0
        %492 = vmatpush1.bf16.msra.mxu0 0
        %493 = vmatprep.subr.bf16.mxu0 0
        %494 = vmatpush1.bf16.msra.mxu0 0
        %495 = vmatprep.subr.bf16.mxu0 0
        %496 = vmatpush1.bf16.msra.mxu0 0
        %497 = vmatprep.subr.bf16.mxu0 0
        %498 = vmatpush1.bf16.msra.mxu0 0
        %499 = vmatprep.subr.bf16.mxu0 0
        %500 = vmatpush1.bf16.msra.mxu0 0
        %501 = vmatprep.subr.bf16.mxu0 0
        %502 = vmatpush1.bf16.msra.mxu0 0
        %503 = vmatprep.subr.bf16.mxu0 0
        %504 = vmatpush1.bf16.msra.mxu0 0
        %505 = vmatprep.subr.bf16.mxu0 0
        %506 = vmatpush1.bf16.msra.mxu0 0
        %507 = vmatprep.subr.bf16.mxu0 0
        %508 = vmatpush1.bf16.msra.mxu0 0
        %509 = vmatprep.subr.bf16.mxu0 0
        %510 = vmatpush1.bf16.msra.mxu0 0
        %511 = vmatprep.subr.bf16.mxu0 0
        %512 = vmatpush1.bf16.msra.mxu0 0
        %513 = vmatprep.subr.bf16.mxu0 0
        %514 = vmatpush1.bf16.msra.mxu0 0
        %515 = vmatprep.mubr.bf16.mxu0 0
        %516 = vmatmul.mubr.bf16.gmra.mrb[0].mxu0 %v478
        %v517 = vpop.f32.mrb[0].mxu0
        %v518 = vadd.f32 0.0, %v517
        %v519 = vpop.f32.mrb[0].mxu0
        %v520 = vpop.f32.mrb[0].mxu0
        %v521 = vpop.f32.mrb[0].mxu0
        %522 = vdwg.mxu0
        %523 = vrot.lane.b32.xlu0 %v296, 112
        %v524 = vpop.permute.xlu0 %523
        %525 = vrot.lane.b32.xlu0 %v298, 112
        %v526 = vpop.permute.xlu0 %525
        %v528 = vsel %vm301, %v524, 0
        %v531 = vsel %vm301, %v526, 0
        %533 = vmatprep.subr.bf16.mxu0 0
        %534 = vmatpush1.bf16.xpose.msra.mxu0 %v531
        %535 = vmatprep.subr.bf16.mxu0 0
        %536 = vmatpush1.bf16.xpose.msra.mxu0 0
        %537 = vmatprep.subr.bf16.mxu0 0
        %538 = vmatpush1.bf16.xpose.msra.mxu0 0
        %539 = vmatprep.subr.bf16.mxu0 0
        %540 = vmatpush1.bf16.xpose.msra.mxu0 0
        %541 = vmatprep.subr.bf16.mxu0 0
        %542 = vmatpush1.bf16.xpose.msra.mxu0 0
        %543 = vmatprep.subr.bf16.mxu0 0
        %544 = vmatpush1.bf16.xpose.msra.mxu0 0
        %545 = vmatprep.subr.bf16.mxu0 0
        %546 = vmatpush1.bf16.xpose.msra.mxu0 0
        %547 = vmatprep.subr.bf16.mxu0 0
        %548 = vmatpush1.bf16.xpose.msra.mxu0 0
        %549 = vmatprep.subr.bf16.mxu0 0
        %550 = vmatpush1.bf16.xpose.msra.mxu0 0
        %551 = vmatprep.subr.bf16.mxu0 0
        %552 = vmatpush1.bf16.xpose.msra.mxu0 0
        %553 = vmatprep.subr.bf16.mxu0 0
        %554 = vmatpush1.bf16.xpose.msra.mxu0 0
        %555 = vmatprep.subr.bf16.mxu0 0
        %556 = vmatpush1.bf16.xpose.msra.mxu0 0
        %557 = vmatprep.subr.bf16.mxu0 0
        %558 = vmatpush1.bf16.xpose.msra.mxu0 0
        %559 = vmatprep.subr.bf16.mxu0 0
        %560 = vmatpush1.bf16.xpose.msra.mxu0 0
        %561 = vmatprep.subr.bf16.mxu0 0
        %562 = vmatpush1.bf16.xpose.msra.mxu0 0
        %563 = vmatprep.subr.bf16.mxu0 0
        %564 = vmatpush1.bf16.xpose.msra.mxu0 0
        %565 = vmatprep.mubr.bf16.mxu0 0
        %566 = vmatmul.mubr.bf16.gmra.mrb[0].mxu0 %v528
        %v567 = vpop.f32.mrb[0].mxu0
        %v568 = vadd.f32 0.0, %v567
        %v569 = vpop.f32.mrb[0].mxu0
        %v570 = vpop.f32.mrb[0].mxu0
        %v571 = vpop.f32.mrb[0].mxu0
        %572 = vdwg.mxu0
        %v573 = vsel %vm301, %v568, -inf
        %574 = vmax.xlane.f32.xlu0 %v573
        %v575 = vpop.xlane.xlu0 %574
        %v576 = vsub.f32 %v568, %v575
        %v577 = vmul.f32 %v576, 1.442695
        %v578 = vpow.pop %v577
        %v579 = vsel %vm301, %v578, 0.0
        %580 = vadd.xlane.f32.xlu0 %v579
        %v581 = vpop.xlane.xlu0 %580
        %v582 = vrcp.pop %v581
        %v583 = vmul.f32 %v578, %v582
        %s584 = scalar_lea.vmem %s264, 16 [#allocation2]
        %585 = vst.msk [vmem:[%s584] sm:$0xff] %vm301, %v583
        %v586 = vpack.c.bf16 %v583, %v583
        %587 = vrot.lane.b32.xlu0 %v300, 112
        %v588 = vpop.permute.xlu0 %587
        %v590 = vsel %vm301, %v586, 0
        %v593 = vsel %vm364, %v588, 0
        %595 = vmatprep.subr.bf16.mxu0 0
        %596 = vmatpush1.bf16.msra.mxu0 %v593
        %597 = vmatprep.subr.bf16.mxu0 0
        %598 = vmatpush1.bf16.msra.mxu0 0
        %599 = vmatprep.subr.bf16.mxu0 0
        %600 = vmatpush1.bf16.msra.mxu0 0
        %601 = vmatprep.subr.bf16.mxu0 0
        %602 = vmatpush1.bf16.msra.mxu0 0
        %603 = vmatprep.subr.bf16.mxu0 0
        %604 = vmatpush1.bf16.msra.mxu0 0
        %605 = vmatprep.subr.bf16.mxu0 0
        %606 = vmatpush1.bf16.msra.mxu0 0
        %607 = vmatprep.subr.bf16.mxu0 0
        %608 = vmatpush1.bf16.msra.mxu0 0
        %609 = vmatprep.subr.bf16.mxu0 0
        %610 = vmatpush1.bf16.msra.mxu0 0
        %611 = vmatprep.subr.bf16.mxu0 0
        %612 = vmatpush1.bf16.msra.mxu0 0
        %613 = vmatprep.subr.bf16.mxu0 0
        %614 = vmatpush1.bf16.msra.mxu0 0
        %615 = vmatprep.subr.bf16.mxu0 0
        %616 = vmatpush1.bf16.msra.mxu0 0
        %617 = vmatprep.subr.bf16.mxu0 0
        %618 = vmatpush1.bf16.msra.mxu0 0
        %619 = vmatprep.subr.bf16.mxu0 0
        %620 = vmatpush1.bf16.msra.mxu0 0
        %621 = vmatprep.subr.bf16.mxu0 0
        %622 = vmatpush1.bf16.msra.mxu0 0
        %623 = vmatprep.subr.bf16.mxu0 0
        %624 = vmatpush1.bf16.msra.mxu0 0
        %625 = vmatprep.subr.bf16.mxu0 0
        %626 = vmatpush1.bf16.msra.mxu0 0
        %627 = vmatprep.mubr.bf16.mxu0 0
        %628 = vmatmul.mubr.bf16.gmra.mrb[0].mxu0 %v590
        %v629 = vpop.f32.mrb[0].mxu0
        %v630 = vadd.f32 0.0, %v629
        %v631 = vpop.f32.mrb[0].mxu0
        %v632 = vpop.f32.mrb[0].mxu0
        %v633 = vpop.f32.mrb[0].mxu0
        %634 = vdwg.mxu0
        %635 = vrot.lane.b32.xlu0 %v296, 104
        %v636 = vpop.permute.xlu0 %635
        %637 = vrot.lane.b32.xlu0 %v298, 104
        %v638 = vpop.permute.xlu0 %637
        %v640 = vsel %vm301, %v636, 0
        %v643 = vsel %vm301, %v638, 0
        %645 = vmatprep.subr.bf16.mxu0 0
        %646 = vmatpush1.bf16.xpose.msra.mxu0 %v643
        %647 = vmatprep.subr.bf16.mxu0 0
        %648 = vmatpush1.bf16.xpose.msra.mxu0 0
        %649 = vmatprep.subr.bf16.mxu0 0
        %650 = vmatpush1.bf16.xpose.msra.mxu0 0
        %651 = vmatprep.subr.bf16.mxu0 0
        %652 = vmatpush1.bf16.xpose.msra.mxu0 0
        %653 = vmatprep.subr.bf16.mxu0 0
        %654 = vmatpush1.bf16.xpose.msra.mxu0 0
        %655 = vmatprep.subr.bf16.mxu0 0
        %656 = vmatpush1.bf16.xpose.msra.mxu0 0
        %657 = vmatprep.subr.bf16.mxu0 0
        %658 = vmatpush1.bf16.xpose.msra.mxu0 0
        %659 = vmatprep.subr.bf16.mxu0 0
        %660 = vmatpush1.bf16.xpose.msra.mxu0 0
        %661 = vmatprep.subr.bf16.mxu0 0
        %662 = vmatpush1.bf16.xpose.msra.mxu0 0
        %663 = vmatprep.subr.bf16.mxu0 0
        %664 = vmatpush1.bf16.xpose.msra.mxu0 0
        %665 = vmatprep.subr.bf16.mxu0 0
        %666 = vmatpush1.bf16.xpose.msra.mxu0 0
        %667 = vmatprep.subr.bf16.mxu0 0
        %668 = vmatpush1.bf16.xpose.msra.mxu0 0
        %669 = vmatprep.subr.bf16.mxu0 0
        %670 = vmatpush1.bf16.xpose.msra.mxu0 0
        %671 = vmatprep.subr.bf16.mxu0 0
        %672 = vmatpush1.bf16.xpose.msra.mxu0 0
        %673 = vmatprep.subr.bf16.mxu0 0
        %674 = vmatpush1.bf16.xpose.msra.mxu0 0
        %675 = vmatprep.subr.bf16.mxu0 0
        %676 = vmatpush1.bf16.xpose.msra.mxu0 0
        %677 = vmatprep.mubr.bf16.mxu0 0
        %678 = vmatmul.mubr.bf16.gmra.mrb[0].mxu0 %v640
        %v679 = vpop.f32.mrb[0].mxu0
        %v680 = vadd.f32 0.0, %v679
        %v681 = vpop.f32.mrb[0].mxu0
        %v682 = vpop.f32.mrb[0].mxu0
        %v683 = vpop.f32.mrb[0].mxu0
        %684 = vdwg.mxu0
        %v685 = vsel %vm301, %v680, -inf
        %686 = vmax.xlane.f32.xlu0 %v685
        %v687 = vpop.xlane.xlu0 %686
        %v688 = vsub.f32 %v680, %v687
        %v689 = vmul.f32 %v688, 1.442695
        %v690 = vpow.pop %v689
        %v691 = vsel %vm301, %v690, 0.0
        %692 = vadd.xlane.f32.xlu0 %v691
        %v693 = vpop.xlane.xlu0 %692
        %v694 = vrcp.pop %v693
        %v695 = vmul.f32 %v690, %v694
        %s696 = scalar_lea.vmem %s264, 24 [#allocation2]
        %697 = vst.msk [vmem:[%s696] sm:$0xff] %vm301, %v695
        %v698 = vpack.c.bf16 %v695, %v695
        %699 = vrot.lane.b32.xlu0 %v300, 104
        %v700 = vpop.permute.xlu0 %699
        %v702 = vsel %vm301, %v698, 0
        %v705 = vsel %vm364, %v700, 0
        %707 = vmatprep.subr.bf16.mxu0 0
        %708 = vmatpush1.bf16.msra.mxu0 %v705
        %709 = vmatprep.subr.bf16.mxu0 0
        %710 = vmatpush1.bf16.msra.mxu0 0
        %711 = vmatprep.subr.bf16.mxu0 0
        %712 = vmatpush1.bf16.msra.mxu0 0
        %713 = vmatprep.subr.bf16.mxu0 0
        %714 = vmatpush1.bf16.msra.mxu0 0
        %715 = vmatprep.subr.bf16.mxu0 0
        %716 = vmatpush1.bf16.msra.mxu0 0
        %717 = vmatprep.subr.bf16.mxu0 0
        %718 = vmatpush1.bf16.msra.mxu0 0
        %719 = vmatprep.subr.bf16.mxu0 0
        %720 = vmatpush1.bf16.msra.mxu0 0
        %721 = vmatprep.subr.bf16.mxu0 0
        %722 = vmatpush1.bf16.msra.mxu0 0
        %723 = vmatprep.subr.bf16.mxu0 0
        %724 = vmatpush1.bf16.msra.mxu0 0
        %725 = vmatprep.subr.bf16.mxu0 0
        %726 = vmatpush1.bf16.msra.mxu0 0
        %727 = vmatprep.subr.bf16.mxu0 0
        %728 = vmatpush1.bf16.msra.mxu0 0
        %729 = vmatprep.subr.bf16.mxu0 0
        %730 = vmatpush1.bf16.msra.mxu0 0
        %731 = vmatprep.subr.bf16.mxu0 0
        %732 = vmatpush1.bf16.msra.mxu0 0
        %733 = vmatprep.subr.bf16.mxu0 0
        %734 = vmatpush1.bf16.msra.mxu0 0
        %735 = vmatprep.subr.bf16.mxu0 0
        %736 = vmatpush1.bf16.msra.mxu0 0
        %737 = vmatprep.subr.bf16.mxu0 0
        %738 = vmatpush1.bf16.msra.mxu0 0
        %739 = vmatprep.mubr.bf16.mxu0 0
        %740 = vmatmul.mubr.bf16.gmra.mrb[0].mxu0 %v702
        %v741 = vpop.f32.mrb[0].mxu0
        %v742 = vadd.f32 0.0, %v741
        %v743 = vpop.f32.mrb[0].mxu0
        %v744 = vpop.f32.mrb[0].mxu0
        %v745 = vpop.f32.mrb[0].mxu0
        %746 = vdwg.mxu0
        %748 = vrot.lane.b32.xlu0 %v518, 8
        %v749 = vpop.permute.xlu0 %748
        %752 = vrot.lane.b32.xlu0 %v630, 16
        %v753 = vpop.permute.xlu0 %752
        %756 = vrot.lane.b32.xlu0 %v742, 24
        %v757 = vpop.permute.xlu0 %756
        %v759 = vsel %vm301, %v403, %v749
        %vm760 = vcmask 130048
        %v761 = vsel %vm760, %v759, %v753
        %vm762 = vcmask 195584
        %v763 = vsel %vm762, %v761, %v757
        %vm764 = vcmask 261120
        %765 = vst.msk [vmem:[%s292] sm:$0xff] %vm764, %v763
        %p766 = scmp.lt.s32.totalorder %s23, 1
        %s767 = scalar_select %p766, %s23, 1
        %p768 = scmp.lt.s32.totalorder %s24, 0
        %s769 = scalar_select %p768, %s24, 0
        %s770 = sadd.s32 %s769, %s767
        %s771 = smul.addr %s770, 8
        %s772 = scalar_lea.vmem %s3, %s771
        %s773 = sand.u32 %s153, 1
        %s774 = scalar_lea.sflag [#allocation3], %s773
        %s775 = sand.u32 %s153, 1
        %s776 = smul.addr %s775, 32
        %s777 = scalar_lea.vmem [#allocation2], %s776
        // Predicated region
        $region33: #{transformer_forward.36} parent=31 // pred_check
          %p778 = pneg %p135
        $region34: #{transformer_forward.36} parent=31 // pred_check_branch
          %780 = sbr.rel (%p778) target = $region36
        $region35: #{transformer_forward.36} parent=31 // pred_region
          _
        $region36: #{transformer_forward.36} parent=31 // pred_fallthru
          _
        // Predicated region
        $region37: #{transformer_forward.36} parent=31 // pred_check
          %p781 = pneg %p163
        $region38: #{transformer_forward.36} parent=31 // pred_check_branch
          %783 = sbr.rel (%p781) target = $region40
        $region39: #{transformer_forward.36} parent=31 // pred_region
          %s784 = smul.u32 4, %s24
          %s786 = ssub.s32 512, 512
          %787 = vsyncadd %s774, %s786
          %s788 = smul.addr %s23, 4
          %s789 = sadd.s32 %s784, %s788
          %s790 = smul.addr %s789, 128
          %s791 = scalar_lea.hbm %s4, %s790
          %s792 = sshll.u32 %s777, 4
          %s793 = int_to_ptr.vmem [resolvable:$true] %s792
          %798 = dma.vmem_to_hbm [thread:$0]  %s793, 512, %s791, %s774, 128, 128, 8
        $region40: #{transformer_forward.36} parent=31 // pred_fallthru
          _
      $region32: #{transformer_forward.36} parent=5 // pred_fallthru
        _
      %p799 = scmp.le.s32.totalorder 2, %s14
      // Predicated region
      $region41: #{transformer_forward.36} parent=5 // pred_check
        %p800 = pneg %p799
      $region42: #{transformer_forward.36} parent=5 // pred_check_branch
        %802 = sbr.rel (%p800) target = $region44
      $region43: #{transformer_forward.36} parent=5 // pred_region
        %s803 = ssub.s32 %s14, 2
        // Predicated region
        $region45: #{transformer_forward.36} parent=43 // pred_check
          %p804 = pneg %p141
        $region46: #{transformer_forward.36} parent=43 // pred_check_branch
          %806 = sbr.rel (%p804) target = $region48
        $region47: #{transformer_forward.36} parent=43 // pred_region
          %p807 = scmp.lt.s32.totalorder %s25, 1
          %s808 = scalar_select %p807, %s25, 1
          %p809 = scmp.lt.s32.totalorder %s26, 0
          %s810 = scalar_select %p809, %s26, 0
          %s811 = sadd.s32 %s810, %s808
          %s812 = smul.addr %s811, 8
          %s813 = scalar_lea.vmem %s3, %s812
        $region48: #{transformer_forward.36} parent=43 // pred_fallthru
          _
        // Predicated region
        $region49: #{transformer_forward.36} parent=43 // pred_check
          %p814 = pneg %p169
        $region50: #{transformer_forward.36} parent=43 // pred_check_branch
          %816 = sbr.rel (%p814) target = $region52
        $region51: #{transformer_forward.36} parent=43 // pred_region
          %s817 = sand.u32 %s154, 1
          %s818 = scalar_lea.sflag [#allocation3], %s817
          %s819 = sand.u32 %s154, 1
          %s820 = smul.addr %s819, 32
          %s821 = scalar_lea.vmem [#allocation2], %s820
          %822 = dma.done %s818, 512
        $region52: #{transformer_forward.36} parent=43 // pred_fallthru
          _
      $region44: #{transformer_forward.36} parent=5 // pred_fallthru
        _
    $region6: #{transformer_forward.36} parent=1 // loop_footer
      %s18 = sadd.s32 1, %s14
    $region7: #{transformer_forward.36} parent=1 // loop_footer_branch
      %13 = sbr.rel target = $region3
    $region8: #{transformer_forward.36} parent=1 // loop_exit
      _
    %823 = vsyncpa [#allocation3], 1
    %s824 = scalar_lea.sflag [#allocation3], 1
    %825 = vsyncpa %s824, 1

// kernel: transformer_forward.69
$region0: #{transformer_forward.69}
  #allocation0 [shape = 'u32[]', space=smem, size = 0x4, offset = 0x4, fixed_abs, tag = 'smem constant byte address 0x4 - core index']
  #allocation1 [shape = 'u32[144,128]{1,0:T(1,128)}', space=vmem, size = 0x12000, scoped, tag = 'internal scratch']
  #allocation2 [shape = 'f32[16,64]{1,0:T(8,128)}', space=vmem, size = 0x2000, scoped, tag = 'scratch operand']
  %s0 = inlined_call_operand.vmem [shape: f32[16,32], index: 0, kind: input, shape index: {}]
  %s1 = inlined_call_operand.vmem [shape: bf16[32,64], index: 1, kind: input, shape index: {}]
  %s2 = inlined_call_operand.vmem [shape: f32[1,64], index: 2, kind: input, shape index: {}]
  %s3 = inlined_call_operand.hbm [shape: f32[16,64], index: 3, kind: output, shape index: {}]
  %s4 = sld [smem:[#allocation0]]
  $region30: #{transformer_forward.69} parent=0
    _
  %s6 = ssub.s32 1, %s4
  %s7 = scalar_select 0, %s6, %s4
  $region1: #{transformer_forward.69} parent=0
    #allocation3 [shape = 'u8[8192]{0}', space=vmem, size = 0x2000, scoped, tag = 'output window, operand 0, single buffered']
    #allocation4 [shape = 's32[1]{0}', space=sflag, size = 0x4, scoped, tag = 'scoped memory for transformer_forward.69']
    %8 = vsyncpa [#allocation4], 0
    // Predicated region
    $region2: #{transformer_forward.69} parent=1 // pred_check
      _
    $region3: #{transformer_forward.69} parent=1 // pred_check_branch
      %10 = sbr.rel (0) target = $region5
    $region4: #{transformer_forward.69} parent=1 // pred_region
      _
    $region5: #{transformer_forward.69} parent=1 // pred_fallthru
      _
    // Predicated region
    $region6: #{transformer_forward.69} parent=1 // pred_check
      _
    $region7: #{transformer_forward.69} parent=1 // pred_check_branch
      %12 = sbr.rel (0) target = $region9
    $region8: #{transformer_forward.69} parent=1 // pred_region
      _
    $region9: #{transformer_forward.69} parent=1 // pred_fallthru
      _
    // Predicated region
    $region10: #{transformer_forward.69} parent=1 // pred_check
      _
    $region11: #{transformer_forward.69} parent=1 // pred_check_branch
      %14 = sbr.rel (0) target = $region13
    $region12: #{transformer_forward.69} parent=1 // pred_region
      _
    $region13: #{transformer_forward.69} parent=1 // pred_fallthru
      _
    %p16 = scmp.eq.s32.totalorder 0, 0
    // Predicated region
    $region14: #{transformer_forward.69} parent=1 // pred_check
      %p17 = pneg %p16
    $region15: #{transformer_forward.69} parent=1 // pred_check_branch
      %19 = sbr.rel (%p17) target = $region17
    $region16: #{transformer_forward.69} parent=1 // pred_region
      %vm20 = vcmask 523264
      %21 = vst.msk [vmem:[#allocation2] sm:$0xff] %vm20, 0.0
      %22 = vst.msk [vmem:[#allocation2 + $0x8] sm:$0xff] %vm20, 0.0
    $region17: #{transformer_forward.69} parent=1 // pred_fallthru
      _
    %v23 = vld [vmem:[%s0] sm:$0xff]
    %v24 = vld [vmem:[%s0 + $0x8] sm:$0xff]
    %v25 = vpack.c.bf16 %v24, %v23
    %v26 = vld [vmem:[#allocation2] sm:$0xff]
    %v27 = vld [vmem:[#allocation2 + $0x8] sm:$0xff]
    %v28 = vld [vmem:[%s1] sm:$0xf]
    %v29 = vld [vmem:[%s1 + $0x4] sm:$0xf]
    %v30 = vld [vmem:[%s1 + $0x8] sm:$0xf]
    %v31 = vld [vmem:[%s1 + $0xc] sm:$0xf]
    %v36 = vunpack.c.l.b16 %v28
    %v37 = vunpack.c.l.b16 %v29
    %v38 = vunpack.c.l.b16 %v30
    %v39 = vunpack.c.l.b16 %v31
    %v40 = vpack.c.b16 %v37, %v36
    %v41 = vpack.c.b16 %v39, %v38
    %vm44 = vcmask 261120
    %v46 = vsel %vm44, %v25, 0
    %48 = vmatprep.subr.bf16.mxu0 0
    %49 = vmatpush1.bf16.msra.mxu0 %v40
    %50 = vmatprep.subr.bf16.mxu0 0
    %51 = vmatpush1.bf16.msra.mxu0 %v41
    %52 = vmatprep.subr.bf16.mxu0 0
    %53 = vmatpush1.bf16.msra.mxu0 0
    %54 = vmatprep.subr.bf16.mxu0 0
    %55 = vmatpush1.bf16.msra.mxu0 0
    %56 = vmatprep.subr.bf16.mxu0 0
    %57 = vmatpush1.bf16.msra.mxu0 0
    %58 = vmatprep.subr.bf16.mxu0 0
    %59 = vmatpush1.bf16.msra.mxu0 0
    %60 = vmatprep.subr.bf16.mxu0 0
    %61 = vmatpush1.bf16.msra.mxu0 0
    %62 = vmatprep.subr.bf16.mxu0 0
    %63 = vmatpush1.bf16.msra.mxu0 0
    %64 = vmatprep.subr.bf16.mxu0 0
    %65 = vmatpush1.bf16.msra.mxu0 0
    %66 = vmatprep.subr.bf16.mxu0 0
    %67 = vmatpush1.bf16.msra.mxu0 0
    %68 = vmatprep.subr.bf16.mxu0 0
    %69 = vmatpush1.bf16.msra.mxu0 0
    %70 = vmatprep.subr.bf16.mxu0 0
    %71 = vmatpush1.bf16.msra.mxu0 0
    %72 = vmatprep.subr.bf16.mxu0 0
    %73 = vmatpush1.bf16.msra.mxu0 0
    %74 = vmatprep.subr.bf16.mxu0 0
    %75 = vmatpush1.bf16.msra.mxu0 0
    %76 = vmatprep.subr.bf16.mxu0 0
    %77 = vmatpush1.bf16.msra.mxu0 0
    %78 = vmatprep.subr.bf16.mxu0 0
    %79 = vmatpush1.bf16.msra.mxu0 0
    %80 = vmatprep.mubr.bf16.mxu0 0
    %81 = vmatmul.mubr.bf16.gmra.mrb[0].mxu0 %v46
    %v82 = vpop.f32.mrb[0].mxu0
    %v83 = vadd.f32 0.0, %v82
    %v84 = vpop.f32.mrb[0].mxu0
    %v85 = vpop.f32.mrb[0].mxu0
    %v86 = vadd.f32 0.0, %v85
    %v87 = vpop.f32.mrb[0].mxu0
    %88 = vdwg.mxu0
    %v89 = vadd.f32 %v26, %v83
    %v90 = vadd.f32 %v27, %v86
    %vm91 = vcmask 523264
    %92 = vst.msk [vmem:[#allocation2] sm:$0xff] %vm91, %v89
    %93 = vst.msk [vmem:[#allocation2 + $0x8] sm:$0xff] %vm91, %v90
    // Predicated region
    $region18: #{transformer_forward.69} parent=1 // pred_check
      %p94 = pneg %p16
    $region19: #{transformer_forward.69} parent=1 // pred_check_branch
      %96 = sbr.rel (%p94) target = $region21
    $region20: #{transformer_forward.69} parent=1 // pred_region
      %v97 = vld [vmem:[#allocation2] sm:$0xff]
      %v98 = vld [vmem:[#allocation2 + $0x8] sm:$0xff]
      %v99 = vld [vmem:[%s2] sm:$0x1]
      %v101 = vlaneseq
      %v102 = vshrl.u32 %v101, 7
      %v103 = vsub.s32 0, %v102
      %v104 = vrot.slane %v99, %v103
      %v106 = vadd.f32 %v97, %v104
      %v107 = vadd.f32 %v98, %v104
      %108 = vst.msk [vmem:[#allocation3] sm:$0xff] %vm91, %v106
      %109 = vst.msk [vmem:[#allocation3 + $0x8] sm:$0xff] %vm91, %v107
    $region21: #{transformer_forward.69} parent=1 // pred_fallthru
      _
    // Predicated region
    $region22: #{transformer_forward.69} parent=1 // pred_check
      _
    $region23: #{transformer_forward.69} parent=1 // pred_check_branch
      %111 = sbr.rel (0) target = $region25
    $region24: #{transformer_forward.69} parent=1 // pred_region
      %s113 = ssub.s32 256, 256
      %114 = vsyncadd [#allocation4], %s113
      %s115 = sshll.u32 [#allocation3], 4
      %s116 = int_to_ptr.vmem [resolvable:$true] %s115
      %121 = dma.vmem_to_hbm [thread:$0]  %s116, 256, %s3, [#allocation4], 128, 128, 8
    $region25: #{transformer_forward.69} parent=1 // pred_fallthru
      _
    // Predicated region
    $region26: #{transformer_forward.69} parent=1 // pred_check
      _
    $region27: #{transformer_forward.69} parent=1 // pred_check_branch
      %123 = sbr.rel (0) target = $region29
    $region28: #{transformer_forward.69} parent=1 // pred_region
      %124 = dma.done [#allocation4], 256
    $region29: #{transformer_forward.69} parent=1 // pred_fallthru
      _
    %125 = vsyncpa [#allocation4], 1

// kernel: transformer_forward.52
$region0: #{transformer_forward.52}
  #allocation0 [shape = 'u32[]', space=smem, size = 0x4, offset = 0x4, fixed_abs, tag = 'smem constant byte address 0x4 - core index']
  #allocation1 [shape = 'u32[144,128]{1,0:T(1,128)}', space=vmem, size = 0x12000, scoped, tag = 'internal scratch']
  #allocation2 [shape = 'f32[16,32]{1,0:T(8,128)}', space=vmem, size = 0x2000, scoped, tag = 'scratch operand']
  #allocation3 [shape = 'f32[16,32]{1,0:T(8,128)}', space=vmem, size = 0x2000, scoped, tag = 'scratch operand']
  %s0 = inlined_call_operand.vmem [shape: f32[16,32], index: 0, kind: input, shape index: {}]
  %s1 = inlined_call_operand.vmem [shape: bf16[32,32], index: 1, kind: input, shape index: {}]
  %s2 = inlined_call_operand.vmem [shape: bf16[32,32], index: 2, kind: input, shape index: {}]
  %s3 = inlined_call_operand.vmem [shape: f32[1,32], index: 3, kind: input, shape index: {}]
  %s4 = inlined_call_operand.vmem [shape: f32[1,32], index: 4, kind: input, shape index: {}]
  %s5 = inlined_call_operand.vmem [shape: f32[16,32], index: 5, kind: output, shape index: {0}]
  %s6 = inlined_call_operand.vmem [shape: f32[16,32], index: 6, kind: output, shape index: {1}]
  %7 = xla_tuple %s5, %s6
  %s8 = sld [smem:[#allocation0]]
  $region46: #{transformer_forward.52} parent=0
    _
  %s10 = ssub.s32 1, %s8
  %s11 = scalar_select 0, %s10, %s8
  // Predicated region
  $region2: #{transformer_forward.52} parent=0 // pred_check
    _
  $region3: #{transformer_forward.52} parent=0 // pred_check_branch
    %13 = sbr.rel (0) target = $region5
  $region4: #{transformer_forward.52} parent=0 // pred_region
    _
  $region5: #{transformer_forward.52} parent=0 // pred_fallthru
    _
  // Predicated region
  $region6: #{transformer_forward.52} parent=0 // pred_check
    _
  $region7: #{transformer_forward.52} parent=0 // pred_check_branch
    %15 = sbr.rel (0) target = $region9
  $region8: #{transformer_forward.52} parent=0 // pred_region
    _
  $region9: #{transformer_forward.52} parent=0 // pred_fallthru
    _
  // Predicated region
  $region10: #{transformer_forward.52} parent=0 // pred_check
    _
  $region11: #{transformer_forward.52} parent=0 // pred_check_branch
    %17 = sbr.rel (0) target = $region13
  $region12: #{transformer_forward.52} parent=0 // pred_region
    _
  $region13: #{transformer_forward.52} parent=0 // pred_fallthru
    _
  // Predicated region
  $region14: #{transformer_forward.52} parent=0 // pred_check
    _
  $region15: #{transformer_forward.52} parent=0 // pred_check_branch
    %19 = sbr.rel (0) target = $region17
  $region16: #{transformer_forward.52} parent=0 // pred_region
    _
  $region17: #{transformer_forward.52} parent=0 // pred_fallthru
    _
  // Predicated region
  $region18: #{transformer_forward.52} parent=0 // pred_check
    _
  $region19: #{transformer_forward.52} parent=0 // pred_check_branch
    %21 = sbr.rel (0) target = $region21
  $region20: #{transformer_forward.52} parent=0 // pred_region
    _
  $region21: #{transformer_forward.52} parent=0 // pred_fallthru
    _
  %p23 = scmp.eq.s32.totalorder 0, 0
  // Predicated region
  $region22: #{transformer_forward.52} parent=0 // pred_check
    %p24 = pneg %p23
  $region23: #{transformer_forward.52} parent=0 // pred_check_branch
    %26 = sbr.rel (%p24) target = $region25
  $region24: #{transformer_forward.52} parent=0 // pred_region
    %vm27 = vcmask 261120
    %28 = vst.msk [vmem:[#allocation2] sm:$0xff] %vm27, 0.0
    %29 = vst.msk [vmem:[#allocation2 + $0x8] sm:$0xff] %vm27, 0.0
    %30 = vst.msk [vmem:[#allocation3] sm:$0xff] %vm27, 0.0
    %31 = vst.msk [vmem:[#allocation3 + $0x8] sm:$0xff] %vm27, 0.0
  $region25: #{transformer_forward.52} parent=0 // pred_fallthru
    _
  %v32 = vld [vmem:[%s0] sm:$0xff]
  %v33 = vld [vmem:[%s0 + $0x8] sm:$0xff]
  %v34 = vpack.c.bf16 %v33, %v32
  %v35 = vld [vmem:[#allocation2] sm:$0xff]
  %v36 = vld [vmem:[#allocation2 + $0x8] sm:$0xff]
  %v37 = vld [vmem:[%s1] sm:$0xf]
  %v38 = vld [vmem:[%s1 + $0x4] sm:$0xf]
  %v39 = vld [vmem:[%s1 + $0x8] sm:$0xf]
  %v40 = vld [vmem:[%s1 + $0xc] sm:$0xf]
  %v45 = vunpack.c.l.b16 %v37
  %v46 = vunpack.c.l.b16 %v38
  %v47 = vunpack.c.l.b16 %v39
  %v48 = vunpack.c.l.b16 %v40
  %v49 = vpack.c.b16 %v46, %v45
  %v50 = vpack.c.b16 %v48, %v47
  %vm53 = vcmask 261120
  %v55 = vsel %vm53, %v34, 0
  %57 = vmatprep.subr.bf16.mxu0 0
  %58 = vmatpush1.bf16.msra.mxu0 %v49
  %59 = vmatprep.subr.bf16.mxu0 0
  %60 = vmatpush1.bf16.msra.mxu0 %v50
  %61 = vmatprep.subr.bf16.mxu0 0
  %62 = vmatpush1.bf16.msra.mxu0 0
  %63 = vmatprep.subr.bf16.mxu0 0
  %64 = vmatpush1.bf16.msra.mxu0 0
  %65 = vmatprep.subr.bf16.mxu0 0
  %66 = vmatpush1.bf16.msra.mxu0 0
  %67 = vmatprep.subr.bf16.mxu0 0
  %68 = vmatpush1.bf16.msra.mxu0 0
  %69 = vmatprep.subr.bf16.mxu0 0
  %70 = vmatpush1.bf16.msra.mxu0 0
  %71 = vmatprep.subr.bf16.mxu0 0
  %72 = vmatpush1.bf16.msra.mxu0 0
  %73 = vmatprep.subr.bf16.mxu0 0
  %74 = vmatpush1.bf16.msra.mxu0 0
  %75 = vmatprep.subr.bf16.mxu0 0
  %76 = vmatpush1.bf16.msra.mxu0 0
  %77 = vmatprep.subr.bf16.mxu0 0
  %78 = vmatpush1.bf16.msra.mxu0 0
  %79 = vmatprep.subr.bf16.mxu0 0
  %80 = vmatpush1.bf16.msra.mxu0 0
  %81 = vmatprep.subr.bf16.mxu0 0
  %82 = vmatpush1.bf16.msra.mxu0 0
  %83 = vmatprep.subr.bf16.mxu0 0
  %84 = vmatpush1.bf16.msra.mxu0 0
  %85 = vmatprep.subr.bf16.mxu0 0
  %86 = vmatpush1.bf16.msra.mxu0 0
  %87 = vmatprep.subr.bf16.mxu0 0
  %88 = vmatpush1.bf16.msra.mxu0 0
  %89 = vmatprep.mubr.bf16.mxu0 0
  %90 = vmatmul.mubr.bf16.gmra.mrb[0].mxu0 %v55
  %v91 = vpop.f32.mrb[0].mxu0
  %v92 = vadd.f32 0.0, %v91
  %v93 = vpop.f32.mrb[0].mxu0
  %v94 = vpop.f32.mrb[0].mxu0
  %v95 = vadd.f32 0.0, %v94
  %v96 = vpop.f32.mrb[0].mxu0
  %97 = vdwg.mxu0
  %v98 = vadd.f32 %v35, %v92
  %v99 = vadd.f32 %v36, %v95
  %100 = vst.msk [vmem:[#allocation2] sm:$0xff] %vm53, %v98
  %101 = vst.msk [vmem:[#allocation2 + $0x8] sm:$0xff] %vm53, %v99
  %v102 = vld [vmem:[#allocation3] sm:$0xff]
  %v103 = vld [vmem:[#allocation3 + $0x8] sm:$0xff]
  %v104 = vld [vmem:[%s2] sm:$0xf]
  %v105 = vld [vmem:[%s2 + $0x4] sm:$0xf]
  %v106 = vld [vmem:[%s2 + $0x8] sm:$0xf]
  %v107 = vld [vmem:[%s2 + $0xc] sm:$0xf]
  %v112 = vunpack.c.l.b16 %v104
  %v113 = vunpack.c.l.b16 %v105
  %v114 = vunpack.c.l.b16 %v106
  %v115 = vunpack.c.l.b16 %v107
  %v116 = vpack.c.b16 %v113, %v112
  %v117 = vpack.c.b16 %v115, %v114
  %120 = vmatprep.subr.bf16.mxu0 0
  %121 = vmatpush1.bf16.msra.mxu0 %v116
  %122 = vmatprep.subr.bf16.mxu0 0
  %123 = vmatpush1.bf16.msra.mxu0 %v117
  %124 = vmatprep.subr.bf16.mxu0 0
  %125 = vmatpush1.bf16.msra.mxu0 0
  %126 = vmatprep.subr.bf16.mxu0 0
  %127 = vmatpush1.bf16.msra.mxu0 0
  %128 = vmatprep.subr.bf16.mxu0 0
  %129 = vmatpush1.bf16.msra.mxu0 0
  %130 = vmatprep.subr.bf16.mxu0 0
  %131 = vmatpush1.bf16.msra.mxu0 0
  %132 = vmatprep.subr.bf16.mxu0 0
  %133 = vmatpush1.bf16.msra.mxu0 0
  %134 = vmatprep.subr.bf16.mxu0 0
  %135 = vmatpush1.bf16.msra.mxu0 0
  %136 = vmatprep.subr.bf16.mxu0 0
  %137 = vmatpush1.bf16.msra.mxu0 0
  %138 = vmatprep.subr.bf16.mxu0 0
  %139 = vmatpush1.bf16.msra.mxu0 0
  %140 = vmatprep.subr.bf16.mxu0 0
  %141 = vmatpush1.bf16.msra.mxu0 0
  %142 = vmatprep.subr.bf16.mxu0 0
  %143 = vmatpush1.bf16.msra.mxu0 0
  %144 = vmatprep.subr.bf16.mxu0 0
  %145 = vmatpush1.bf16.msra.mxu0 0
  %146 = vmatprep.subr.bf16.mxu0 0
  %147 = vmatpush1.bf16.msra.mxu0 0
  %148 = vmatprep.subr.bf16.mxu0 0
  %149 = vmatpush1.bf16.msra.mxu0 0
  %150 = vmatprep.subr.bf16.mxu0 0
  %151 = vmatpush1.bf16.msra.mxu0 0
  %152 = vmatprep.mubr.bf16.mxu0 0
  %153 = vmatmul.mubr.bf16.gmra.mrb[0].mxu0 %v55
  %v154 = vpop.f32.mrb[0].mxu0
  %v155 = vadd.f32 0.0, %v154
  %v156 = vpop.f32.mrb[0].mxu0
  %v157 = vpop.f32.mrb[0].mxu0
  %v158 = vadd.f32 0.0, %v157
  %v159 = vpop.f32.mrb[0].mxu0
  %160 = vdwg.mxu0
  %v161 = vadd.f32 %v102, %v155
  %v162 = vadd.f32 %v103, %v158
  %163 = vst.msk [vmem:[#allocation3] sm:$0xff] %vm53, %v161
  %164 = vst.msk [vmem:[#allocation3 + $0x8] sm:$0xff] %vm53, %v162
  // Predicated region
  $region26: #{transformer_forward.52} parent=0 // pred_check
    %p165 = pneg %p23
  $region27: #{transformer_forward.52} parent=0 // pred_check_branch
    %167 = sbr.rel (%p165) target = $region29
  $region28: #{transformer_forward.52} parent=0 // pred_region
    %v168 = vld [vmem:[#allocation2] sm:$0xff]
    %v169 = vld [vmem:[#allocation2 + $0x8] sm:$0xff]
    %v170 = vld [vmem:[%s3] sm:$0x1]
    %v172 = vlaneseq
    %v173 = vshrl.u32 %v172, 7
    %v174 = vsub.s32 0, %v173
    %v175 = vrot.slane %v170, %v174
    %v177 = vadd.f32 %v168, %v175
    %v178 = vadd.f32 %v169, %v175
    %179 = vst.msk [vmem:[%s5] sm:$0xff] %vm53, %v177
    %180 = vst.msk [vmem:[%s5 + $0x8] sm:$0xff] %vm53, %v178
    %v181 = vld [vmem:[#allocation3] sm:$0xff]
    %v182 = vld [vmem:[#allocation3 + $0x8] sm:$0xff]
    %v183 = vld [vmem:[%s4] sm:$0x1]
    %v185 = vlaneseq
    %v186 = vshrl.u32 %v185, 7
    %v187 = vsub.s32 0, %v186
    %v188 = vrot.slane %v183, %v187
    %v190 = vadd.f32 %v181, %v188
    %v191 = vadd.f32 %v182, %v188
    %192 = vst.msk [vmem:[%s6] sm:$0xff] %vm53, %v190
    %193 = vst.msk [vmem:[%s6 + $0x8] sm:$0xff] %vm53, %v191
  $region29: #{transformer_forward.52} parent=0 // pred_fallthru
    _
  // Predicated region
  $region30: #{transformer_forward.52} parent=0 // pred_check
    _
  $region31: #{transformer_forward.52} parent=0 // pred_check_branch
    %195 = sbr.rel (0) target = $region33
  $region32: #{transformer_forward.52} parent=0 // pred_region
    _
  $region33: #{transformer_forward.52} parent=0 // pred_fallthru
    _
  // Predicated region
  $region34: #{transformer_forward.52} parent=0 // pred_check
    _
  $region35: #{transformer_forward.52} parent=0 // pred_check_branch
    %197 = sbr.rel (0) target = $region37
  $region36: #{transformer_forward.52} parent=0 // pred_region
    _
  $region37: #{transformer_forward.52} parent=0 // pred_fallthru
    _
  // Predicated region
  $region38: #{transformer_forward.52} parent=0 // pred_check
    _
  $region39: #{transformer_forward.52} parent=0 // pred_check_branch
    %199 = sbr.rel (0) target = $region41
  $region40: #{transformer_forward.52} parent=0 // pred_region
    _
  $region41: #{transformer_forward.52} parent=0 // pred_fallthru
    _
  // Predicated region
  $region42: #{transformer_forward.52} parent=0 // pred_check
    _
  $region43: #{transformer_forward.52} parent=0 // pred_check_branch
    %201 = sbr.rel (0) target = $region45
  $region44: #{transformer_forward.52} parent=0 // pred_region
    _
  $region45: #{transformer_forward.52} parent=0 // pred_fallthru
    _

// kernel: transformer_forward.39
$region0: #{transformer_forward.39}
  #allocation0 [shape = 'u32[]', space=smem, size = 0x4, offset = 0x4, fixed_abs, tag = 'smem constant byte address 0x4 - core index']
  #allocation1 [shape = 'u32[144,128]{1,0:T(1,128)}', space=vmem, size = 0x12000, scoped, tag = 'internal scratch']
  #allocation2 [shape = 'f32[16,32]{1,0:T(8,128)}', space=vmem, size = 0x2000, scoped, tag = 'scratch operand']
  %s0 = inlined_call_operand.vmem [shape: f32[16,32], index: 0, kind: input, shape index: {}]
  %s1 = inlined_call_operand.vmem [shape: bf16[32,64], index: 1, kind: input, shape index: {}]
  %s2 = inlined_call_operand.vmem [shape: f32[1,64], index: 2, kind: input, shape index: {}]
  %s3 = inlined_call_operand.vmem [shape: bf16[64,32], index: 3, kind: input, shape index: {}]
  %s4 = inlined_call_operand.vmem [shape: f32[1,32], index: 4, kind: input, shape index: {}]
  %s5 = inlined_call_operand.vmem [shape: f32[16,32], index: 5, kind: output, shape index: {}]
  %s6 = sld [smem:[#allocation0]]
  $region38: #{transformer_forward.39} parent=0
    _
  %s8 = ssub.s32 1, %s6
  %s9 = scalar_select 0, %s8, %s6
  // Predicated region
  $region2: #{transformer_forward.39} parent=0 // pred_check
    _
  $region3: #{transformer_forward.39} parent=0 // pred_check_branch
    %11 = sbr.rel (0) target = $region5
  $region4: #{transformer_forward.39} parent=0 // pred_region
    _
  $region5: #{transformer_forward.39} parent=0 // pred_fallthru
    _
  // Predicated region
  $region6: #{transformer_forward.39} parent=0 // pred_check
    _
  $region7: #{transformer_forward.39} parent=0 // pred_check_branch
    %13 = sbr.rel (0) target = $region9
  $region8: #{transformer_forward.39} parent=0 // pred_region
    _
  $region9: #{transformer_forward.39} parent=0 // pred_fallthru
    _
  // Predicated region
  $region10: #{transformer_forward.39} parent=0 // pred_check
    _
  $region11: #{transformer_forward.39} parent=0 // pred_check_branch
    %15 = sbr.rel (0) target = $region13
  $region12: #{transformer_forward.39} parent=0 // pred_region
    _
  $region13: #{transformer_forward.39} parent=0 // pred_fallthru
    _
  // Predicated region
  $region14: #{transformer_forward.39} parent=0 // pred_check
    _
  $region15: #{transformer_forward.39} parent=0 // pred_check_branch
    %17 = sbr.rel (0) target = $region17
  $region16: #{transformer_forward.39} parent=0 // pred_region
    _
  $region17: #{transformer_forward.39} parent=0 // pred_fallthru
    _
  // Predicated region
  $region18: #{transformer_forward.39} parent=0 // pred_check
    _
  $region19: #{transformer_forward.39} parent=0 // pred_check_branch
    %19 = sbr.rel (0) target = $region21
  $region20: #{transformer_forward.39} parent=0 // pred_region
    _
  $region21: #{transformer_forward.39} parent=0 // pred_fallthru
    _
  %p21 = scmp.eq.s32.totalorder 0, 0
  // Predicated region
  $region22: #{transformer_forward.39} parent=0 // pred_check
    %p22 = pneg %p21
  $region23: #{transformer_forward.39} parent=0 // pred_check_branch
    %24 = sbr.rel (%p22) target = $region25
  $region24: #{transformer_forward.39} parent=0 // pred_region
    %vm25 = vcmask 261120
    %26 = vst.msk [vmem:[#allocation2] sm:$0xff] %vm25, 0.0
    %27 = vst.msk [vmem:[#allocation2 + $0x8] sm:$0xff] %vm25, 0.0
  $region25: #{transformer_forward.39} parent=0 // pred_fallthru
    _
  %v28 = vld [vmem:[%s0] sm:$0xff]
  %v29 = vld [vmem:[%s0 + $0x8] sm:$0xff]
  %v30 = vpack.c.bf16 %v29, %v28
  %v31 = vld [vmem:[%s1] sm:$0xf]
  %v32 = vld [vmem:[%s1 + $0x4] sm:$0xf]
  %v33 = vld [vmem:[%s1 + $0x8] sm:$0xf]
  %v34 = vld [vmem:[%s1 + $0xc] sm:$0xf]
  %v35 = vld [vmem:[%s2] sm:$0x1]
  %v37 = vlaneseq
  %v38 = vshrl.u32 %v37, 7
  %v39 = vsub.s32 0, %v38
  %v40 = vrot.slane %v35, %v39
  %v46 = vunpack.c.l.b16 %v31
  %v47 = vunpack.c.l.b16 %v32
  %v48 = vunpack.c.l.b16 %v33
  %v49 = vunpack.c.l.b16 %v34
  %v50 = vpack.c.b16 %v47, %v46
  %v51 = vpack.c.b16 %v49, %v48
  %vm54 = vcmask 261120
  %v56 = vsel %vm54, %v30, 0
  %58 = vmatprep.subr.bf16.mxu0 0
  %59 = vmatpush1.bf16.msra.mxu0 %v50
  %60 = vmatprep.subr.bf16.mxu0 0
  %61 = vmatpush1.bf16.msra.mxu0 %v51
  %62 = vmatprep.subr.bf16.mxu0 0
  %63 = vmatpush1.bf16.msra.mxu0 0
  %64 = vmatprep.subr.bf16.mxu0 0
  %65 = vmatpush1.bf16.msra.mxu0 0
  %66 = vmatprep.subr.bf16.mxu0 0
  %67 = vmatpush1.bf16.msra.mxu0 0
  %68 = vmatprep.subr.bf16.mxu0 0
  %69 = vmatpush1.bf16.msra.mxu0 0
  %70 = vmatprep.subr.bf16.mxu0 0
  %71 = vmatpush1.bf16.msra.mxu0 0
  %72 = vmatprep.subr.bf16.mxu0 0
  %73 = vmatpush1.bf16.msra.mxu0 0
  %74 = vmatprep.subr.bf16.mxu0 0
  %75 = vmatpush1.bf16.msra.mxu0 0
  %76 = vmatprep.subr.bf16.mxu0 0
  %77 = vmatpush1.bf16.msra.mxu0 0
  %78 = vmatprep.subr.bf16.mxu0 0
  %79 = vmatpush1.bf16.msra.mxu0 0
  %80 = vmatprep.subr.bf16.mxu0 0
  %81 = vmatpush1.bf16.msra.mxu0 0
  %82 = vmatprep.subr.bf16.mxu0 0
  %83 = vmatpush1.bf16.msra.mxu0 0
  %84 = vmatprep.subr.bf16.mxu0 0
  %85 = vmatpush1.bf16.msra.mxu0 0
  %86 = vmatprep.subr.bf16.mxu0 0
  %87 = vmatpush1.bf16.msra.mxu0 0
  %88 = vmatprep.subr.bf16.mxu0 0
  %89 = vmatpush1.bf16.msra.mxu0 0
  %90 = vmatprep.mubr.bf16.mxu0 0
  %91 = vmatmul.mubr.bf16.gmra.mrb[0].mxu0 %v56
  %v92 = vpop.f32.mrb[0].mxu0
  %v93 = vadd.f32 %v40, %v92
  %v94 = vpop.f32.mrb[0].mxu0
  %v95 = vpop.f32.mrb[0].mxu0
  %v96 = vadd.f32 %v40, %v95
  %v97 = vpop.f32.mrb[0].mxu0
  %98 = vdwg.mxu0
  %v99 = vmax.f32 %v93, 0.0
  %v100 = vmax.f32 %v96, 0.0
  %v101 = vld [vmem:[#allocation2] sm:$0xff]
  %v102 = vld [vmem:[#allocation2 + $0x8] sm:$0xff]
  %v103 = vpack.c.bf16 %v100, %v99
  %v104 = vld [vmem:[%s3] sm:$0xf]
  %v105 = vld [vmem:[%s3 + $0x4] sm:$0xf]
  %v106 = vld [vmem:[%s3 + $0x8] sm:$0xf]
  %v107 = vld [vmem:[%s3 + $0xc] sm:$0xf]
  %v108 = vld [vmem:[%s3 + $0x10] sm:$0xf]
  %v109 = vld [vmem:[%s3 + $0x14] sm:$0xf]
  %v110 = vld [vmem:[%s3 + $0x18] sm:$0xf]
  %v111 = vld [vmem:[%s3 + $0x1c] sm:$0xf]
  %v120 = vunpack.c.l.b16 %v104
  %v121 = vunpack.c.l.b16 %v105
  %v122 = vunpack.c.l.b16 %v106
  %v123 = vunpack.c.l.b16 %v107
  %v124 = vunpack.c.l.b16 %v108
  %v125 = vunpack.c.l.b16 %v109
  %v126 = vunpack.c.l.b16 %v110
  %v127 = vunpack.c.l.b16 %v111
  %v128 = vpack.c.b16 %v121, %v120
  %v129 = vpack.c.b16 %v123, %v122
  %v130 = vpack.c.b16 %v125, %v124
  %v131 = vpack.c.b16 %v127, %v126
  %vm136 = vcmask 523264
  %v138 = vsel %vm136, %v103, 0
  %140 = vmatprep.subr.bf16.mxu0 0
  %141 = vmatpush1.bf16.msra.mxu0 %v128
  %142 = vmatprep.subr.bf16.mxu0 0
  %143 = vmatpush1.bf16.msra.mxu0 %v129
  %144 = vmatprep.subr.bf16.mxu0 0
  %145 = vmatpush1.bf16.msra.mxu0 %v130
  %146 = vmatprep.subr.bf16.mxu0 0
  %147 = vmatpush1.bf16.msra.mxu0 %v131
  %148 = vmatprep.subr.bf16.mxu0 0
  %149 = vmatpush1.bf16.msra.mxu0 0
  %150 = vmatprep.subr.bf16.mxu0 0
  %151 = vmatpush1.bf16.msra.mxu0 0
  %152 = vmatprep.subr.bf16.mxu0 0
  %153 = vmatpush1.bf16.msra.mxu0 0
  %154 = vmatprep.subr.bf16.mxu0 0
  %155 = vmatpush1.bf16.msra.mxu0 0
  %156 = vmatprep.subr.bf16.mxu0 0
  %157 = vmatpush1.bf16.msra.mxu0 0
  %158 = vmatprep.subr.bf16.mxu0 0
  %159 = vmatpush1.bf16.msra.mxu0 0
  %160 = vmatprep.subr.bf16.mxu0 0
  %161 = vmatpush1.bf16.msra.mxu0 0
  %162 = vmatprep.subr.bf16.mxu0 0
  %163 = vmatpush1.bf16.msra.mxu0 0
  %164 = vmatprep.subr.bf16.mxu0 0
  %165 = vmatpush1.bf16.msra.mxu0 0
  %166 = vmatprep.subr.bf16.mxu0 0
  %167 = vmatpush1.bf16.msra.mxu0 0
  %168 = vmatprep.subr.bf16.mxu0 0
  %169 = vmatpush1.bf16.msra.mxu0 0
  %170 = vmatprep.subr.bf16.mxu0 0
  %171 = vmatpush1.bf16.msra.mxu0 0
  %172 = vmatprep.mubr.bf16.mxu0 0
  %173 = vmatmul.mubr.bf16.gmra.mrb[0].mxu0 %v138
  %v174 = vpop.f32.mrb[0].mxu0
  %v175 = vadd.f32 0.0, %v174
  %v176 = vpop.f32.mrb[0].mxu0
  %v177 = vpop.f32.mrb[0].mxu0
  %v178 = vadd.f32 0.0, %v177
  %v179 = vpop.f32.mrb[0].mxu0
  %180 = vdwg.mxu0
  %v181 = vadd.f32 %v101, %v175
  %v182 = vadd.f32 %v102, %v178
  %183 = vst.msk [vmem:[#allocation2] sm:$0xff] %vm54, %v181
  %184 = vst.msk [vmem:[#allocation2 + $0x8] sm:$0xff] %vm54, %v182
  // Predicated region
  $region26: #{transformer_forward.39} parent=0 // pred_check
    %p185 = pneg %p21
  $region27: #{transformer_forward.39} parent=0 // pred_check_branch
    %187 = sbr.rel (%p185) target = $region29
  $region28: #{transformer_forward.39} parent=0 // pred_region
    %v188 = vld [vmem:[#allocation2] sm:$0xff]
    %v189 = vld [vmem:[#allocation2 + $0x8] sm:$0xff]
    %v190 = vld [vmem:[%s4] sm:$0x1]
    %v192 = vlaneseq
    %v193 = vshrl.u32 %v192, 7
    %v194 = vsub.s32 0, %v193
    %v195 = vrot.slane %v190, %v194
    %v197 = vadd.f32 %v188, %v195
    %v198 = vadd.f32 %v189, %v195
    %199 = vst.msk [vmem:[%s5] sm:$0xff] %vm54, %v197
    %200 = vst.msk [vmem:[%s5 + $0x8] sm:$0xff] %vm54, %v198
  $region29: #{transformer_forward.39} parent=0 // pred_fallthru
    _
  // Predicated region
  $region30: #{transformer_forward.39} parent=0 // pred_check
    _
  $region31: #{transformer_forward.39} parent=0 // pred_check_branch
    %202 = sbr.rel (0) target = $region33
  $region32: #{transformer_forward.39} parent=0 // pred_region
    _
  $region33: #{transformer_forward.39} parent=0 // pred_fallthru
    _
  // Predicated region
  $region34: #{transformer_forward.39} parent=0 // pred_check
    _
  $region35: #{transformer_forward.39} parent=0 // pred_check_branch
    %204 = sbr.rel (0) target = $region37
  $region36: #{transformer_forward.39} parent=0 // pred_region
    _
  $region37: #{transformer_forward.39} parent=0 // pred_fallthru
    _

// kernel: transformer_forward.48
$region0: #{transformer_forward.48}
  #allocation0 [shape = 'u32[]', space=smem, size = 0x4, offset = 0x4, fixed_abs, tag = 'smem constant byte address 0x4 - core index']
  #allocation1 [shape = 'u32[144,128]{1,0:T(1,128)}', space=vmem, size = 0x12000, scoped, tag = 'internal scratch']
  %s0 = inlined_call_operand.vmem [shape: f32[2,8,32], index: 0, kind: input, shape index: {}]
  %s1 = inlined_call_operand.vmem [shape: f32[2,8,32], index: 1, kind: input, shape index: {}]
  %s2 = inlined_call_operand.vmem [shape: f32[2,8,32], index: 2, kind: input, shape index: {}]
  %s3 = inlined_call_operand.vmem [shape: f32[2,1,8,8], index: 3, kind: input, shape index: {}]
  %s4 = inlined_call_operand.vmem [shape: f32[2,8,32], index: 4, kind: output, shape index: {0}]
  %s5 = inlined_call_operand.hbm [shape: f32[2,4,8,8], index: 5, kind: output, shape index: {1}]
  %6 = xla_tuple %s4, %s5
  %s7 = sld [smem:[#allocation0]]
  $region57: #{transformer_forward.48} parent=0
    _
  %s9 = ssub.s32 1, %s7
  %s10 = scalar_select 0, %s9, %s7
  $region1: #{transformer_forward.48} parent=0
    #allocation2 [shape = 'u8[32768]{0}', space=vmem, size = 0x8000, scoped, tag = 'output window, operand 1']
    #allocation3 [shape = 's32[2]{0}', space=sflag, size = 0x8, scoped, tag = 'scoped memory for transformer_forward.48']
    %11 = vsyncpa [#allocation3], 0
    %s12 = scalar_lea.sflag [#allocation3], 1
    %13 = vsyncpa %s12, 0
    loop: start=0, step=1, limit=4
    $region2: #{transformer_forward.48} parent=1 // loop_pre_header
      _
    $region3: #{transformer_forward.48} parent=1 // loop_header
      %s15 = sphi 0, %s19
      %p16 = scmp.ge.s32.totalorder %s15, 4
      %s22 = sphi 0, %s34
      %s23 = sphi 0, %s30
      %s24 = sphi 0, %s22
      %s25 = sphi 0, %s23
      %s26 = sphi 0, %s24
      %s27 = sphi 0, %s25
      %s39 = sphi 0, %s41
      %s42 = sphi 0, %s39
      %s43 = sphi 0, %s42
      %s59 = sphi 0, %s43
      %s67 = sphi 0, %s69
      %s70 = sphi 0, %s67
      %s71 = sphi 0, %s70
      %s87 = sphi 0, %s71
      %s95 = sphi 0, %s97
      %s98 = sphi 0, %s95
      %s99 = sphi 0, %s98
      %s115 = sphi 0, %s99
      %s121 = sphi 0, %s123
      %s124 = sphi 0, %s121
      %s125 = sphi 0, %s124
      %s141 = sphi 0, %s125
      %s149 = sphi 0, %s151
      %s152 = sphi 0, %s149
      %s153 = sphi 0, %s152
      %s169 = sphi 0, %s153
      %s177 = sphi 0, %s179
      %s180 = sphi 0, %s177
      %s181 = sphi 0, %s180
      %s197 = sphi 0, %s181
    $region4: #{transformer_forward.48} parent=1 // loop_header_branch
      %18 = sbr.rel (%p16) target = $region8
    $region5: #{transformer_forward.48} parent=1 // loop_body
      %s20 = ssub.s32 %s15, 1
      %s21 = ssub.s32 %s15, 2
      %s28 = sadd.s32 1, %s23
      %p29 = scmp.ge.s32.totalorder %s28, 1
      %s30 = scalar_select %p29, 0, %s28
      %s31 = sadd.s32 1, %s22
      %s32 = scalar_select %p29, %s31, %s22
      %p33 = scmp.ge.s32.totalorder %s32, 2
      %s34 = scalar_select %p33, 0, %s32
      %s35 = ssub.s32 %s22, %s34
      %s36 = ssub.s32 %s23, %s30
      %s37 = sor.u32 %s35, %s36
      %p38 = scmp.eq.s32.totalorder %s37, 0
      %s40 = sadd.s32 %s39, 1
      %s41 = scalar_select %p38, %s39, %s40
      %p44 = pneg %p38
      %p45 = scmp.eq.s32.totalorder %s15, 1
      %p46 = por %p44, %p45
      %p47 = scmp.ne.s32.totalorder %s39, %s42
      %p48 = scmp.eq.s32.totalorder %s15, 0
      %p49 = por %p47, %p48
      %p50 = scmp.ne.s32.totalorder %s39, %s42
      %p51 = scmp.eq.s32.totalorder %s20, 1
      %p52 = por %p50, %p51
      %p53 = scmp.ne.s32.totalorder %s42, %s43
      %p54 = scmp.eq.s32.totalorder %s20, 0
      %p55 = por %p53, %p54
      %p56 = scmp.ne.s32.totalorder %s42, %s43
      %p57 = scmp.eq.s32.totalorder %s21, 1
      %p58 = por %p56, %p57
      %p60 = scmp.ne.s32.totalorder %s43, %s59
      %p61 = scmp.eq.s32.totalorder %s21, 0
      %p62 = por %p60, %p61
      %s63 = ssub.s32 %s22, %s34
      %s64 = ssub.s32 %s23, %s30
      %s65 = sor.u32 %s63, %s64
      %p66 = scmp.eq.s32.totalorder %s65, 0
      %s68 = sadd.s32 %s67, 1
      %s69 = scalar_select %p66, %s67, %s68
      %p72 = pneg %p66
      %p73 = scmp.eq.s32.totalorder %s15, 1
      %p74 = por %p72, %p73
      %p75 = scmp.ne.s32.totalorder %s67, %s70
      %p76 = scmp.eq.s32.totalorder %s15, 0
      %p77 = por %p75, %p76
      %p78 = scmp.ne.s32.totalorder %s67, %s70
      %p79 = scmp.eq.s32.totalorder %s20, 1
      %p80 = por %p78, %p79
      %p81 = scmp.ne.s32.totalorder %s70, %s71
      %p82 = scmp.eq.s32.totalorder %s20, 0
      %p83 = por %p81, %p82
      %p84 = scmp.ne.s32.totalorder %s70, %s71
      %p85 = scmp.eq.s32.totalorder %s21, 1
      %p86 = por %p84, %p85
      %p88 = scmp.ne.s32.totalorder %s71, %s87
      %p89 = scmp.eq.s32.totalorder %s21, 0
      %p90 = por %p88, %p89
      %s91 = ssub.s32 %s22, %s34
      %s92 = ssub.s32 %s23, %s30
      %s93 = sor.u32 %s91, %s92
      %p94 = scmp.eq.s32.totalorder %s93, 0
      %s96 = sadd.s32 %s95, 1
      %s97 = scalar_select %p94, %s95, %s96
      %p100 = pneg %p94
      %p101 = scmp.eq.s32.totalorder %s15, 1
      %p102 = por %p100, %p101
      %p103 = scmp.ne.s32.totalorder %s95, %s98
      %p104 = scmp.eq.s32.totalorder %s15, 0
      %p105 = por %p103, %p104
      %p106 = scmp.ne.s32.totalorder %s95, %s98
      %p107 = scmp.eq.s32.totalorder %s20, 1
      %p108 = por %p106, %p107
      %p109 = scmp.ne.s32.totalorder %s98, %s99
      %p110 = scmp.eq.s32.totalorder %s20, 0
      %p111 = por %p109, %p110
      %p112 = scmp.ne.s32.totalorder %s98, %s99
      %p113 = scmp.eq.s32.totalorder %s21, 1
      %p114 = por %p112, %p113
      %p116 = scmp.ne.s32.totalorder %s99, %s115
      %p117 = scmp.eq.s32.totalorder %s21, 0
      %p118 = por %p116, %p117
      %s119 = ssub.s32 %s22, %s34
      %p120 = scmp.eq.s32.totalorder %s119, 0
      %s122 = sadd.s32 %s121, 1
      %s123 = scalar_select %p120, %s121, %s122
      %p126 = pneg %p120
      %p127 = scmp.eq.s32.totalorder %s15, 1
      %p128 = por %p126, %p127
      %p129 = scmp.ne.s32.totalorder %s121, %s124
      %p130 = scmp.eq.s32.totalorder %s15, 0
      %p131 = por %p129, %p130
      %p132 = scmp.ne.s32.totalorder %s121, %s124
      %p133 = scmp.eq.s32.totalorder %s20, 1
      %p134 = por %p132, %p133
      %p135 = scmp.ne.s32.totalorder %s124, %s125
      %p136 = scmp.eq.s32.totalorder %s20, 0
      %p137 = por %p135, %p136
      %p138 = scmp.ne.s32.totalorder %s124, %s125
      %p139 = scmp.eq.s32.totalorder %s21, 1
      %p140 = por %p138, %p139
      %p142 = scmp.ne.s32.totalorder %s125, %s141
      %p143 = scmp.eq.s32.totalorder %s21, 0
      %p144 = por %p142, %p143
      %s145 = ssub.s32 %s22, %s34
      %s146 = ssub.s32 %s23, %s30
      %s147 = sor.u32 %s145, %s146
      %p148 = scmp.eq.s32.totalorder %s147, 0
      %s150 = sadd.s32 %s149, 1
      %s151 = scalar_select %p148, %s149, %s150
      %p154 = pneg %p148
      %p155 = scmp.eq.s32.totalorder %s15, 1
      %p156 = por %p154, %p155
      %p157 = scmp.ne.s32.totalorder %s149, %s152
      %p158 = scmp.eq.s32.totalorder %s15, 0
      %p159 = por %p157, %p158
      %p160 = scmp.ne.s32.totalorder %s149, %s152
      %p161 = scmp.eq.s32.totalorder %s20, 1
      %p162 = por %p160, %p161
      %p163 = scmp.ne.s32.totalorder %s152, %s153
      %p164 = scmp.eq.s32.totalorder %s20, 0
      %p165 = por %p163, %p164
      %p166 = scmp.ne.s32.totalorder %s152, %s153
      %p167 = scmp.eq.s32.totalorder %s21, 1
      %p168 = por %p166, %p167
      %p170 = scmp.ne.s32.totalorder %s153, %s169
      %p171 = scmp.eq.s32.totalorder %s21, 0
      %p172 = por %p170, %p171
      %s173 = ssub.s32 %s22, %s34
      %s174 = ssub.s32 %s23, %s30
      %s175 = sor.u32 %s173, %s174
      %p176 = scmp.eq.s32.totalorder %s175, 0
      %s178 = sadd.s32 %s177, 1
      %s179 = scalar_select %p176, %s177, %s178
      %p182 = pneg %p176
      %p183 = scmp.eq.s32.totalorder %s15, 1
      %p184 = por %p182, %p183
      %p185 = scmp.ne.s32.totalorder %s177, %s180
      %p186 = scmp.eq.s32.totalorder %s15, 0
      %p187 = por %p185, %p186
      %p188 = scmp.ne.s32.totalorder %s177, %s180
      %p189 = scmp.eq.s32.totalorder %s20, 1
      %p190 = por %p188, %p189
      %p191 = scmp.ne.s32.totalorder %s180, %s181
      %p192 = scmp.eq.s32.totalorder %s20, 0
      %p193 = por %p191, %p192
      %p194 = scmp.ne.s32.totalorder %s180, %s181
      %p195 = scmp.eq.s32.totalorder %s21, 1
      %p196 = por %p194, %p195
      %p198 = scmp.ne.s32.totalorder %s181, %s197
      %p199 = scmp.eq.s32.totalorder %s21, 0
      %p200 = por %p198, %p199
      %p201 = scmp.le.s32.totalorder 1, %s15
      %p202 = scmp.lt.s32.totalorder %s15, 3
      %p203 = pnand %p201, %p202
      %p204 = pneg %p203
      // Predicated region
      $region9: #{transformer_forward.48} parent=5 // pred_check
        _
      $region10: #{transformer_forward.48} parent=5 // pred_check_branch
        %206 = sbr.rel (%p203) target = $region12
      $region11: #{transformer_forward.48} parent=5 // pred_region
        %s207 = ssub.s32 %s15, 1
      $region12: #{transformer_forward.48} parent=5 // pred_fallthru
        _
      %p208 = scmp.lt.s32.totalorder %s15, 2
      // Predicated region
      $region13: #{transformer_forward.48} parent=5 // pred_check
        %p209 = pneg %p208
      $region14: #{transformer_forward.48} parent=5 // pred_check_branch
        %211 = sbr.rel (%p209) target = $region16
      $region15: #{transformer_forward.48} parent=5 // pred_region
        // Predicated region
        $region17: #{transformer_forward.48} parent=15 // pred_check
          %p212 = pneg %p49
        $region18: #{transformer_forward.48} parent=15 // pred_check_branch
          %214 = sbr.rel (%p212) target = $region20
        $region19: #{transformer_forward.48} parent=15 // pred_region
          %p215 = scmp.lt.s32.totalorder %s22, 1
          %s216 = scalar_select %p215, %s22, 1
          %p217 = scmp.lt.s32.totalorder %s23, 0
          %s218 = scalar_select %p217, %s23, 0
          %s219 = sadd.s32 %s218, %s216
          %s220 = smul.addr %s219, 8
          %s221 = scalar_lea.vmem %s0, %s220
        $region20: #{transformer_forward.48} parent=15 // pred_fallthru
          _
        // Predicated region
        $region21: #{transformer_forward.48} parent=15 // pred_check
          %p222 = pneg %p77
        $region22: #{transformer_forward.48} parent=15 // pred_check_branch
          %224 = sbr.rel (%p222) target = $region24
        $region23: #{transformer_forward.48} parent=15 // pred_region
          %p225 = scmp.lt.s32.totalorder %s22, 1
          %s226 = scalar_select %p225, %s22, 1
          %p227 = scmp.lt.s32.totalorder %s23, 0
          %s228 = scalar_select %p227, %s23, 0
          %s229 = sadd.s32 %s228, %s226
          %s230 = smul.addr %s229, 8
          %s231 = scalar_lea.vmem %s1, %s230
        $region24: #{transformer_forward.48} parent=15 // pred_fallthru
          _
        // Predicated region
        $region25: #{transformer_forward.48} parent=15 // pred_check
          %p232 = pneg %p105
        $region26: #{transformer_forward.48} parent=15 // pred_check_branch
          %234 = sbr.rel (%p232) target = $region28
        $region27: #{transformer_forward.48} parent=15 // pred_region
          %p235 = scmp.lt.s32.totalorder %s22, 1
          %s236 = scalar_select %p235, %s22, 1
          %p237 = scmp.lt.s32.totalorder %s23, 0
          %s238 = scalar_select %p237, %s23, 0
          %s239 = sadd.s32 %s238, %s236
          %s240 = smul.addr %s239, 8
          %s241 = scalar_lea.vmem %s2, %s240
        $region28: #{transformer_forward.48} parent=15 // pred_fallthru
          _
        // Predicated region
        $region29: #{transformer_forward.48} parent=15 // pred_check
          %p242 = pneg %p131
        $region30: #{transformer_forward.48} parent=15 // pred_check_branch
          %244 = sbr.rel (%p242) target = $region32
        $region31: #{transformer_forward.48} parent=15 // pred_region
          %p245 = scmp.lt.s32.totalorder %s22, 1
          %s246 = scalar_select %p245, %s22, 1
          %s247 = smul.addr %s246, 8
          %s248 = scalar_lea.vmem %s3, %s247
        $region32: #{transformer_forward.48} parent=15 // pred_fallthru
          _
      $region16: #{transformer_forward.48} parent=5 // pred_fallthru
        _
      %p249 = scmp.le.s32.totalorder 1, %s15
      %p250 = scmp.lt.s32.totalorder %s15, 3
      %p251 = pnand %p249, %p250
      %p252 = pneg %p251
      // Predicated region
      $region33: #{transformer_forward.48} parent=5 // pred_check
        _
      $region34: #{transformer_forward.48} parent=5 // pred_check_branch
        %254 = sbr.rel (%p251) target = $region36
      $region35: #{transformer_forward.48} parent=5 // pred_region
        %s255 = ssub.s32 %s15, 1
        %p256 = scmp.lt.s32.totalorder %s24, 1
        %s257 = scalar_select %p256, %s24, 1
        %p258 = scmp.lt.s32.totalorder %s25, 0
        %s259 = scalar_select %p258, %s25, 0
        %s260 = sadd.s32 %s259, %s257
        %s261 = smul.addr %s260, 8
        %s262 = scalar_lea.vmem %s0, %s261
        %p263 = pneg %p55
        %p264 = pneg %p52
        %p265 = scmp.lt.s32.totalorder %s24, 1
        %s266 = scalar_select %p265, %s24, 1
        %p267 = scmp.lt.s32.totalorder %s25, 0
        %s268 = scalar_select %p267, %s25, 0
        %s269 = sadd.s32 %s268, %s266
        %s270 = smul.addr %s269, 8
        %s271 = scalar_lea.vmem %s1, %s270
        %p272 = pneg %p83
        %p273 = pneg %p80
        %p274 = scmp.lt.s32.totalorder %s24, 1
        %s275 = scalar_select %p274, %s24, 1
        %p276 = scmp.lt.s32.totalorder %s25, 0
        %s277 = scalar_select %p276, %s25, 0
        %s278 = sadd.s32 %s277, %s275
        %s279 = smul.addr %s278, 8
        %s280 = scalar_lea.vmem %s2, %s279
        %p281 = pneg %p111
        %p282 = pneg %p108
        %p283 = scmp.lt.s32.totalorder %s24, 1
        %s284 = scalar_select %p283, %s24, 1
        %s285 = smul.addr %s284, 8
        %s286 = scalar_lea.vmem %s3, %s285
        %p287 = pneg %p137
        %p288 = pneg %p134
        %p289 = pneg %p165
        %p290 = pneg %p162
        %p291 = scmp.lt.s32.totalorder %s24, 1
        %s292 = scalar_select %p291, %s24, 1
        %p293 = scmp.lt.s32.totalorder %s25, 0
        %s294 = scalar_select %p293, %s25, 0
        %s295 = sadd.s32 %s294, %s292
        %s296 = smul.addr %s295, 8
        %s297 = scalar_lea.vmem %s4, %s296
        %p298 = pneg %p193
        %p299 = pneg %p190
        %s300 = sand.u32 %s180, 1
        %s301 = scalar_lea.sflag [#allocation3], %s300
        %s302 = sand.u32 %s180, 1
        %s303 = smul.addr %s302, 32
        %s304 = scalar_lea.vmem [#allocation2], %s303
        %p305 = scmp.lt.s32.totalorder %s24, 1
        %s306 = scalar_select %p305, %s24, 1
        %p307 = scmp.lt.s32.totalorder %s25, 0
        %s308 = scalar_select %p307, %s25, 0
        %s309 = sadd.s32 %s308, %s306
        %s310 = smul.addr %s309, 8
        %s311 = scalar_lea.vmem %s0, %s310
        %p312 = scmp.lt.s32.totalorder %s24, 1
        %s313 = scalar_select %p312, %s24, 1
        %p314 = scmp.lt.s32.totalorder %s25, 0
        %s315 = scalar_select %p314, %s25, 0
        %s316 = sadd.s32 %s315, %s313
        %s317 = smul.addr %s316, 8
        %s318 = scalar_lea.vmem %s1, %s317
        %p319 = scmp.lt.s32.totalorder %s24, 1
        %s320 = scalar_select %p319, %s24, 1
        %p321 = scmp.lt.s32.totalorder %s25, 0
        %s322 = scalar_select %p321, %s25, 0
        %s323 = sadd.s32 %s322, %s320
        %s324 = smul.addr %s323, 8
        %s325 = scalar_lea.vmem %s2, %s324
        %p326 = scmp.lt.s32.totalorder %s24, 1
        %s327 = scalar_select %p326, %s24, 1
        %s328 = smul.addr %s327, 8
        %s329 = scalar_lea.vmem %s3, %s328
        %p330 = scmp.lt.s32.totalorder %s24, 1
        %s331 = scalar_select %p330, %s24, 1
        %p332 = scmp.lt.s32.totalorder %s25, 0
        %s333 = scalar_select %p332, %s25, 0
        %s334 = sadd.s32 %s333, %s331
        %s335 = smul.addr %s334, 8
        %s336 = scalar_lea.vmem %s4, %s335
        %s337 = smul.u32 4, %s25
        %v339 = vld [vmem:[%s329] sm:$0xff]
        %v340 = vld [vmem:[%s311] sm:$0xff]
        %v341 = vpack.c.bf16 %v340, %v340
        %v342 = vld [vmem:[%s318] sm:$0xff]
        %v343 = vpack.c.bf16 %v342, %v342
        %v344 = vld [vmem:[%s325] sm:$0xff]
        %v345 = vpack.c.bf16 %v344, %v344
        %vm346 = vcmask 64512
        %v348 = vsel %vm346, %v341, 0
        %v351 = vsel %vm346, %v343, 0
        %353 = vmatprep.subr.bf16.mxu0 0
        %354 = vmatpush1.bf16.xpose.msra.mxu0 %v351
        %355 = vmatprep.subr.bf16.mxu0 0
        %356 = vmatpush1.bf16.xpose.msra.mxu0 0
        %357 = vmatprep.subr.bf16.mxu0 0
        %358 = vmatpush1.bf16.xpose.msra.mxu0 0
        %359 = vmatprep.subr.bf16.mxu0 0
        %360 = vmatpush1.bf16.xpose.msra.mxu0 0
        %361 = vmatprep.subr.bf16.mxu0 0
        %362 = vmatpush1.bf16.xpose.msra.mxu0 0
        %363 = vmatprep.subr.bf16.mxu0 0
        %364 = vmatpush1.bf16.xpose.msra.mxu0 0
        %365 = vmatprep.subr.bf16.mxu0 0
        %366 = vmatpush1.bf16.xpose.msra.mxu0 0
        %367 = vmatprep.subr.bf16.mxu0 0
        %368 = vmatpush1.bf16.xpose.msra.mxu0 0
        %369 = vmatprep.subr.bf16.mxu0 0
        %370 = vmatpush1.bf16.xpose.msra.mxu0 0
        %371 = vmatprep.subr.bf16.mxu0 0
        %372 = vmatpush1.bf16.xpose.msra.mxu0 0
        %373 = vmatprep.subr.bf16.mxu0 0
        %374 = vmatpush1.bf16.xpose.msra.mxu0 0
        %375 = vmatprep.subr.bf16.mxu0 0
        %376 = vmatpush1.bf16.xpose.msra.mxu0 0
        %377 = vmatprep.subr.bf16.mxu0 0
        %378 = vmatpush1.bf16.xpose.msra.mxu0 0
        %379 = vmatprep.subr.bf16.mxu0 0
        %380 = vmatpush1.bf16.xpose.msra.mxu0 0
        %381 = vmatprep.subr.bf16.mxu0 0
        %382 = vmatpush1.bf16.xpose.msra.mxu0 0
        %383 = vmatprep.subr.bf16.mxu0 0
        %384 = vmatpush1.bf16.xpose.msra.mxu0 0
        %385 = vmatprep.mubr.bf16.mxu0 0
        %386 = vmatmul.mubr.bf16.gmra.mrb[0].mxu0 %v348
        %v387 = vpop.f32.mrb[0].mxu0
        %v388 = vadd.f32 %v339, %v387
        %v389 = vpop.f32.mrb[0].mxu0
        %v390 = vpop.f32.mrb[0].mxu0
        %v391 = vpop.f32.mrb[0].mxu0
        %392 = vdwg.mxu0
        %v393 = vsel %vm346, %v388, -inf
        %394 = vmax.xlane.f32.xlu0 %v393
        %v395 = vpop.xlane.xlu0 %394
        %v396 = vsub.f32 %v388, %v395
        %v397 = vmul.f32 %v396, 1.442695
        %v398 = vpow.pop %v397
        %v399 = vsel %vm346, %v398, 0.0
        %400 = vadd.xlane.f32.xlu0 %v399
        %v401 = vpop.xlane.xlu0 %400
        %v402 = vrcp.pop %v401
        %v403 = vmul.f32 %v398, %v402
        %404 = vst.msk [vmem:[%s304] sm:$0xff] %vm346, %v403
        %v405 = vpack.c.bf16 %v403, %v403
        %v407 = vsel %vm346, %v405, 0
        %vm409 = vcmask 1043456
        %v411 = vsel %vm409, %v345, 0
        %413 = vmatprep.subr.bf16.mxu0 0
        %414 = vmatpush1.bf16.msra.mxu0 %v411
        %415 = vmatprep.subr.bf16.mxu0 0
        %416 = vmatpush1.bf16.msra.mxu0 0
        %417 = vmatprep.subr.bf16.mxu0 0
        %418 = vmatpush1.bf16.msra.mxu0 0
        %419 = vmatprep.subr.bf16.mxu0 0
        %420 = vmatpush1.bf16.msra.mxu0 0
        %421 = vmatprep.subr.bf16.mxu0 0
        %422 = vmatpush1.bf16.msra.mxu0 0
        %423 = vmatprep.subr.bf16.mxu0 0
        %424 = vmatpush1.bf16.msra.mxu0 0
        %425 = vmatprep.subr.bf16.mxu0 0
        %426 = vmatpush1.bf16.msra.mxu0 0
        %427 = vmatprep.subr.bf16.mxu0 0
        %428 = vmatpush1.bf16.msra.mxu0 0
        %429 = vmatprep.subr.bf16.mxu0 0
        %430 = vmatpush1.bf16.msra.mxu0 0
        %431 = vmatprep.subr.bf16.mxu0 0
        %432 = vmatpush1.bf16.msra.mxu0 0
        %433 = vmatprep.subr.bf16.mxu0 0
        %434 = vmatpush1.bf16.msra.mxu0 0
        %435 = vmatprep.subr.bf16.mxu0 0
        %436 = vmatpush1.bf16.msra.mxu0 0
        %437 = vmatprep.subr.bf16.mxu0 0
        %438 = vmatpush1.bf16.msra.mxu0 0
        %439 = vmatprep.subr.bf16.mxu0 0
        %440 = vmatpush1.bf16.msra.mxu0 0
        %441 = vmatprep.subr.bf16.mxu0 0
        %442 = vmatpush1.bf16.msra.mxu0 0
        %443 = vmatprep.subr.bf16.mxu0 0
        %444 = vmatpush1.bf16.msra.mxu0 0
        %445 = vmatprep.mubr.bf16.mxu0 0
        %446 = vmatmul.mubr.bf16.gmra.mrb[0].mxu0 %v407
        %v447 = vpop.f32.mrb[0].mxu0
        %v448 = vadd.f32 0.0, %v447
        %v449 = vpop.f32.mrb[0].mxu0
        %v450 = vpop.f32.mrb[0].mxu0
        %v451 = vpop.f32.mrb[0].mxu0
        %452 = vdwg.mxu0
        %454 = vrot.lane.b32.xlu0 %v341, 120
        %v455 = vpop.permute.xlu0 %454
        %457 = vrot.lane.b32.xlu0 %v343, 120
        %v458 = vpop.permute.xlu0 %457
        %v460 = vsel %vm346, %v455, 0
        %v463 = vsel %vm346, %v458, 0
        %465 = vmatprep.subr.bf16.mxu0 0
        %466 = vmatpush1.bf16.xpose.msra.mxu0 %v463
        %467 = vmatprep.subr.bf16.mxu0 0
        %468 = vmatpush1.bf16.xpose.msra.mxu0 0
        %469 = vmatprep.subr.bf16.mxu0 0
        %470 = vmatpush1.bf16.xpose.msra.mxu0 0
        %471 = vmatprep.subr.bf16.mxu0 0
        %472 = vmatpush1.bf16.xpose.msra.mxu0 0
        %473 = vmatprep.subr.bf16.mxu0 0
        %474 = vmatpush1.bf16.xpose.msra.mxu0 0
        %475 = vmatprep.subr.bf16.mxu0 0
        %476 = vmatpush1.bf16.xpose.msra.mxu0 0
        %477 = vmatprep.subr.bf16.mxu0 0
        %478 = vmatpush1.bf16.xpose.msra.mxu0 0
        %479 = vmatprep.subr.bf16.mxu0 0
        %480 = vmatpush1.bf16.xpose.msra.mxu0 0
        %481 = vmatprep.subr.bf16.mxu0 0
        %482 = vmatpush1.bf16.xpose.msra.mxu0 0
        %483 = vmatprep.subr.bf16.mxu0 0
        %484 = vmatpush1.bf16.xpose.msra.mxu0 0
        %485 = vmatprep.subr.bf16.mxu0 0
        %486 = vmatpush1.bf16.xpose.msra.mxu0 0
        %487 = vmatprep.subr.bf16.mxu0 0
        %488 = vmatpush1.bf16.xpose.msra.mxu0 0
        %489 = vmatprep.subr.bf16.mxu0 0
        %490 = vmatpush1.bf16.xpose.msra.mxu0 0
        %491 = vmatprep.subr.bf16.mxu0 0
        %492 = vmatpush1.bf16.xpose.msra.mxu0 0
        %493 = vmatprep.subr.bf16.mxu0 0
        %494 = vmatpush1.bf16.xpose.msra.mxu0 0
        %495 = vmatprep.subr.bf16.mxu0 0
        %496 = vmatpush1.bf16.xpose.msra.mxu0 0
        %497 = vmatprep.mubr.bf16.mxu0 0
        %498 = vmatmul.mubr.bf16.gmra.mrb[0].mxu0 %v460
        %v499 = vpop.f32.mrb[0].mxu0
        %v500 = vadd.f32 %v339, %v499
        %v501 = vpop.f32.mrb[0].mxu0
        %v502 = vpop.f32.mrb[0].mxu0
        %v503 = vpop.f32.mrb[0].mxu0
        %504 = vdwg.mxu0
        %v505 = vsel %vm346, %v500, -inf
        %506 = vmax.xlane.f32.xlu0 %v505
        %v507 = vpop.xlane.xlu0 %506
        %v508 = vsub.f32 %v500, %v507
        %v509 = vmul.f32 %v508, 1.442695
        %v510 = vpow.pop %v509
        %v511 = vsel %vm346, %v510, 0.0
        %512 = vadd.xlane.f32.xlu0 %v511
        %v513 = vpop.xlane.xlu0 %512
        %v514 = vrcp.pop %v513
        %v515 = vmul.f32 %v510, %v514
        %s516 = scalar_lea.vmem %s304, 8 [#allocation2]
        %517 = vst.msk [vmem:[%s516] sm:$0xff] %vm346, %v515
        %v518 = vpack.c.bf16 %v515, %v515
        %520 = vrot.lane.b32.xlu0 %v345, 120
        %v521 = vpop.permute.xlu0 %520
        %v523 = vsel %vm346, %v518, 0
        %v526 = vsel %vm409, %v521, 0
        %528 = vmatprep.subr.bf16.mxu0 0
        %529 = vmatpush1.bf16.msra.mxu0 %v526
        %530 = vmatprep.subr.bf16.mxu0 0
        %531 = vmatpush1.bf16.msra.mxu0 0
        %532 = vmatprep.subr.bf16.mxu0 0
        %533 = vmatpush1.bf16.msra.mxu0 0
        %534 = vmatprep.subr.bf16.mxu0 0
        %535 = vmatpush1.bf16.msra.mxu0 0
        %536 = vmatprep.subr.bf16.mxu0 0
        %537 = vmatpush1.bf16.msra.mxu0 0
        %538 = vmatprep.subr.bf16.mxu0 0
        %539 = vmatpush1.bf16.msra.mxu0 0
        %540 = vmatprep.subr.bf16.mxu0 0
        %541 = vmatpush1.bf16.msra.mxu0 0
        %542 = vmatprep.subr.bf16.mxu0 0
        %543 = vmatpush1.bf16.msra.mxu0 0
        %544 = vmatprep.subr.bf16.mxu0 0
        %545 = vmatpush1.bf16.msra.mxu0 0
        %546 = vmatprep.subr.bf16.mxu0 0
        %547 = vmatpush1.bf16.msra.mxu0 0
        %548 = vmatprep.subr.bf16.mxu0 0
        %549 = vmatpush1.bf16.msra.mxu0 0
        %550 = vmatprep.subr.bf16.mxu0 0
        %551 = vmatpush1.bf16.msra.mxu0 0
        %552 = vmatprep.subr.bf16.mxu0 0
        %553 = vmatpush1.bf16.msra.mxu0 0
        %554 = vmatprep.subr.bf16.mxu0 0
        %555 = vmatpush1.bf16.msra.mxu0 0
        %556 = vmatprep.subr.bf16.mxu0 0
        %557 = vmatpush1.bf16.msra.mxu0 0
        %558 = vmatprep.subr.bf16.mxu0 0
        %559 = vmatpush1.bf16.msra.mxu0 0
        %560 = vmatprep.mubr.bf16.mxu0 0
        %561 = vmatmul.mubr.bf16.gmra.mrb[0].mxu0 %v523
        %v562 = vpop.f32.mrb[0].mxu0
        %v563 = vadd.f32 0.0, %v562
        %v564 = vpop.f32.mrb[0].mxu0
        %v565 = vpop.f32.mrb[0].mxu0
        %v566 = vpop.f32.mrb[0].mxu0
        %567 = vdwg.mxu0
        %568 = vrot.lane.b32.xlu0 %v341, 112
        %v569 = vpop.permute.xlu0 %568
        %570 = vrot.lane.b32.xlu0 %v343, 112
        %v571 = vpop.permute.xlu0 %570
        %v573 = vsel %vm346, %v569, 0
        %v576 = vsel %vm346, %v571, 0
        %578 = vmatprep.subr.bf16.mxu0 0
        %579 = vmatpush1.bf16.xpose.msra.mxu0 %v576
        %580 = vmatprep.subr.bf16.mxu0 0
        %581 = vmatpush1.bf16.xpose.msra.mxu0 0
        %582 = vmatprep.subr.bf16.mxu0 0
        %583 = vmatpush1.bf16.xpose.msra.mxu0 0
        %584 = vmatprep.subr.bf16.mxu0 0
        %585 = vmatpush1.bf16.xpose.msra.mxu0 0
        %586 = vmatprep.subr.bf16.mxu0 0
        %587 = vmatpush1.bf16.xpose.msra.mxu0 0
        %588 = vmatprep.subr.bf16.mxu0 0
        %589 = vmatpush1.bf16.xpose.msra.mxu0 0
        %590 = vmatprep.subr.bf16.mxu0 0
        %591 = vmatpush1.bf16.xpose.msra.mxu0 0
        %592 = vmatprep.subr.bf16.mxu0 0
        %593 = vmatpush1.bf16.xpose.msra.mxu0 0
        %594 = vmatprep.subr.bf16.mxu0 0
        %595 = vmatpush1.bf16.xpose.msra.mxu0 0
        %596 = vmatprep.subr.bf16.mxu0 0
        %597 = vmatpush1.bf16.xpose.msra.mxu0 0
        %598 = vmatprep.subr.bf16.mxu0 0
        %599 = vmatpush1.bf16.xpose.msra.mxu0 0
        %600 = vmatprep.subr.bf16.mxu0 0
        %601 = vmatpush1.bf16.xpose.msra.mxu0 0
        %602 = vmatprep.subr.bf16.mxu0 0
        %603 = vmatpush1.bf16.xpose.msra.mxu0 0
        %604 = vmatprep.subr.bf16.mxu0 0
        %605 = vmatpush1.bf16.xpose.msra.mxu0 0
        %606 = vmatprep.subr.bf16.mxu0 0
        %607 = vmatpush1.bf16.xpose.msra.mxu0 0
        %608 = vmatprep.subr.bf16.mxu0 0
        %609 = vmatpush1.bf16.xpose.msra.mxu0 0
        %610 = vmatprep.mubr.bf16.mxu0 0
        %611 = vmatmul.mubr.bf16.gmra.mrb[0].mxu0 %v573
        %v612 = vpop.f32.mrb[0].mxu0
        %v613 = vadd.f32 %v339, %v612
        %v614 = vpop.f32.mrb[0].mxu0
        %v615 = vpop.f32.mrb[0].mxu0
        %v616 = vpop.f32.mrb[0].mxu0
        %617 = vdwg.mxu0
        %v618 = vsel %vm346, %v613, -inf
        %619 = vmax.xlane.f32.xlu0 %v618
        %v620 = vpop.xlane.xlu0 %619
        %v621 = vsub.f32 %v613, %v620
        %v622 = vmul.f32 %v621, 1.442695
        %v623 = vpow.pop %v622
        %v624 = vsel %vm346, %v623, 0.0
        %625 = vadd.xlane.f32.xlu0 %v624
        %v626 = vpop.xlane.xlu0 %625
        %v627 = vrcp.pop %v626
        %v628 = vmul.f32 %v623, %v627
        %s629 = scalar_lea.vmem %s304, 16 [#allocation2]
        %630 = vst.msk [vmem:[%s629] sm:$0xff] %vm346, %v628
        %v631 = vpack.c.bf16 %v628, %v628
        %632 = vrot.lane.b32.xlu0 %v345, 112
        %v633 = vpop.permute.xlu0 %632
        %v635 = vsel %vm346, %v631, 0
        %v638 = vsel %vm409, %v633, 0
        %640 = vmatprep.subr.bf16.mxu0 0
        %641 = vmatpush1.bf16.msra.mxu0 %v638
        %642 = vmatprep.subr.bf16.mxu0 0
        %643 = vmatpush1.bf16.msra.mxu0 0
        %644 = vmatprep.subr.bf16.mxu0 0
        %645 = vmatpush1.bf16.msra.mxu0 0
        %646 = vmatprep.subr.bf16.mxu0 0
        %647 = vmatpush1.bf16.msra.mxu0 0
        %648 = vmatprep.subr.bf16.mxu0 0
        %649 = vmatpush1.bf16.msra.mxu0 0
        %650 = vmatprep.subr.bf16.mxu0 0
        %651 = vmatpush1.bf16.msra.mxu0 0
        %652 = vmatprep.subr.bf16.mxu0 0
        %653 = vmatpush1.bf16.msra.mxu0 0
        %654 = vmatprep.subr.bf16.mxu0 0
        %655 = vmatpush1.bf16.msra.mxu0 0
        %656 = vmatprep.subr.bf16.mxu0 0
        %657 = vmatpush1.bf16.msra.mxu0 0
        %658 = vmatprep.subr.bf16.mxu0 0
        %659 = vmatpush1.bf16.msra.mxu0 0
        %660 = vmatprep.subr.bf16.mxu0 0
        %661 = vmatpush1.bf16.msra.mxu0 0
        %662 = vmatprep.subr.bf16.mxu0 0
        %663 = vmatpush1.bf16.msra.mxu0 0
        %664 = vmatprep.subr.bf16.mxu0 0
        %665 = vmatpush1.bf16.msra.mxu0 0
        %666 = vmatprep.subr.bf16.mxu0 0
        %667 = vmatpush1.bf16.msra.mxu0 0
        %668 = vmatprep.subr.bf16.mxu0 0
        %669 = vmatpush1.bf16.msra.mxu0 0
        %670 = vmatprep.subr.bf16.mxu0 0
        %671 = vmatpush1.bf16.msra.mxu0 0
        %672 = vmatprep.mubr.bf16.mxu0 0
        %673 = vmatmul.mubr.bf16.gmra.mrb[0].mxu0 %v635
        %v674 = vpop.f32.mrb[0].mxu0
        %v675 = vadd.f32 0.0, %v674
        %v676 = vpop.f32.mrb[0].mxu0
        %v677 = vpop.f32.mrb[0].mxu0
        %v678 = vpop.f32.mrb[0].mxu0
        %679 = vdwg.mxu0
        %680 = vrot.lane.b32.xlu0 %v341, 104
        %v681 = vpop.permute.xlu0 %680
        %682 = vrot.lane.b32.xlu0 %v343, 104
        %v683 = vpop.permute.xlu0 %682
        %v685 = vsel %vm346, %v681, 0
        %v688 = vsel %vm346, %v683, 0
        %690 = vmatprep.subr.bf16.mxu0 0
        %691 = vmatpush1.bf16.xpose.msra.mxu0 %v688
        %692 = vmatprep.subr.bf16.mxu0 0
        %693 = vmatpush1.bf16.xpose.msra.mxu0 0
        %694 = vmatprep.subr.bf16.mxu0 0
        %695 = vmatpush1.bf16.xpose.msra.mxu0 0
        %696 = vmatprep.subr.bf16.mxu0 0
        %697 = vmatpush1.bf16.xpose.msra.mxu0 0
        %698 = vmatprep.subr.bf16.mxu0 0
        %699 = vmatpush1.bf16.xpose.msra.mxu0 0
        %700 = vmatprep.subr.bf16.mxu0 0
        %701 = vmatpush1.bf16.xpose.msra.mxu0 0
        %702 = vmatprep.subr.bf16.mxu0 0
        %703 = vmatpush1.bf16.xpose.msra.mxu0 0
        %704 = vmatprep.subr.bf16.mxu0 0
        %705 = vmatpush1.bf16.xpose.msra.mxu0 0
        %706 = vmatprep.subr.bf16.mxu0 0
        %707 = vmatpush1.bf16.xpose.msra.mxu0 0
        %708 = vmatprep.subr.bf16.mxu0 0
        %709 = vmatpush1.bf16.xpose.msra.mxu0 0
        %710 = vmatprep.subr.bf16.mxu0 0
        %711 = vmatpush1.bf16.xpose.msra.mxu0 0
        %712 = vmatprep.subr.bf16.mxu0 0
        %713 = vmatpush1.bf16.xpose.msra.mxu0 0
        %714 = vmatprep.subr.bf16.mxu0 0
        %715 = vmatpush1.bf16.xpose.msra.mxu0 0
        %716 = vmatprep.subr.bf16.mxu0 0
        %717 = vmatpush1.bf16.xpose.msra.mxu0 0
        %718 = vmatprep.subr.bf16.mxu0 0
        %719 = vmatpush1.bf16.xpose.msra.mxu0 0
        %720 = vmatprep.subr.bf16.mxu0 0
        %721 = vmatpush1.bf16.xpose.msra.mxu0 0
        %722 = vmatprep.mubr.bf16.mxu0 0
        %723 = vmatmul.mubr.bf16.gmra.mrb[0].mxu0 %v685
        %v724 = vpop.f32.mrb[0].mxu0
        %v725 = vadd.f32 %v339, %v724
        %v726 = vpop.f32.mrb[0].mxu0
        %v727 = vpop.f32.mrb[0].mxu0
        %v728 = vpop.f32.mrb[0].mxu0
        %729 = vdwg.mxu0
        %v730 = vsel %vm346, %v725, -inf
        %731 = vmax.xlane.f32.xlu0 %v730
        %v732 = vpop.xlane.xlu0 %731
        %v733 = vsub.f32 %v725, %v732
        %v734 = vmul.f32 %v733, 1.442695
        %v735 = vpow.pop %v734
        %v736 = vsel %vm346, %v735, 0.0
        %737 = vadd.xlane.f32.xlu0 %v736
        %v738 = vpop.xlane.xlu0 %737
        %v739 = vrcp.pop %v738
        %v740 = vmul.f32 %v735, %v739
        %s741 = scalar_lea.vmem %s304, 24 [#allocation2]
        %742 = vst.msk [vmem:[%s741] sm:$0xff] %vm346, %v740
        %v743 = vpack.c.bf16 %v740, %v740
        %744 = vrot.lane.b32.xlu0 %v345, 104
        %v745 = vpop.permute.xlu0 %744
        %v747 = vsel %vm346, %v743, 0
        %v750 = vsel %vm409, %v745, 0
        %752 = vmatprep.subr.bf16.mxu0 0
        %753 = vmatpush1.bf16.msra.mxu0 %v750
        %754 = vmatprep.subr.bf16.mxu0 0
        %755 = vmatpush1.bf16.msra.mxu0 0
        %756 = vmatprep.subr.bf16.mxu0 0
        %757 = vmatpush1.bf16.msra.mxu0 0
        %758 = vmatprep.subr.bf16.mxu0 0
        %759 = vmatpush1.bf16.msra.mxu0 0
        %760 = vmatprep.subr.bf16.mxu0 0
        %761 = vmatpush1.bf16.msra.mxu0 0
        %762 = vmatprep.subr.bf16.mxu0 0
        %763 = vmatpush1.bf16.msra.mxu0 0
        %764 = vmatprep.subr.bf16.mxu0 0
        %765 = vmatpush1.bf16.msra.mxu0 0
        %766 = vmatprep.subr.bf16.mxu0 0
        %767 = vmatpush1.bf16.msra.mxu0 0
        %768 = vmatprep.subr.bf16.mxu0 0
        %769 = vmatpush1.bf16.msra.mxu0 0
        %770 = vmatprep.subr.bf16.mxu0 0
        %771 = vmatpush1.bf16.msra.mxu0 0
        %772 = vmatprep.subr.bf16.mxu0 0
        %773 = vmatpush1.bf16.msra.mxu0 0
        %774 = vmatprep.subr.bf16.mxu0 0
        %775 = vmatpush1.bf16.msra.mxu0 0
        %776 = vmatprep.subr.bf16.mxu0 0
        %777 = vmatpush1.bf16.msra.mxu0 0
        %778 = vmatprep.subr.bf16.mxu0 0
        %779 = vmatpush1.bf16.msra.mxu0 0
        %780 = vmatprep.subr.bf16.mxu0 0
        %781 = vmatpush1.bf16.msra.mxu0 0
        %782 = vmatprep.subr.bf16.mxu0 0
        %783 = vmatpush1.bf16.msra.mxu0 0
        %784 = vmatprep.mubr.bf16.mxu0 0
        %785 = vmatmul.mubr.bf16.gmra.mrb[0].mxu0 %v747
        %v786 = vpop.f32.mrb[0].mxu0
        %v787 = vadd.f32 0.0, %v786
        %v788 = vpop.f32.mrb[0].mxu0
        %v789 = vpop.f32.mrb[0].mxu0
        %v790 = vpop.f32.mrb[0].mxu0
        %791 = vdwg.mxu0
        %793 = vrot.lane.b32.xlu0 %v563, 8
        %v794 = vpop.permute.xlu0 %793
        %797 = vrot.lane.b32.xlu0 %v675, 16
        %v798 = vpop.permute.xlu0 %797
        %801 = vrot.lane.b32.xlu0 %v787, 24
        %v802 = vpop.permute.xlu0 %801
        %v804 = vsel %vm346, %v448, %v794
        %vm805 = vcmask 130048
        %v806 = vsel %vm805, %v804, %v798
        %vm807 = vcmask 195584
        %v808 = vsel %vm807, %v806, %v802
        %vm809 = vcmask 261120
        %810 = vst.msk [vmem:[%s336] sm:$0xff] %vm809, %v808
        %p811 = scmp.lt.s32.totalorder %s24, 1
        %s812 = scalar_select %p811, %s24, 1
        %p813 = scmp.lt.s32.totalorder %s25, 0
        %s814 = scalar_select %p813, %s25, 0
        %s815 = sadd.s32 %s814, %s812
        %s816 = smul.addr %s815, 8
        %s817 = scalar_lea.vmem %s4, %s816
        %s818 = sand.u32 %s180, 1
        %s819 = scalar_lea.sflag [#allocation3], %s818
        %s820 = sand.u32 %s180, 1
        %s821 = smul.addr %s820, 32
        %s822 = scalar_lea.vmem [#allocation2], %s821
        // Predicated region
        $region37: #{transformer_forward.48} parent=35 // pred_check
          %p823 = pneg %p162
        $region38: #{transformer_forward.48} parent=35 // pred_check_branch
          %825 = sbr.rel (%p823) target = $region40
        $region39: #{transformer_forward.48} parent=35 // pred_region
          _
        $region40: #{transformer_forward.48} parent=35 // pred_fallthru
          _
        // Predicated region
        $region41: #{transformer_forward.48} parent=35 // pred_check
          %p826 = pneg %p190
        $region42: #{transformer_forward.48} parent=35 // pred_check_branch
          %828 = sbr.rel (%p826) target = $region44
        $region43: #{transformer_forward.48} parent=35 // pred_region
          %s829 = smul.u32 4, %s25
          %s831 = ssub.s32 512, 512
          %832 = vsyncadd %s819, %s831
          %s833 = smul.addr %s24, 4
          %s834 = sadd.s32 %s829, %s833
          %s835 = smul.addr %s834, 128
          %s836 = scalar_lea.hbm %s5, %s835
          %s837 = sshll.u32 %s822, 4
          %s838 = int_to_ptr.vmem [resolvable:$true] %s837
          %843 = dma.vmem_to_hbm [thread:$0]  %s838, 512, %s836, %s819, 128, 128, 8
        $region44: #{transformer_forward.48} parent=35 // pred_fallthru
          _
      $region36: #{transformer_forward.48} parent=5 // pred_fallthru
        _
      %p844 = scmp.le.s32.totalorder 2, %s15
      // Predicated region
      $region45: #{transformer_forward.48} parent=5 // pred_check
        %p845 = pneg %p844
      $region46: #{transformer_forward.48} parent=5 // pred_check_branch
        %847 = sbr.rel (%p845) target = $region48
      $region47: #{transformer_forward.48} parent=5 // pred_region
        %s848 = ssub.s32 %s15, 2
        // Predicated region
        $region49: #{transformer_forward.48} parent=47 // pred_check
          %p849 = pneg %p168
        $region50: #{transformer_forward.48} parent=47 // pred_check_branch
          %851 = sbr.rel (%p849) target = $region52
        $region51: #{transformer_forward.48} parent=47 // pred_region
          %p852 = scmp.lt.s32.totalorder %s26, 1
          %s853 = scalar_select %p852, %s26, 1
          %p854 = scmp.lt.s32.totalorder %s27, 0
          %s855 = scalar_select %p854, %s27, 0
          %s856 = sadd.s32 %s855, %s853
          %s857 = smul.addr %s856, 8
          %s858 = scalar_lea.vmem %s4, %s857
        $region52: #{transformer_forward.48} parent=47 // pred_fallthru
          _
        // Predicated region
        $region53: #{transformer_forward.48} parent=47 // pred_check
          %p859 = pneg %p196
        $region54: #{transformer_forward.48} parent=47 // pred_check_branch
          %861 = sbr.rel (%p859) target = $region56
        $region55: #{transformer_forward.48} parent=47 // pred_region
          %s862 = sand.u32 %s181, 1
          %s863 = scalar_lea.sflag [#allocation3], %s862
          %s864 = sand.u32 %s181, 1
          %s865 = smul.addr %s864, 32
          %s866 = scalar_lea.vmem [#allocation2], %s865
          %867 = dma.done %s863, 512
        $region56: #{transformer_forward.48} parent=47 // pred_fallthru
          _
      $region48: #{transformer_forward.48} parent=5 // pred_fallthru
        _
    $region6: #{transformer_forward.48} parent=1 // loop_footer
      %s19 = sadd.s32 1, %s15
    $region7: #{transformer_forward.48} parent=1 // loop_footer_branch
      %14 = sbr.rel target = $region3
    $region8: #{transformer_forward.48} parent=1 // loop_exit
      _
    %868 = vsyncpa [#allocation3], 1
    %s869 = scalar_lea.sflag [#allocation3], 1
    %870 = vsyncpa %s869, 1

</llo_original>
